<compile_context>
chip_gen: v5e
topology: v5e:2x2
jax: 0.10.0
libtpu: 0.0.40
codegen_flags: <defaults>
</compile_context>

<pallas_src>
import functools

import jax
import jax.numpy as jnp
from jax.experimental import pallas as pl
from jax.experimental.pallas import tpu as pltpu

LANE = 128
ACT_DTYPE = jnp.bfloat16


def _round_up(x, m):
    return (x + m - 1) // m * m


def _conv_out_len(l_in):
    # stride=2, padding=(K-1)//2 with odd K  ->  ceil(l_in / 2)
    return (l_in - 1) // 2 + 1


# --------------------------------------------------------------------------- #
# Kernel 1: Conv1d + folded BatchNorm + ReLU (optionally fused global-avg-pool)
# --------------------------------------------------------------------------- #
def _conv_bn_relu_kernel(n_pairs, l_out, p_next, pool,
                         x_ref, w_ref, b_ref, o_ref):
    """One batch element per grid step.

    x_ref : (P_half, 2*Cin_p)            zero-padded input, "pairs" NLC view
    w_ref : (n_pairs, 2*Cin_p, Cout_p)   BN-folded weights, two taps per slab
    b_ref : (1, Cout_p) f32              BN-folded bias
    o_ref : pool -> (1, Cout_p) f32      global-average-pooled conv output
            else -> (P_out, Cout_p)      zero-padded NLC output for next layer
    """
    cout_p = w_ref.shape[-1]
    acc = jnp.zeros((l_out, cout_p), jnp.float32)
    for j in range(n_pairs):                       # static unroll, n_pairs <= 6
        acc = acc + jnp.dot(x_ref[j:j + l_out, :], w_ref[j],
                            preferred_element_type=jnp.float32)
    y = jnp.maximum(acc + b_ref[...], 0.0)         # bias + ReLU in f32
    if pool:
        # AdaptiveAvgPool1d(1): mean over the l_out real output positions.
        o_ref[...] = jnp.mean(y, axis=0, keepdims=True)
    else:
        o_ref[...] = jnp.zeros_like(o_ref)         # next layer's zero padding
        o_ref[p_next:p_next + l_out, :] = y.astype(o_ref.dtype)


def pallas_conv_bn_relu(x_pairs, w_pairs, b_fold, *, l_in, p_next=0,
                        p_out=None, pool=False, act_dtype=ACT_DTYPE):
    B, p_half, two_cin = x_pairs.shape
    n_pairs, _, cout_p = w_pairs.shape
    l_out = _conv_out_len(l_in)

    kernel = functools.partial(_conv_bn_relu_kernel, n_pairs, l_out, p_next,
                               pool)

    if pool:
        out_shape = jax.ShapeDtypeStruct((B, 1, cout_p), jnp.float32)
        out_spec = pl.BlockSpec((None, 1, cout_p), lambda b: (b, 0, 0))
        out_bytes = B * cout_p * 4
    else:
        out_shape = jax.ShapeDtypeStruct((B, p_out, cout_p), act_dtype)
        out_spec = pl.BlockSpec((None, p_out, cout_p), lambda b: (b, 0, 0))
        out_bytes = B * p_out * cout_p * jnp.dtype(act_dtype).itemsize

    bytes_accessed = (x_pairs.size * x_pairs.dtype.itemsize
                      + w_pairs.size * w_pairs.dtype.itemsize
                      + b_fold.size * b_fold.dtype.itemsize
                      + out_bytes)
    flops = 2 * B * l_out * two_cin * cout_p * n_pairs

    grid_spec = pltpu.PrefetchScalarGridSpec(
        num_scalar_prefetch=0,
        grid=(B,),
        in_specs=[
            pl.BlockSpec((None, p_half, two_cin), lambda b: (b, 0, 0)),
            pl.BlockSpec(w_pairs.shape, lambda b: (0, 0, 0)),  # VMEM-resident
            pl.BlockSpec(b_fold.shape, lambda b: (0, 0)),      # VMEM-resident
        ],
        out_specs=out_spec,
    )
    return pl.pallas_call(
        kernel,
        out_shape=out_shape,
        grid_spec=grid_spec,
        compiler_params=pltpu.CompilerParams(
            dimension_semantics=("parallel",)),
        cost_estimate=pl.CostEstimate(flops=int(flops), transcendentals=0,
                                      bytes_accessed=int(bytes_accessed)),
    )(x_pairs, w_pairs, b_fold)


# --------------------------------------------------------------------------- #
# Kernel 2: fused FC head (fc1..fc4; dropouts are identity in eval mode)
# --------------------------------------------------------------------------- #
def _head_kernel(x_ref, w1_ref, b1_ref, w2_ref, b2_ref, w3_ref, b3_ref,
                 w4_ref, b4_ref, o_ref):
    h = x_ref[...]
    h = jnp.maximum(jnp.dot(h, w1_ref[...], preferred_element_type=jnp.float32)
                    + b1_ref[...], 0.0)
    h = jnp.maximum(jnp.dot(h, w2_ref[...], preferred_element_type=jnp.float32)
                    + b2_ref[...], 0.0)
    h = jnp.maximum(jnp.dot(h, w3_ref[...], preferred_element_type=jnp.float32)
                    + b3_ref[...], 0.0)
    o_ref[...] = (jnp.dot(h, w4_ref[...], preferred_element_type=jnp.float32)
                  + b4_ref[...])


def pallas_head(pooled, w1, b1, w2, b2, w3, b3, w4, b4):
    B = pooled.shape[0]
    num_classes = w4.shape[1]
    vmem = pl.BlockSpec(memory_space=pltpu.MemorySpace.VMEM)
    flops = 2 * B * (w1.shape[0] * w1.shape[1] + w2.shape[0] * w2.shape[1]
                     + w3.shape[0] * w3.shape[1] + w4.shape[0] * w4.shape[1])
    bytes_accessed = 4 * (pooled.size + w1.size + w2.size + w3.size + w4.size
                          + b1.size + b2.size + b3.size + b4.size
                          + B * num_classes)
    return pl.pallas_call(
        _head_kernel,
        out_shape=jax.ShapeDtypeStruct((B, num_classes), jnp.float32),
        in_specs=[vmem] * 9,
        out_specs=vmem,
        cost_estimate=pl.CostEstimate(flops=int(flops), transcendentals=0,
                                      bytes_accessed=int(bytes_accessed)),
    )(pooled,
      w1, b1.reshape(1, -1),
      w2, b2.reshape(1, -1),
      w3, b3.reshape(1, -1),
      w4, b4.reshape(1, -1))


# --------------------------------------------------------------------------- #
# Parameter prep: fold BN into conv, pad channels, pack tap pairs
# --------------------------------------------------------------------------- #
def _fold_conv_bn(weight, bias, gamma, beta, rmean, rvar, cin_p, cout_p,
                  dtype, eps=1e-5):
    cout, cin, K = weight.shape
    scale = gamma / jnp.sqrt(rvar + eps)
    w = weight * scale[:, None, None]                      # (Cout, Cin, K)
    b = (bias - rmean) * scale + beta
    w_taps = jnp.transpose(w, (2, 1, 0))                   # (K, Cin, Cout)
    k_even = _round_up(K, 2)
    w_taps = jnp.pad(w_taps, ((0, k_even - K), (0, cin_p - cin),
                              (0, cout_p - cout)))
    w_pairs = w_taps.reshape(k_even // 2, 2 * cin_p, cout_p)
    b_p = jnp.pad(b, (0, cout_p - cout)).reshape(1, cout_p)
    return w_pairs.astype(dtype), b_p.astype(jnp.float32)


# --------------------------------------------------------------------------- #
# Forward pass (matches SimplifiedGapCNN.forward in eval mode)
# --------------------------------------------------------------------------- #
_CONV_CFG = (("c1", 1, 32, 11), ("c2", 32, 64, 7),
             ("c3", 64, 128, 5), ("c4", 128, 256, 3))


@jax.jit
def simplified_gap_cnn_forward(params, x):
    x = x.astype(jnp.float32)
    B, L = x.shape

    # conv1 input: zero-padded "pairs" view, built once on the host (tiny).
    K1 = _CONV_CFG[0][3]
    p1 = (K1 - 1) // 2
    l1 = _conv_out_len(L)
    P1 = 2 * l1 + (K1 - 1)                       # even, holds all taps
    buf = jnp.pad(x, ((0, 0), (p1, P1 - p1 - L)))
    cur = buf.reshape(B, P1 // 2, 2)             # (B, P/2, 2*Cin), Cin = 1
    cin_p, l_cur = 1, L

    pooled = None
    for i, (name, cin, cout, K) in enumerate(_CONV_CFG):
        p = params[name]
        cout_p = _round_up(cout, LANE)           # lane-dense output channels
        last = i == len(_CONV_CFG) - 1
        w_dtype = jnp.float32 if cin_p == 1 else ACT_DTYPE
        w_pairs, b_fold = _fold_conv_bn(p["weight"], p["bias"], p["gamma"],
                                        p["beta"], p["rmean"], p["rvar"],
                                        cin_p, cout_p, w_dtype)
        l_out = _conv_out_len(l_cur)
        if last:
            # conv4 + BN + ReLU + fused global average pool -> (B, 256) f32
            pooled = pallas_conv_bn_relu(cur, w_pairs, b_fold, l_in=l_cur,
                                         pool=True)
            pooled = pooled.reshape(B, cout_p)   # cout_p == 256 == real Cout
        else:
            K_next = _CONV_CFG[i + 1][3]
            p_next = (K_next - 1) // 2
            p_out = 2 * _conv_out_len(l_out) + (K_next - 1)
            y = pallas_conv_bn_relu(cur, w_pairs, b_fold, l_in=l_cur,
                                    p_next=p_next, p_out=p_out, pool=False)
            # Free re-view into the next layer's padded "pairs" layout.
            cur = y.reshape(B, p_out // 2, 2 * cout_p)
            cin_p, l_cur = cout_p, l_out

    return pallas_head(
        pooled,
        params["fc1"]["weight"], params["fc1"]["bias"],
        params["fc2"]["weight"], params["fc2"]["bias"],
        params["fc3"]["weight"], params["fc3"]["bias"],
        params["fc4"]["weight"], params["fc4"]["bias"])


# --------------------------------------------------------------------------- #
# Pure-JAX f32 reference (for a loose numerical check only)
# --------------------------------------------------------------------------- #
def _reference_forward(params, x):
    h = x[:, None, :].astype(jnp.float32)                  # (B, 1, L) NCL
    for name, _, _, K in _CONV_CFG:
        p = params[name]
        pad = (K - 1) // 2
        h = jax.lax.conv_general_dilated(
            h, p["weight"], window_strides=(2,), padding=[(pad, pad)],
            dimension_numbers=("NCH", "OIH", "NCH"))
        h = h + p["bias"][None, :, None]
        scale = p["gamma"] / jnp.sqrt(p["rvar"] + 1e-5)
        h = ((h - p["rmean"][None, :, None]) * scale[None, :, None]
             + p["beta"][None, :, None])
        h = jnp.maximum(h, 0.0)
    h = jnp.mean(h, axis=2)                                # global average pool
    for name in ("fc1", "fc2", "fc3"):
        h = jnp.maximum(h @ params[name]["weight"] + params[name]["bias"], 0.0)
    return h @ params["fc4"]["weight"] + params["fc4"]["bias"]


# --------------------------------------------------------------------------- #
# Deterministic parameter initialization (shapes from the PyTorch __init__)
# --------------------------------------------------------------------------- #
def _normal(key, shape, scale=0.1):
    return scale * jax.random.normal(key, shape, dtype=jnp.float32)


def init_params(key, num_classes=1):
    ks = iter(jax.random.split(key, 40))
    params = {}
    for name, cin, cout, k in _CONV_CFG:
        params[name] = dict(
            weight=_normal(next(ks), (cout, cin, k)),
            bias=_normal(next(ks), (cout,)),
            gamma=1.0 + _normal(next(ks), (cout,)),
            beta=_normal(next(ks), (cout,)),
            rmean=_normal(next(ks), (cout,)),
            rvar=1.0 + 0.1 * jnp.abs(jax.random.normal(next(ks), (cout,),
                                                       dtype=jnp.float32)),
        )
    fc_shapes = [("fc1", 256, 128), ("fc2", 128, 64), ("fc3", 64, 32),
                 ("fc4", 32, num_classes)]
    for name, fin, fout in fc_shapes:
        params[name] = dict(
            weight=_normal(next(ks), (fin, fout)),   # stored (in, out) for x @ w
            bias=_normal(next(ks), (fout,)),
        )
    return params


# --------------------------------------------------------------------------- #
if __name__ == "__main__":
    key = jax.random.PRNGKey(0)
    k_param, k_x = jax.random.split(key)

    batch = 2
    input_size = 64          # small stand-in for the default 600-sample signal
    num_classes = 1

    params = init_params(k_param, num_classes=num_classes)
    x = jax.random.normal(k_x, (batch, input_size), dtype=jnp.float32)

    out = simplified_gap_cnn_forward(params, x)
    out = jax.block_until_ready(out)

    assert out.shape == (batch, num_classes)
    assert bool(jnp.all(jnp.isfinite(out)))

    ref = _reference_forward(params, x)
    assert bool(jnp.allclose(out, ref, rtol=5e-2, atol=5e-2)), (
        f"mismatch: pallas={out}, ref={ref}")

    print("KERNEL_OK")
</pallas_src>

<mosaic_0001>
module attributes {stable_mosaic.version = 11 : i64} {
  func.func @_conv_bn_relu_kernel(%arg0: i32, %arg1: memref<1x37x2xf32, #tpu.memory_space<vmem>>, %arg2: memref<6x2x128xf32, #tpu.memory_space<vmem>>, %arg3: memref<1x128xf32, #tpu.memory_space<vmem>>, %arg4: memref<1x38x128xbf16, #tpu.memory_space<vmem>>) attributes {dimension_semantics = [#tpu.dimension_semantics<parallel>], iteration_bounds = array<i64: 2>, scalar_prefetch = 0 : i64, scratch_operands = 0 : i64, tpu.core_type = #tpu.core_type<tc>, window_params = [{transform_indices = @transform_0, window_bounds = array<i64: 1, 37, 2>}, {pipeline_mode = #tpu.pipeline_mode<synchronous>, transform_indices = @transform_1, window_bounds = array<i64: 6, 2, 128>}, {pipeline_mode = #tpu.pipeline_mode<synchronous>, transform_indices = @transform_2, window_bounds = array<i64: 1, 128>}, {transform_indices = @transform_3, window_bounds = array<i64: 1, 38, 128>}]} {
    %cst = arith.constant 0.000000e+00 : f32
    %0 = vector.broadcast %cst : f32 to vector<32x128xf32>
    %c0 = arith.constant 0 : index
    %c0_0 = arith.constant 0 : index
    %c0_1 = arith.constant 0 : index
    %1 = vector.load %arg1[%c0, %c0_0, %c0_1] : memref<1x37x2xf32, #tpu.memory_space<vmem>>, vector<1x32x2xf32>
    %2 = vector.shape_cast %1 : vector<1x32x2xf32> to vector<32x2xf32>
    %c0_2 = arith.constant 0 : index
    %c0_3 = arith.constant 0 : index
    %c0_4 = arith.constant 0 : index
    %3 = vector.load %arg2[%c0_2, %c0_3, %c0_4] : memref<6x2x128xf32, #tpu.memory_space<vmem>>, vector<1x2x128xf32>
    %4 = vector.shape_cast %3 : vector<1x2x128xf32> to vector<2x128xf32>
    %cst_5 = arith.constant dense<0.000000e+00> : vector<32x128xf32>
    %5 = tpu.matmul %2, %4, %cst_5 {dimension_numbers = #tpu.dot_dimension_numbers<[1], [0], [0], [1], [0, 0, 1, 1], [], []>} : vector<32x2xf32>, vector<2x128xf32>, vector<32x128xf32> -> vector<32x128xf32>
    %6 = arith.addf %0, %5 : vector<32x128xf32>
    %c0_6 = arith.constant 0 : index
    %c1 = arith.constant 1 : index
    %c0_7 = arith.constant 0 : index
    %7 = vector.load %arg1[%c0_6, %c1, %c0_7] : memref<1x37x2xf32, #tpu.memory_space<vmem>>, vector<1x32x2xf32>
    %8 = vector.shape_cast %7 : vector<1x32x2xf32> to vector<32x2xf32>
    %c1_8 = arith.constant 1 : index
    %c0_9 = arith.constant 0 : index
    %c0_10 = arith.constant 0 : index
    %9 = vector.load %arg2[%c1_8, %c0_9, %c0_10] : memref<6x2x128xf32, #tpu.memory_space<vmem>>, vector<1x2x128xf32>
    %10 = vector.shape_cast %9 : vector<1x2x128xf32> to vector<2x128xf32>
    %cst_11 = arith.constant dense<0.000000e+00> : vector<32x128xf32>
    %11 = tpu.matmul %8, %10, %cst_11 {dimension_numbers = #tpu.dot_dimension_numbers<[1], [0], [0], [1], [0, 0, 1, 1], [], []>} : vector<32x2xf32>, vector<2x128xf32>, vector<32x128xf32> -> vector<32x128xf32>
    %12 = arith.addf %6, %11 : vector<32x128xf32>
    %c0_12 = arith.constant 0 : index
    %c2 = arith.constant 2 : index
    %c0_13 = arith.constant 0 : index
    %13 = vector.load %arg1[%c0_12, %c2, %c0_13] : memref<1x37x2xf32, #tpu.memory_space<vmem>>, vector<1x32x2xf32>
    %14 = vector.shape_cast %13 : vector<1x32x2xf32> to vector<32x2xf32>
    %c2_14 = arith.constant 2 : index
    %c0_15 = arith.constant 0 : index
    %c0_16 = arith.constant 0 : index
    %15 = vector.load %arg2[%c2_14, %c0_15, %c0_16] : memref<6x2x128xf32, #tpu.memory_space<vmem>>, vector<1x2x128xf32>
    %16 = vector.shape_cast %15 : vector<1x2x128xf32> to vector<2x128xf32>
    %cst_17 = arith.constant dense<0.000000e+00> : vector<32x128xf32>
    %17 = tpu.matmul %14, %16, %cst_17 {dimension_numbers = #tpu.dot_dimension_numbers<[1], [0], [0], [1], [0, 0, 1, 1], [], []>} : vector<32x2xf32>, vector<2x128xf32>, vector<32x128xf32> -> vector<32x128xf32>
    %18 = arith.addf %12, %17 : vector<32x128xf32>
    %c0_18 = arith.constant 0 : index
    %c3 = arith.constant 3 : index
    %c0_19 = arith.constant 0 : index
    %19 = vector.load %arg1[%c0_18, %c3, %c0_19] : memref<1x37x2xf32, #tpu.memory_space<vmem>>, vector<1x32x2xf32>
    %20 = vector.shape_cast %19 : vector<1x32x2xf32> to vector<32x2xf32>
    %c3_20 = arith.constant 3 : index
    %c0_21 = arith.constant 0 : index
    %c0_22 = arith.constant 0 : index
    %21 = vector.load %arg2[%c3_20, %c0_21, %c0_22] : memref<6x2x128xf32, #tpu.memory_space<vmem>>, vector<1x2x128xf32>
    %22 = vector.shape_cast %21 : vector<1x2x128xf32> to vector<2x128xf32>
    %cst_23 = arith.constant dense<0.000000e+00> : vector<32x128xf32>
    %23 = tpu.matmul %20, %22, %cst_23 {dimension_numbers = #tpu.dot_dimension_numbers<[1], [0], [0], [1], [0, 0, 1, 1], [], []>} : vector<32x2xf32>, vector<2x128xf32>, vector<32x128xf32> -> vector<32x128xf32>
    %24 = arith.addf %18, %23 : vector<32x128xf32>
    %c0_24 = arith.constant 0 : index
    %c4 = arith.constant 4 : index
    %c0_25 = arith.constant 0 : index
    %25 = vector.load %arg1[%c0_24, %c4, %c0_25] : memref<1x37x2xf32, #tpu.memory_space<vmem>>, vector<1x32x2xf32>
    %26 = vector.shape_cast %25 : vector<1x32x2xf32> to vector<32x2xf32>
    %c4_26 = arith.constant 4 : index
    %c0_27 = arith.constant 0 : index
    %c0_28 = arith.constant 0 : index
    %27 = vector.load %arg2[%c4_26, %c0_27, %c0_28] : memref<6x2x128xf32, #tpu.memory_space<vmem>>, vector<1x2x128xf32>
    %28 = vector.shape_cast %27 : vector<1x2x128xf32> to vector<2x128xf32>
    %cst_29 = arith.constant dense<0.000000e+00> : vector<32x128xf32>
    %29 = tpu.matmul %26, %28, %cst_29 {dimension_numbers = #tpu.dot_dimension_numbers<[1], [0], [0], [1], [0, 0, 1, 1], [], []>} : vector<32x2xf32>, vector<2x128xf32>, vector<32x128xf32> -> vector<32x128xf32>
    %30 = arith.addf %24, %29 : vector<32x128xf32>
    %c0_30 = arith.constant 0 : index
    %c5 = arith.constant 5 : index
    %c0_31 = arith.constant 0 : index
    %31 = vector.load %arg1[%c0_30, %c5, %c0_31] : memref<1x37x2xf32, #tpu.memory_space<vmem>>, vector<1x32x2xf32>
    %32 = vector.shape_cast %31 : vector<1x32x2xf32> to vector<32x2xf32>
    %c5_32 = arith.constant 5 : index
    %c0_33 = arith.constant 0 : index
    %c0_34 = arith.constant 0 : index
    %33 = vector.load %arg2[%c5_32, %c0_33, %c0_34] : memref<6x2x128xf32, #tpu.memory_space<vmem>>, vector<1x2x128xf32>
    %34 = vector.shape_cast %33 : vector<1x2x128xf32> to vector<2x128xf32>
    %cst_35 = arith.constant dense<0.000000e+00> : vector<32x128xf32>
    %35 = tpu.matmul %32, %34, %cst_35 {dimension_numbers = #tpu.dot_dimension_numbers<[1], [0], [0], [1], [0, 0, 1, 1], [], []>} : vector<32x2xf32>, vector<2x128xf32>, vector<32x128xf32> -> vector<32x128xf32>
    %36 = arith.addf %30, %35 : vector<32x128xf32>
    %c0_36 = arith.constant 0 : index
    %c0_37 = arith.constant 0 : index
    %37 = vector.load %arg3[%c0_36, %c0_37] : memref<1x128xf32, #tpu.memory_space<vmem>>, vector<1x128xf32>
    %38 = vector.broadcast %37 : vector<1x128xf32> to vector<32x128xf32>
    %39 = arith.addf %36, %38 : vector<32x128xf32>
    %cst_38 = arith.constant 0.000000e+00 : f32
    %40 = vector.broadcast %cst_38 : f32 to vector<32x128xf32>
    %41 = arith.maximumf %39, %40 : vector<32x128xf32>
    %cst_39 = arith.constant 0.000000e+00 : bf16
    %42 = vector.broadcast %cst_39 : bf16 to vector<38x128xbf16>
    %c0_40 = arith.constant 0 : index
    %c0_41 = arith.constant 0 : index
    %c0_42 = arith.constant 0 : index
    %43 = vector.load %arg4[%c0_40, %c0_41, %c0_42] : memref<1x38x128xbf16, #tpu.memory_space<vmem>>, vector<1x38x128xbf16>
    %44 = vector.shape_cast %43 : vector<1x38x128xbf16> to vector<38x128xbf16>
    %45 = vector.shape_cast %42 : vector<38x128xbf16> to vector<1x38x128xbf16>
    tpu.vector_store %arg4[%c0_40, %c0_41, %c0_42], %45 {strides = array<i32>} : memref<1x38x128xbf16, #tpu.memory_space<vmem>>, vector<1x38x128xbf16>,
    %46 = arith.truncf %41 : vector<32x128xf32> to vector<32x128xbf16>
    %c0_43 = arith.constant 0 : index
    %c3_44 = arith.constant 3 : index
    %c0_45 = arith.constant 0 : index
    %47 = vector.load %arg4[%c0_43, %c3_44, %c0_45] : memref<1x38x128xbf16, #tpu.memory_space<vmem>>, vector<1x32x128xbf16>
    %48 = vector.shape_cast %47 : vector<1x32x128xbf16> to vector<32x128xbf16>
    %49 = vector.shape_cast %46 : vector<32x128xbf16> to vector<1x32x128xbf16>
    tpu.vector_store %arg4[%c0_43, %c3_44, %c0_45], %49 {strides = array<i32>} : memref<1x38x128xbf16, #tpu.memory_space<vmem>>, vector<1x32x128xbf16>,
    return
  }
  func.func @transform_0(%arg0: i32) -> (i32, i32, i32) {
    %c0_i32 = arith.constant 0 : i32
    %c0_i32_0 = arith.constant 0 : i32
    %c0_i32_1 = arith.constant 0 : i32
    return %arg0, %c0_i32, %c0_i32_0 : i32, i32, i32
  }
  func.func @transform_1(%arg0: i32) -> (i32, i32, i32) {
    %c0_i32 = arith.constant 0 : i32
    %c0_i32_0 = arith.constant 0 : i32
    %c0_i32_1 = arith.constant 0 : i32
    %c0_i32_2 = arith.constant 0 : i32
    return %c0_i32, %c0_i32_0, %c0_i32_1 : i32, i32, i32
  }
  func.func @transform_2(%arg0: i32) -> (i32, i32) {
    %c0_i32 = arith.constant 0 : i32
    %c0_i32_0 = arith.constant 0 : i32
    %c0_i32_1 = arith.constant 0 : i32
    return %c0_i32, %c0_i32_0 : i32, i32
  }
  func.func @transform_3(%arg0: i32) -> (i32, i32, i32) {
    %c0_i32 = arith.constant 0 : i32
    %c0_i32_0 = arith.constant 0 : i32
    %c0_i32_1 = arith.constant 0 : i32
    return %arg0, %c0_i32, %c0_i32_0 : i32, i32, i32
  }
}

module attributes {stable_mosaic.version = 11 : i64} {
  func.func @_conv_bn_relu_kernel(%arg0: i32, %arg1: memref<1x19x256xbf16, #tpu.memory_space<vmem>>, %arg2: memref<4x256x128xbf16, #tpu.memory_space<vmem>>, %arg3: memref<1x128xf32, #tpu.memory_space<vmem>>, %arg4: memref<1x20x128xbf16, #tpu.memory_space<vmem>>) attributes {dimension_semantics = [#tpu.dimension_semantics<parallel>], iteration_bounds = array<i64: 2>, scalar_prefetch = 0 : i64, scratch_operands = 0 : i64, tpu.core_type = #tpu.core_type<tc>, window_params = [{transform_indices = @transform_0, window_bounds = array<i64: 1, 19, 256>}, {pipeline_mode = #tpu.pipeline_mode<synchronous>, transform_indices = @transform_1, window_bounds = array<i64: 4, 256, 128>}, {pipeline_mode = #tpu.pipeline_mode<synchronous>, transform_indices = @transform_2, window_bounds = array<i64: 1, 128>}, {transform_indices = @transform_3, window_bounds = array<i64: 1, 20, 128>}]} {
    %cst = arith.constant 0.000000e+00 : f32
    %0 = vector.broadcast %cst : f32 to vector<16x128xf32>
    %c0 = arith.constant 0 : index
    %c0_0 = arith.constant 0 : index
    %c0_1 = arith.constant 0 : index
    %1 = vector.load %arg1[%c0, %c0_0, %c0_1] : memref<1x19x256xbf16, #tpu.memory_space<vmem>>, vector<1x16x256xbf16>
    %2 = vector.shape_cast %1 : vector<1x16x256xbf16> to vector<16x256xbf16>
    %c0_2 = arith.constant 0 : index
    %c0_3 = arith.constant 0 : index
    %c0_4 = arith.constant 0 : index
    %3 = vector.load %arg2[%c0_2, %c0_3, %c0_4] : memref<4x256x128xbf16, #tpu.memory_space<vmem>>, vector<1x256x128xbf16>
    %4 = vector.shape_cast %3 : vector<1x256x128xbf16> to vector<256x128xbf16>
    %cst_5 = arith.constant dense<0.000000e+00> : vector<16x128xf32>
    %5 = tpu.matmul %2, %4, %cst_5 {dimension_numbers = #tpu.dot_dimension_numbers<[1], [0], [0], [1], [0, 0, 1, 1], [], []>} : vector<16x256xbf16>, vector<256x128xbf16>, vector<16x128xf32> -> vector<16x128xf32>
    %6 = arith.addf %0, %5 : vector<16x128xf32>
    %c0_6 = arith.constant 0 : index
    %c1 = arith.constant 1 : index
    %c0_7 = arith.constant 0 : index
    %7 = vector.load %arg1[%c0_6, %c1, %c0_7] : memref<1x19x256xbf16, #tpu.memory_space<vmem>>, vector<1x16x256xbf16>
    %8 = vector.shape_cast %7 : vector<1x16x256xbf16> to vector<16x256xbf16>
    %c1_8 = arith.constant 1 : index
    %c0_9 = arith.constant 0 : index
    %c0_10 = arith.constant 0 : index
    %9 = vector.load %arg2[%c1_8, %c0_9, %c0_10] : memref<4x256x128xbf16, #tpu.memory_space<vmem>>, vector<1x256x128xbf16>
    %10 = vector.shape_cast %9 : vector<1x256x128xbf16> to vector<256x128xbf16>
    %cst_11 = arith.constant dense<0.000000e+00> : vector<16x128xf32>
    %11 = tpu.matmul %8, %10, %cst_11 {dimension_numbers = #tpu.dot_dimension_numbers<[1], [0], [0], [1], [0, 0, 1, 1], [], []>} : vector<16x256xbf16>, vector<256x128xbf16>, vector<16x128xf32> -> vector<16x128xf32>
    %12 = arith.addf %6, %11 : vector<16x128xf32>
    %c0_12 = arith.constant 0 : index
    %c2 = arith.constant 2 : index
    %c0_13 = arith.constant 0 : index
    %13 = vector.load %arg1[%c0_12, %c2, %c0_13] : memref<1x19x256xbf16, #tpu.memory_space<vmem>>, vector<1x16x256xbf16>
    %14 = vector.shape_cast %13 : vector<1x16x256xbf16> to vector<16x256xbf16>
    %c2_14 = arith.constant 2 : index
    %c0_15 = arith.constant 0 : index
    %c0_16 = arith.constant 0 : index
    %15 = vector.load %arg2[%c2_14, %c0_15, %c0_16] : memref<4x256x128xbf16, #tpu.memory_space<vmem>>, vector<1x256x128xbf16>
    %16 = vector.shape_cast %15 : vector<1x256x128xbf16> to vector<256x128xbf16>
    %cst_17 = arith.constant dense<0.000000e+00> : vector<16x128xf32>
    %17 = tpu.matmul %14, %16, %cst_17 {dimension_numbers = #tpu.dot_dimension_numbers<[1], [0], [0], [1], [0, 0, 1, 1], [], []>} : vector<16x256xbf16>, vector<256x128xbf16>, vector<16x128xf32> -> vector<16x128xf32>
    %18 = arith.addf %12, %17 : vector<16x128xf32>
    %c0_18 = arith.constant 0 : index
    %c3 = arith.constant 3 : index
    %c0_19 = arith.constant 0 : index
    %19 = vector.load %arg1[%c0_18, %c3, %c0_19] : memref<1x19x256xbf16, #tpu.memory_space<vmem>>, vector<1x16x256xbf16>
    %20 = vector.shape_cast %19 : vector<1x16x256xbf16> to vector<16x256xbf16>
    %c3_20 = arith.constant 3 : index
    %c0_21 = arith.constant 0 : index
    %c0_22 = arith.constant 0 : index
    %21 = vector.load %arg2[%c3_20, %c0_21, %c0_22] : memref<4x256x128xbf16, #tpu.memory_space<vmem>>, vector<1x256x128xbf16>
    %22 = vector.shape_cast %21 : vector<1x256x128xbf16> to vector<256x128xbf16>
    %cst_23 = arith.constant dense<0.000000e+00> : vector<16x128xf32>
    %23 = tpu.matmul %20, %22, %cst_23 {dimension_numbers = #tpu.dot_dimension_numbers<[1], [0], [0], [1], [0, 0, 1, 1], [], []>} : vector<16x256xbf16>, vector<256x128xbf16>, vector<16x128xf32> -> vector<16x128xf32>
    %24 = arith.addf %18, %23 : vector<16x128xf32>
    %c0_24 = arith.constant 0 : index
    %c0_25 = arith.constant 0 : index
    %25 = vector.load %arg3[%c0_24, %c0_25] : memref<1x128xf32, #tpu.memory_space<vmem>>, vector<1x128xf32>
    %26 = vector.broadcast %25 : vector<1x128xf32> to vector<16x128xf32>
    %27 = arith.addf %24, %26 : vector<16x128xf32>
    %cst_26 = arith.constant 0.000000e+00 : f32
    %28 = vector.broadcast %cst_26 : f32 to vector<16x128xf32>
    %29 = arith.maximumf %27, %28 : vector<16x128xf32>
    %cst_27 = arith.constant 0.000000e+00 : bf16
    %30 = vector.broadcast %cst_27 : bf16 to vector<20x128xbf16>
    %c0_28 = arith.constant 0 : index
    %c0_29 = arith.constant 0 : index
    %c0_30 = arith.constant 0 : index
    %31 = vector.load %arg4[%c0_28, %c0_29, %c0_30] : memref<1x20x128xbf16, #tpu.memory_space<vmem>>, vector<1x20x128xbf16>
    %32 = vector.shape_cast %31 : vector<1x20x128xbf16> to vector<20x128xbf16>
    %33 = vector.shape_cast %30 : vector<20x128xbf16> to vector<1x20x128xbf16>
    tpu.vector_store %arg4[%c0_28, %c0_29, %c0_30], %33 {strides = array<i32>} : memref<1x20x128xbf16, #tpu.memory_space<vmem>>, vector<1x20x128xbf16>,
    %34 = arith.truncf %29 : vector<16x128xf32> to vector<16x128xbf16>
    %c0_31 = arith.constant 0 : index
    %c2_32 = arith.constant 2 : index
    %c0_33 = arith.constant 0 : index
    %35 = vector.load %arg4[%c0_31, %c2_32, %c0_33] : memref<1x20x128xbf16, #tpu.memory_space<vmem>>, vector<1x16x128xbf16>
    %36 = vector.shape_cast %35 : vector<1x16x128xbf16> to vector<16x128xbf16>
    %37 = vector.shape_cast %34 : vector<16x128xbf16> to vector<1x16x128xbf16>
    tpu.vector_store %arg4[%c0_31, %c2_32, %c0_33], %37 {strides = array<i32>} : memref<1x20x128xbf16, #tpu.memory_space<vmem>>, vector<1x16x128xbf16>,
    return
  }
  func.func @transform_0(%arg0: i32) -> (i32, i32, i32) {
    %c0_i32 = arith.constant 0 : i32
    %c0_i32_0 = arith.constant 0 : i32
    %c0_i32_1 = arith.constant 0 : i32
    return %arg0, %c0_i32, %c0_i32_0 : i32, i32, i32
  }
  func.func @transform_1(%arg0: i32) -> (i32, i32, i32) {
    %c0_i32 = arith.constant 0 : i32
    %c0_i32_0 = arith.constant 0 : i32
    %c0_i32_1 = arith.constant 0 : i32
    %c0_i32_2 = arith.constant 0 : i32
    return %c0_i32, %c0_i32_0, %c0_i32_1 : i32, i32, i32
  }
  func.func @transform_2(%arg0: i32) -> (i32, i32) {
    %c0_i32 = arith.constant 0 : i32
    %c0_i32_0 = arith.constant 0 : i32
    %c0_i32_1 = arith.constant 0 : i32
    return %c0_i32, %c0_i32_0 : i32, i32
  }
  func.func @transform_3(%arg0: i32) -> (i32, i32, i32) {
    %c0_i32 = arith.constant 0 : i32
    %c0_i32_0 = arith.constant 0 : i32
    %c0_i32_1 = arith.constant 0 : i32
    return %arg0, %c0_i32, %c0_i32_0 : i32, i32, i32
  }
}

module attributes {stable_mosaic.version = 11 : i64} {
  func.func @_conv_bn_relu_kernel(%arg0: i32, %arg1: memref<1x10x256xbf16, #tpu.memory_space<vmem>>, %arg2: memref<3x256x128xbf16, #tpu.memory_space<vmem>>, %arg3: memref<1x128xf32, #tpu.memory_space<vmem>>, %arg4: memref<1x10x128xbf16, #tpu.memory_space<vmem>>) attributes {dimension_semantics = [#tpu.dimension_semantics<parallel>], iteration_bounds = array<i64: 2>, scalar_prefetch = 0 : i64, scratch_operands = 0 : i64, tpu.core_type = #tpu.core_type<tc>, window_params = [{transform_indices = @transform_0, window_bounds = array<i64: 1, 10, 256>}, {pipeline_mode = #tpu.pipeline_mode<synchronous>, transform_indices = @transform_1, window_bounds = array<i64: 3, 256, 128>}, {pipeline_mode = #tpu.pipeline_mode<synchronous>, transform_indices = @transform_2, window_bounds = array<i64: 1, 128>}, {transform_indices = @transform_3, window_bounds = array<i64: 1, 10, 128>}]} {
    %cst = arith.constant 0.000000e+00 : f32
    %0 = vector.broadcast %cst : f32 to vector<8x128xf32>
    %c0 = arith.constant 0 : index
    %c0_0 = arith.constant 0 : index
    %c0_1 = arith.constant 0 : index
    %1 = vector.load %arg1[%c0, %c0_0, %c0_1] : memref<1x10x256xbf16, #tpu.memory_space<vmem>>, vector<1x8x256xbf16>
    %2 = vector.shape_cast %1 : vector<1x8x256xbf16> to vector<8x256xbf16>
    %c0_2 = arith.constant 0 : index
    %c0_3 = arith.constant 0 : index
    %c0_4 = arith.constant 0 : index
    %3 = vector.load %arg2[%c0_2, %c0_3, %c0_4] : memref<3x256x128xbf16, #tpu.memory_space<vmem>>, vector<1x256x128xbf16>
    %4 = vector.shape_cast %3 : vector<1x256x128xbf16> to vector<256x128xbf16>
    %cst_5 = arith.constant dense<0.000000e+00> : vector<8x128xf32>
    %5 = tpu.matmul %2, %4, %cst_5 {dimension_numbers = #tpu.dot_dimension_numbers<[1], [0], [0], [1], [0, 0, 1, 1], [], []>} : vector<8x256xbf16>, vector<256x128xbf16>, vector<8x128xf32> -> vector<8x128xf32>
    %6 = arith.addf %0, %5 : vector<8x128xf32>
    %c0_6 = arith.constant 0 : index
    %c1 = arith.constant 1 : index
    %c0_7 = arith.constant 0 : index
    %7 = vector.load %arg1[%c0_6, %c1, %c0_7] : memref<1x10x256xbf16, #tpu.memory_space<vmem>>, vector<1x8x256xbf16>
    %8 = vector.shape_cast %7 : vector<1x8x256xbf16> to vector<8x256xbf16>
    %c1_8 = arith.constant 1 : index
    %c0_9 = arith.constant 0 : index
    %c0_10 = arith.constant 0 : index
    %9 = vector.load %arg2[%c1_8, %c0_9, %c0_10] : memref<3x256x128xbf16, #tpu.memory_space<vmem>>, vector<1x256x128xbf16>
    %10 = vector.shape_cast %9 : vector<1x256x128xbf16> to vector<256x128xbf16>
    %cst_11 = arith.constant dense<0.000000e+00> : vector<8x128xf32>
    %11 = tpu.matmul %8, %10, %cst_11 {dimension_numbers = #tpu.dot_dimension_numbers<[1], [0], [0], [1], [0, 0, 1, 1], [], []>} : vector<8x256xbf16>, vector<256x128xbf16>, vector<8x128xf32> -> vector<8x128xf32>
    %12 = arith.addf %6, %11 : vector<8x128xf32>
    %c0_12 = arith.constant 0 : index
    %c2 = arith.constant 2 : index
    %c0_13 = arith.constant 0 : index
    %13 = vector.load %arg1[%c0_12, %c2, %c0_13] : memref<1x10x256xbf16, #tpu.memory_space<vmem>>, vector<1x8x256xbf16>
    %14 = vector.shape_cast %13 : vector<1x8x256xbf16> to vector<8x256xbf16>
    %c2_14 = arith.constant 2 : index
    %c0_15 = arith.constant 0 : index
    %c0_16 = arith.constant 0 : index
    %15 = vector.load %arg2[%c2_14, %c0_15, %c0_16] : memref<3x256x128xbf16, #tpu.memory_space<vmem>>, vector<1x256x128xbf16>
    %16 = vector.shape_cast %15 : vector<1x256x128xbf16> to vector<256x128xbf16>
    %cst_17 = arith.constant dense<0.000000e+00> : vector<8x128xf32>
    %17 = tpu.matmul %14, %16, %cst_17 {dimension_numbers = #tpu.dot_dimension_numbers<[1], [0], [0], [1], [0, 0, 1, 1], [], []>} : vector<8x256xbf16>, vector<256x128xbf16>, vector<8x128xf32> -> vector<8x128xf32>
    %18 = arith.addf %12, %17 : vector<8x128xf32>
    %c0_18 = arith.constant 0 : index
    %c0_19 = arith.constant 0 : index
    %19 = vector.load %arg3[%c0_18, %c0_19] : memref<1x128xf32, #tpu.memory_space<vmem>>, vector<1x128xf32>
    %20 = vector.broadcast %19 : vector<1x128xf32> to vector<8x128xf32>
    %21 = arith.addf %18, %20 : vector<8x128xf32>
    %cst_20 = arith.constant 0.000000e+00 : f32
    %22 = vector.broadcast %cst_20 : f32 to vector<8x128xf32>
    %23 = arith.maximumf %21, %22 : vector<8x128xf32>
    %cst_21 = arith.constant 0.000000e+00 : bf16
    %24 = vector.broadcast %cst_21 : bf16 to vector<10x128xbf16>
    %c0_22 = arith.constant 0 : index
    %c0_23 = arith.constant 0 : index
    %c0_24 = arith.constant 0 : index
    %25 = vector.load %arg4[%c0_22, %c0_23, %c0_24] : memref<1x10x128xbf16, #tpu.memory_space<vmem>>, vector<1x10x128xbf16>
    %26 = vector.shape_cast %25 : vector<1x10x128xbf16> to vector<10x128xbf16>
    %27 = vector.shape_cast %24 : vector<10x128xbf16> to vector<1x10x128xbf16>
    tpu.vector_store %arg4[%c0_22, %c0_23, %c0_24], %27 {strides = array<i32>} : memref<1x10x128xbf16, #tpu.memory_space<vmem>>, vector<1x10x128xbf16>,
    %28 = arith.truncf %23 : vector<8x128xf32> to vector<8x128xbf16>
    %c0_25 = arith.constant 0 : index
    %c1_26 = arith.constant 1 : index
    %c0_27 = arith.constant 0 : index
    %29 = vector.load %arg4[%c0_25, %c1_26, %c0_27] : memref<1x10x128xbf16, #tpu.memory_space<vmem>>, vector<1x8x128xbf16>
    %30 = vector.shape_cast %29 : vector<1x8x128xbf16> to vector<8x128xbf16>
    %31 = vector.shape_cast %28 : vector<8x128xbf16> to vector<1x8x128xbf16>
    tpu.vector_store %arg4[%c0_25, %c1_26, %c0_27], %31 {strides = array<i32>} : memref<1x10x128xbf16, #tpu.memory_space<vmem>>, vector<1x8x128xbf16>,
    return
  }
  func.func @transform_0(%arg0: i32) -> (i32, i32, i32) {
    %c0_i32 = arith.constant 0 : i32
    %c0_i32_0 = arith.constant 0 : i32
    %c0_i32_1 = arith.constant 0 : i32
    return %arg0, %c0_i32, %c0_i32_0 : i32, i32, i32
  }
  func.func @transform_1(%arg0: i32) -> (i32, i32, i32) {
    %c0_i32 = arith.constant 0 : i32
    %c0_i32_0 = arith.constant 0 : i32
    %c0_i32_1 = arith.constant 0 : i32
    %c0_i32_2 = arith.constant 0 : i32
    return %c0_i32, %c0_i32_0, %c0_i32_1 : i32, i32, i32
  }
  func.func @transform_2(%arg0: i32) -> (i32, i32) {
    %c0_i32 = arith.constant 0 : i32
    %c0_i32_0 = arith.constant 0 : i32
    %c0_i32_1 = arith.constant 0 : i32
    return %c0_i32, %c0_i32_0 : i32, i32
  }
  func.func @transform_3(%arg0: i32) -> (i32, i32, i32) {
    %c0_i32 = arith.constant 0 : i32
    %c0_i32_0 = arith.constant 0 : i32
    %c0_i32_1 = arith.constant 0 : i32
    return %arg0, %c0_i32, %c0_i32_0 : i32, i32, i32
  }
}

module attributes {stable_mosaic.version = 11 : i64} {
  func.func @_conv_bn_relu_kernel(%arg0: i32, %arg1: memref<1x5x256xbf16, #tpu.memory_space<vmem>>, %arg2: memref<2x256x256xbf16, #tpu.memory_space<vmem>>, %arg3: memref<1x256xf32, #tpu.memory_space<vmem>>, %arg4: memref<1x1x256xf32, #tpu.memory_space<vmem>>) attributes {dimension_semantics = [#tpu.dimension_semantics<parallel>], iteration_bounds = array<i64: 2>, scalar_prefetch = 0 : i64, scratch_operands = 0 : i64, tpu.core_type = #tpu.core_type<tc>, window_params = [{transform_indices = @transform_0, window_bounds = array<i64: 1, 5, 256>}, {pipeline_mode = #tpu.pipeline_mode<synchronous>, transform_indices = @transform_1, window_bounds = array<i64: 2, 256, 256>}, {pipeline_mode = #tpu.pipeline_mode<synchronous>, transform_indices = @transform_2, window_bounds = array<i64: 1, 256>}, {transform_indices = @transform_3, window_bounds = array<i64: 1, 1, 256>}]} {
    %cst = arith.constant 0.000000e+00 : f32
    %0 = vector.broadcast %cst : f32 to vector<4x256xf32>
    %c0 = arith.constant 0 : index
    %c0_0 = arith.constant 0 : index
    %c0_1 = arith.constant 0 : index
    %1 = vector.load %arg1[%c0, %c0_0, %c0_1] : memref<1x5x256xbf16, #tpu.memory_space<vmem>>, vector<1x4x256xbf16>
    %2 = vector.shape_cast %1 : vector<1x4x256xbf16> to vector<4x256xbf16>
    %c0_2 = arith.constant 0 : index
    %c0_3 = arith.constant 0 : index
    %c0_4 = arith.constant 0 : index
    %3 = vector.load %arg2[%c0_2, %c0_3, %c0_4] : memref<2x256x256xbf16, #tpu.memory_space<vmem>>, vector<1x256x256xbf16>
    %4 = vector.shape_cast %3 : vector<1x256x256xbf16> to vector<256x256xbf16>
    %cst_5 = arith.constant dense<0.000000e+00> : vector<4x256xf32>
    %5 = tpu.matmul %2, %4, %cst_5 {dimension_numbers = #tpu.dot_dimension_numbers<[1], [0], [0], [1], [0, 0, 1, 1], [], []>} : vector<4x256xbf16>, vector<256x256xbf16>, vector<4x256xf32> -> vector<4x256xf32>
    %6 = arith.addf %0, %5 : vector<4x256xf32>
    %c0_6 = arith.constant 0 : index
    %c1 = arith.constant 1 : index
    %c0_7 = arith.constant 0 : index
    %7 = vector.load %arg1[%c0_6, %c1, %c0_7] : memref<1x5x256xbf16, #tpu.memory_space<vmem>>, vector<1x4x256xbf16>
    %8 = vector.shape_cast %7 : vector<1x4x256xbf16> to vector<4x256xbf16>
    %c1_8 = arith.constant 1 : index
    %c0_9 = arith.constant 0 : index
    %c0_10 = arith.constant 0 : index
    %9 = vector.load %arg2[%c1_8, %c0_9, %c0_10] : memref<2x256x256xbf16, #tpu.memory_space<vmem>>, vector<1x256x256xbf16>
    %10 = vector.shape_cast %9 : vector<1x256x256xbf16> to vector<256x256xbf16>
    %cst_11 = arith.constant dense<0.000000e+00> : vector<4x256xf32>
    %11 = tpu.matmul %8, %10, %cst_11 {dimension_numbers = #tpu.dot_dimension_numbers<[1], [0], [0], [1], [0, 0, 1, 1], [], []>} : vector<4x256xbf16>, vector<256x256xbf16>, vector<4x256xf32> -> vector<4x256xf32>
    %12 = arith.addf %6, %11 : vector<4x256xf32>
    %c0_12 = arith.constant 0 : index
    %c0_13 = arith.constant 0 : index
    %13 = vector.load %arg3[%c0_12, %c0_13] : memref<1x256xf32, #tpu.memory_space<vmem>>, vector<1x256xf32>
    %14 = vector.broadcast %13 : vector<1x256xf32> to vector<4x256xf32>
    %15 = arith.addf %12, %14 : vector<4x256xf32>
    %cst_14 = arith.constant 0.000000e+00 : f32
    %16 = vector.broadcast %cst_14 : f32 to vector<4x256xf32>
    %17 = arith.maximumf %15, %16 : vector<4x256xf32>
    %cst_15 = arith.constant dense<0.000000e+00> : vector<256xf32>
    %18 = vector.multi_reduction <add>, %17, %cst_15 [0] : vector<4x256xf32> to vector<256xf32>
    %19 = vector.shape_cast %18 : vector<256xf32> to vector<1x256xf32>
    %cst_16 = arith.constant 4.000000e+00 : f32
    %20 = vector.broadcast %cst_16 : f32 to vector<1x256xf32>
    %21 = arith.divf %19, %20 : vector<1x256xf32>
    %c0_17 = arith.constant 0 : index
    %c0_18 = arith.constant 0 : index
    %c0_19 = arith.constant 0 : index
    %22 = vector.load %arg4[%c0_17, %c0_18, %c0_19] : memref<1x1x256xf32, #tpu.memory_space<vmem>>, vector<1x1x256xf32>
    %23 = vector.shape_cast %22 : vector<1x1x256xf32> to vector<1x256xf32>
    %24 = vector.shape_cast %21 : vector<1x256xf32> to vector<1x1x256xf32>
    tpu.vector_store %arg4[%c0_17, %c0_18, %c0_19], %24 {strides = array<i32>} : memref<1x1x256xf32, #tpu.memory_space<vmem>>, vector<1x1x256xf32>,
    return
  }
  func.func @transform_0(%arg0: i32) -> (i32, i32, i32) {
    %c0_i32 = arith.constant 0 : i32
    %c0_i32_0 = arith.constant 0 : i32
    %c0_i32_1 = arith.constant 0 : i32
    return %arg0, %c0_i32, %c0_i32_0 : i32, i32, i32
  }
  func.func @transform_1(%arg0: i32) -> (i32, i32, i32) {
    %c0_i32 = arith.constant 0 : i32
    %c0_i32_0 = arith.constant 0 : i32
    %c0_i32_1 = arith.constant 0 : i32
    %c0_i32_2 = arith.constant 0 : i32
    return %c0_i32, %c0_i32_0, %c0_i32_1 : i32, i32, i32
  }
  func.func @transform_2(%arg0: i32) -> (i32, i32) {
    %c0_i32 = arith.constant 0 : i32
    %c0_i32_0 = arith.constant 0 : i32
    %c0_i32_1 = arith.constant 0 : i32
    return %c0_i32, %c0_i32_0 : i32, i32
  }
  func.func @transform_3(%arg0: i32) -> (i32, i32, i32) {
    %c0_i32 = arith.constant 0 : i32
    %c0_i32_0 = arith.constant 0 : i32
    %c0_i32_1 = arith.constant 0 : i32
    return %arg0, %c0_i32, %c0_i32_0 : i32, i32, i32
  }
}

module attributes {stable_mosaic.version = 11 : i64} {
  func.func @_head_kernel(%arg0: memref<2x256xf32, #tpu.memory_space<vmem>>, %arg1: memref<256x128xf32, #tpu.memory_space<vmem>>, %arg2: memref<1x128xf32, #tpu.memory_space<vmem>>, %arg3: memref<128x64xf32, #tpu.memory_space<vmem>>, %arg4: memref<1x64xf32, #tpu.memory_space<vmem>>, %arg5: memref<64x32xf32, #tpu.memory_space<vmem>>, %arg6: memref<1x32xf32, #tpu.memory_space<vmem>>, %arg7: memref<32x1xf32, #tpu.memory_space<vmem>>, %arg8: memref<1x1xf32, #tpu.memory_space<vmem>>, %arg9: memref<2x1xf32, #tpu.memory_space<vmem>>) attributes {dimension_semantics = [], scalar_prefetch = 0 : i64, scratch_operands = 0 : i64, tpu.core_type = #tpu.core_type<tc>} {
    %c0 = arith.constant 0 : index
    %c0_0 = arith.constant 0 : index
    %0 = vector.load %arg0[%c0, %c0_0] : memref<2x256xf32, #tpu.memory_space<vmem>>, vector<2x256xf32>
    %c0_1 = arith.constant 0 : index
    %c0_2 = arith.constant 0 : index
    %1 = vector.load %arg1[%c0_1, %c0_2] : memref<256x128xf32, #tpu.memory_space<vmem>>, vector<256x128xf32>
    %cst = arith.constant dense<0.000000e+00> : vector<2x128xf32>
    %2 = tpu.matmul %0, %1, %cst {dimension_numbers = #tpu.dot_dimension_numbers<[1], [0], [0], [1], [0, 0, 1, 1], [], []>} : vector<2x256xf32>, vector<256x128xf32>, vector<2x128xf32> -> vector<2x128xf32>
    %c0_3 = arith.constant 0 : index
    %c0_4 = arith.constant 0 : index
    %3 = vector.load %arg2[%c0_3, %c0_4] : memref<1x128xf32, #tpu.memory_space<vmem>>, vector<1x128xf32>
    %4 = vector.broadcast %3 : vector<1x128xf32> to vector<2x128xf32>
    %5 = arith.addf %2, %4 : vector<2x128xf32>
    %cst_5 = arith.constant 0.000000e+00 : f32
    %6 = vector.broadcast %cst_5 : f32 to vector<2x128xf32>
    %7 = arith.maximumf %5, %6 : vector<2x128xf32>
    %c0_6 = arith.constant 0 : index
    %c0_7 = arith.constant 0 : index
    %8 = vector.load %arg3[%c0_6, %c0_7] : memref<128x64xf32, #tpu.memory_space<vmem>>, vector<128x64xf32>
    %cst_8 = arith.constant dense<0.000000e+00> : vector<2x64xf32>
    %9 = tpu.matmul %7, %8, %cst_8 {dimension_numbers = #tpu.dot_dimension_numbers<[1], [0], [0], [1], [0, 0, 1, 1], [], []>} : vector<2x128xf32>, vector<128x64xf32>, vector<2x64xf32> -> vector<2x64xf32>
    %c0_9 = arith.constant 0 : index
    %c0_10 = arith.constant 0 : index
    %10 = vector.load %arg4[%c0_9, %c0_10] : memref<1x64xf32, #tpu.memory_space<vmem>>, vector<1x64xf32>
    %11 = vector.broadcast %10 : vector<1x64xf32> to vector<2x64xf32>
    %12 = arith.addf %9, %11 : vector<2x64xf32>
    %cst_11 = arith.constant 0.000000e+00 : f32
    %13 = vector.broadcast %cst_11 : f32 to vector<2x64xf32>
    %14 = arith.maximumf %12, %13 : vector<2x64xf32>
    %c0_12 = arith.constant 0 : index
    %c0_13 = arith.constant 0 : index
    %15 = vector.load %arg5[%c0_12, %c0_13] : memref<64x32xf32, #tpu.memory_space<vmem>>, vector<64x32xf32>
    %cst_14 = arith.constant dense<0.000000e+00> : vector<2x32xf32>
    %16 = tpu.matmul %14, %15, %cst_14 {dimension_numbers = #tpu.dot_dimension_numbers<[1], [0], [0], [1], [0, 0, 1, 1], [], []>} : vector<2x64xf32>, vector<64x32xf32>, vector<2x32xf32> -> vector<2x32xf32>
    %c0_15 = arith.constant 0 : index
    %c0_16 = arith.constant 0 : index
    %17 = vector.load %arg6[%c0_15, %c0_16] : memref<1x32xf32, #tpu.memory_space<vmem>>, vector<1x32xf32>
    %18 = vector.broadcast %17 : vector<1x32xf32> to vector<2x32xf32>
    %19 = arith.addf %16, %18 : vector<2x32xf32>
    %cst_17 = arith.constant 0.000000e+00 : f32
    %20 = vector.broadcast %cst_17 : f32 to vector<2x32xf32>
    %21 = arith.maximumf %19, %20 : vector<2x32xf32>
    %c0_18 = arith.constant 0 : index
    %c0_19 = arith.constant 0 : index
    %22 = vector.load %arg7[%c0_18, %c0_19] : memref<32x1xf32, #tpu.memory_space<vmem>>, vector<32x1xf32>
    %cst_20 = arith.constant dense<0.000000e+00> : vector<2x1xf32>
    %23 = tpu.matmul %21, %22, %cst_20 {dimension_numbers = #tpu.dot_dimension_numbers<[1], [0], [0], [1], [0, 0, 1, 1], [], []>} : vector<2x32xf32>, vector<32x1xf32>, vector<2x1xf32> -> vector<2x1xf32>
    %c0_21 = arith.constant 0 : index
    %c0_22 = arith.constant 0 : index
    %24 = vector.load %arg8[%c0_21, %c0_22] : memref<1x1xf32, #tpu.memory_space<vmem>>, vector<1x1xf32>
    %25 = vector.broadcast %24 : vector<1x1xf32> to vector<2x1xf32>
    %26 = arith.addf %23, %25 : vector<2x1xf32>
    %c0_23 = arith.constant 0 : index
    %c0_24 = arith.constant 0 : index
    %27 = vector.load %arg9[%c0_23, %c0_24] : memref<2x1xf32, #tpu.memory_space<vmem>>, vector<2x1xf32>
    tpu.vector_store %arg9[%c0_23, %c0_24], %26 {strides = array<i32>} : memref<2x1xf32, #tpu.memory_space<vmem>>, vector<2x1xf32>,
    return
  }
}

</mosaic_0001>

<llo_original>
// kernel: simplified_gap_cnn_forward.7
$region0: #{simplified_gap_cnn_forward.7}
  #allocation0 [shape = 'u32[]', space=smem, size = 0x4, offset = 0x4, fixed_abs, tag = 'smem constant byte address 0x4 - core index']
  #allocation1 [shape = 'u32[72,128]{1,0:T(1,128)}', space=vmem, size = 0x9000, scoped, tag = 'internal scratch']
  %s0 = inlined_call_operand.vmem [shape: bf16[2,10,256], index: 0, kind: input, shape index: {}]
  %s1 = inlined_call_operand.vmem [shape: bf16[3,256,128], index: 1, kind: input, shape index: {}]
  %s2 = inlined_call_operand.vmem [shape: f32[1,128], index: 2, kind: input, shape index: {}]
  %s3 = inlined_call_operand.vmem [shape: bf16[2,10,128], index: 3, kind: output, shape index: {}]
  %s4 = sld [smem:[#allocation0]]
  $region45: #{simplified_gap_cnn_forward.7} parent=0
    _
  %s6 = ssub.s32 1, %s4
  %s7 = scalar_select 0, %s6, %s4
  loop: start=0, step=1, limit=4
  $region2: #{simplified_gap_cnn_forward.7} parent=0 // loop_pre_header
    _
  $region3: #{simplified_gap_cnn_forward.7} parent=0 // loop_header
    %s9 = sphi 0, %s13
    %p10 = scmp.ge.s32.totalorder %s9, 4
    %s19 = sphi 0, %s21
    %s22 = sphi 0, %s19
    %s23 = sphi 0, %s22
    %s39 = sphi 0, %s23
    %s43 = sphi 0, %s43
    %s45 = sphi 0, %s43
    %s46 = sphi 0, %s45
    %s60 = sphi 0, %s46
    %s64 = sphi 0, %s64
    %s66 = sphi 0, %s64
    %s67 = sphi 0, %s66
    %s81 = sphi 0, %s67
    %s87 = sphi 0, %s89
    %s90 = sphi 0, %s87
    %s91 = sphi 0, %s90
    %s107 = sphi 0, %s91
  $region4: #{simplified_gap_cnn_forward.7} parent=0 // loop_header_branch
    %12 = sbr.rel (%p10) target = $region8
  $region5: #{simplified_gap_cnn_forward.7} parent=0 // loop_body
    %s14 = ssub.s32 %s9, 1
    %s15 = ssub.s32 %s9, 2
    %s16 = sadd.s32 %s9, 1
    %s17 = ssub.s32 %s9, %s16
    %p18 = scmp.eq.s32.totalorder %s17, 0
    %s20 = sadd.s32 %s19, 1
    %s21 = scalar_select %p18, %s19, %s20
    %p24 = pneg %p18
    %p25 = scmp.eq.s32.totalorder %s9, 1
    %p26 = por %p24, %p25
    %p27 = scmp.ne.s32.totalorder %s19, %s22
    %p28 = scmp.eq.s32.totalorder %s9, 0
    %p29 = por %p27, %p28
    %p30 = scmp.ne.s32.totalorder %s19, %s22
    %p31 = scmp.eq.s32.totalorder %s14, 1
    %p32 = por %p30, %p31
    %p33 = scmp.ne.s32.totalorder %s22, %s23
    %p34 = scmp.eq.s32.totalorder %s14, 0
    %p35 = por %p33, %p34
    %p36 = scmp.ne.s32.totalorder %s22, %s23
    %p37 = scmp.eq.s32.totalorder %s15, 1
    %p38 = por %p36, %p37
    %p40 = scmp.ne.s32.totalorder %s23, %s39
    %p41 = scmp.eq.s32.totalorder %s15, 0
    %p42 = por %p40, %p41
    %s44 = sadd.s32 %s43, 1
    %p47 = scmp.eq.s32.totalorder %s9, 1
    %p48 = scmp.ne.s32.totalorder %s43, %s45
    %p49 = scmp.eq.s32.totalorder %s9, 0
    %p50 = por %p48, %p49
    %p51 = scmp.ne.s32.totalorder %s43, %s45
    %p52 = scmp.eq.s32.totalorder %s14, 1
    %p53 = por %p51, %p52
    %p54 = scmp.ne.s32.totalorder %s45, %s46
    %p55 = scmp.eq.s32.totalorder %s14, 0
    %p56 = por %p54, %p55
    %p57 = scmp.ne.s32.totalorder %s45, %s46
    %p58 = scmp.eq.s32.totalorder %s15, 1
    %p59 = por %p57, %p58
    %p61 = scmp.ne.s32.totalorder %s46, %s60
    %p62 = scmp.eq.s32.totalorder %s15, 0
    %p63 = por %p61, %p62
    %s65 = sadd.s32 %s64, 1
    %p68 = scmp.eq.s32.totalorder %s9, 1
    %p69 = scmp.ne.s32.totalorder %s64, %s66
    %p70 = scmp.eq.s32.totalorder %s9, 0
    %p71 = por %p69, %p70
    %p72 = scmp.ne.s32.totalorder %s64, %s66
    %p73 = scmp.eq.s32.totalorder %s14, 1
    %p74 = por %p72, %p73
    %p75 = scmp.ne.s32.totalorder %s66, %s67
    %p76 = scmp.eq.s32.totalorder %s14, 0
    %p77 = por %p75, %p76
    %p78 = scmp.ne.s32.totalorder %s66, %s67
    %p79 = scmp.eq.s32.totalorder %s15, 1
    %p80 = por %p78, %p79
    %p82 = scmp.ne.s32.totalorder %s67, %s81
    %p83 = scmp.eq.s32.totalorder %s15, 0
    %p84 = por %p82, %p83
    %s85 = ssub.s32 %s9, %s16
    %p86 = scmp.eq.s32.totalorder %s85, 0
    %s88 = sadd.s32 %s87, 1
    %s89 = scalar_select %p86, %s87, %s88
    %p92 = pneg %p86
    %p93 = scmp.eq.s32.totalorder %s9, 1
    %p94 = por %p92, %p93
    %p95 = scmp.ne.s32.totalorder %s87, %s90
    %p96 = scmp.eq.s32.totalorder %s9, 0
    %p97 = por %p95, %p96
    %p98 = scmp.ne.s32.totalorder %s87, %s90
    %p99 = scmp.eq.s32.totalorder %s14, 1
    %p100 = por %p98, %p99
    %p101 = scmp.ne.s32.totalorder %s90, %s91
    %p102 = scmp.eq.s32.totalorder %s14, 0
    %p103 = por %p101, %p102
    %p104 = scmp.ne.s32.totalorder %s90, %s91
    %p105 = scmp.eq.s32.totalorder %s15, 1
    %p106 = por %p104, %p105
    %p108 = scmp.ne.s32.totalorder %s91, %s107
    %p109 = scmp.eq.s32.totalorder %s15, 0
    %p110 = por %p108, %p109
    %p111 = scmp.le.s32.totalorder 1, %s9
    %p112 = scmp.lt.s32.totalorder %s9, 3
    %p113 = pnand %p111, %p112
    %p114 = pneg %p113
    // Predicated region
    $region9: #{simplified_gap_cnn_forward.7} parent=5 // pred_check
      _
    $region10: #{simplified_gap_cnn_forward.7} parent=5 // pred_check_branch
      %116 = sbr.rel (%p113) target = $region12
    $region11: #{simplified_gap_cnn_forward.7} parent=5 // pred_region
      %s117 = ssub.s32 %s9, 1
      // Predicated region
      $region13: #{simplified_gap_cnn_forward.7} parent=11 // pred_check
        %p118 = pneg %p56
      $region14: #{simplified_gap_cnn_forward.7} parent=11 // pred_check_branch
        %120 = sbr.rel (%p118) target = $region16
      $region15: #{simplified_gap_cnn_forward.7} parent=11 // pred_region
        _
      $region16: #{simplified_gap_cnn_forward.7} parent=11 // pred_fallthru
        _
      // Predicated region
      $region17: #{simplified_gap_cnn_forward.7} parent=11 // pred_check
        %p121 = pneg %p77
      $region18: #{simplified_gap_cnn_forward.7} parent=11 // pred_check_branch
        %123 = sbr.rel (%p121) target = $region20
      $region19: #{simplified_gap_cnn_forward.7} parent=11 // pred_region
        _
      $region20: #{simplified_gap_cnn_forward.7} parent=11 // pred_fallthru
        _
    $region12: #{simplified_gap_cnn_forward.7} parent=5 // pred_fallthru
      _
    %p124 = scmp.lt.s32.totalorder %s9, 2
    // Predicated region
    $region21: #{simplified_gap_cnn_forward.7} parent=5 // pred_check
      %p125 = pneg %p124
    $region22: #{simplified_gap_cnn_forward.7} parent=5 // pred_check_branch
      %127 = sbr.rel (%p125) target = $region24
    $region23: #{simplified_gap_cnn_forward.7} parent=5 // pred_region
      // Predicated region
      $region25: #{simplified_gap_cnn_forward.7} parent=23 // pred_check
        %p128 = pneg %p29
      $region26: #{simplified_gap_cnn_forward.7} parent=23 // pred_check_branch
        %130 = sbr.rel (%p128) target = $region28
      $region27: #{simplified_gap_cnn_forward.7} parent=23 // pred_region
        %p131 = scmp.lt.s32.totalorder %s9, 1
        %s132 = scalar_select %p131, %s9, 1
        %s133 = smul.addr %s132, 4
        %s134 = smul.addr %s133, 4
        %s135 = scalar_lea.vmem %s0, %s134
      $region28: #{simplified_gap_cnn_forward.7} parent=23 // pred_fallthru
        _
    $region24: #{simplified_gap_cnn_forward.7} parent=5 // pred_fallthru
      _
    %p136 = scmp.le.s32.totalorder 1, %s9
    %p137 = scmp.lt.s32.totalorder %s9, 3
    %p138 = pnand %p136, %p137
    %p139 = pneg %p138
    // Predicated region
    $region29: #{simplified_gap_cnn_forward.7} parent=5 // pred_check
      _
    $region30: #{simplified_gap_cnn_forward.7} parent=5 // pred_check_branch
      %141 = sbr.rel (%p138) target = $region32
    $region31: #{simplified_gap_cnn_forward.7} parent=5 // pred_region
      %s142 = ssub.s32 %s9, 1
      %p143 = scmp.lt.s32.totalorder %s14, 1
      %s144 = scalar_select %p143, %s14, 1
      %s145 = smul.addr %s144, 4
      %s146 = smul.addr %s145, 4
      %s147 = scalar_lea.vmem %s0, %s146
      %p148 = pneg %p35
      %p149 = pneg %p32
      %p150 = pneg %p56
      %p151 = pneg %p53
      %p152 = pneg %p77
      %p153 = pneg %p74
      %p154 = pneg %p103
      %p155 = pneg %p100
      %p156 = scmp.lt.s32.totalorder %s14, 1
      %s157 = scalar_select %p156, %s14, 1
      %s158 = smul.addr %s157, 2
      %s159 = smul.addr %s158, 4
      %s160 = scalar_lea.vmem %s3, %s159
      %p161 = scmp.lt.s32.totalorder %s14, 1
      %s162 = scalar_select %p161, %s14, 1
      %s163 = smul.addr %s162, 4
      %s164 = smul.addr %s163, 4
      %s165 = scalar_lea.vmem %s0, %s164
      %p166 = scmp.lt.s32.totalorder %s14, 1
      %s167 = scalar_select %p166, %s14, 1
      %s168 = smul.addr %s167, 2
      %s169 = smul.addr %s168, 4
      %s170 = scalar_lea.vmem %s3, %s169
      %v172 = vld [vmem:[%s165] sm:$0xff]
      %v173 = vld [vmem:[%s1] sm:$0xf]
      %v174 = vld [vmem:[%s1 + $0x4] sm:$0xf]
      %v175 = vld [vmem:[%s1 + $0x8] sm:$0xf]
      %v176 = vld [vmem:[%s1 + $0xc] sm:$0xf]
      %v177 = vld [vmem:[%s1 + $0x10] sm:$0xf]
      %v178 = vld [vmem:[%s1 + $0x14] sm:$0xf]
      %v179 = vld [vmem:[%s1 + $0x18] sm:$0xf]
      %v180 = vld [vmem:[%s1 + $0x1c] sm:$0xf]
      %v181 = vld [vmem:[%s1 + $0x20] sm:$0xf]
      %v182 = vld [vmem:[%s1 + $0x24] sm:$0xf]
      %v183 = vld [vmem:[%s1 + $0x28] sm:$0xf]
      %v184 = vld [vmem:[%s1 + $0x2c] sm:$0xf]
      %v185 = vld [vmem:[%s1 + $0x30] sm:$0xf]
      %v186 = vld [vmem:[%s1 + $0x34] sm:$0xf]
      %v187 = vld [vmem:[%s1 + $0x38] sm:$0xf]
      %v188 = vld [vmem:[%s1 + $0x3c] sm:$0xf]
      %v189 = vld [vmem:[%s1 + $0x40] sm:$0xf]
      %v190 = vld [vmem:[%s1 + $0x44] sm:$0xf]
      %v191 = vld [vmem:[%s1 + $0x48] sm:$0xf]
      %v192 = vld [vmem:[%s1 + $0x4c] sm:$0xf]
      %v193 = vld [vmem:[%s1 + $0x50] sm:$0xf]
      %v194 = vld [vmem:[%s1 + $0x54] sm:$0xf]
      %v195 = vld [vmem:[%s1 + $0x58] sm:$0xf]
      %v196 = vld [vmem:[%s1 + $0x5c] sm:$0xf]
      %v197 = vld [vmem:[%s1 + $0x60] sm:$0xf]
      %v198 = vld [vmem:[%s1 + $0x64] sm:$0xf]
      %v199 = vld [vmem:[%s1 + $0x68] sm:$0xf]
      %v200 = vld [vmem:[%s1 + $0x6c] sm:$0xf]
      %v201 = vld [vmem:[%s1 + $0x70] sm:$0xf]
      %v202 = vld [vmem:[%s1 + $0x74] sm:$0xf]
      %v203 = vld [vmem:[%s1 + $0x78] sm:$0xf]
      %v204 = vld [vmem:[%s1 + $0x7c] sm:$0xf]
      %v205 = vld [vmem:[%s165 + $0x8] sm:$0x11]
      %s206 = scalar_lea.vmem %s1, 128
      %v207 = vld [vmem:[%s206] sm:$0xf]
      %v208 = vld [vmem:[%s206 + $0x4] sm:$0xf]
      %v209 = vld [vmem:[%s206 + $0x8] sm:$0xf]
      %v210 = vld [vmem:[%s206 + $0xc] sm:$0xf]
      %v211 = vld [vmem:[%s206 + $0x10] sm:$0xf]
      %v212 = vld [vmem:[%s206 + $0x14] sm:$0xf]
      %v213 = vld [vmem:[%s206 + $0x18] sm:$0xf]
      %v214 = vld [vmem:[%s206 + $0x1c] sm:$0xf]
      %v215 = vld [vmem:[%s206 + $0x20] sm:$0xf]
      %v216 = vld [vmem:[%s206 + $0x24] sm:$0xf]
      %v217 = vld [vmem:[%s206 + $0x28] sm:$0xf]
      %v218 = vld [vmem:[%s206 + $0x2c] sm:$0xf]
      %v219 = vld [vmem:[%s206 + $0x30] sm:$0xf]
      %v220 = vld [vmem:[%s206 + $0x34] sm:$0xf]
      %v221 = vld [vmem:[%s206 + $0x38] sm:$0xf]
      %v222 = vld [vmem:[%s206 + $0x3c] sm:$0xf]
      %v223 = vld [vmem:[%s206 + $0x40] sm:$0xf]
      %v224 = vld [vmem:[%s206 + $0x44] sm:$0xf]
      %v225 = vld [vmem:[%s206 + $0x48] sm:$0xf]
      %v226 = vld [vmem:[%s206 + $0x4c] sm:$0xf]
      %v227 = vld [vmem:[%s206 + $0x50] sm:$0xf]
      %v228 = vld [vmem:[%s206 + $0x54] sm:$0xf]
      %v229 = vld [vmem:[%s206 + $0x58] sm:$0xf]
      %v230 = vld [vmem:[%s206 + $0x5c] sm:$0xf]
      %v231 = vld [vmem:[%s206 + $0x60] sm:$0xf]
      %v232 = vld [vmem:[%s206 + $0x64] sm:$0xf]
      %v233 = vld [vmem:[%s206 + $0x68] sm:$0xf]
      %v234 = vld [vmem:[%s206 + $0x6c] sm:$0xf]
      %v235 = vld [vmem:[%s206 + $0x70] sm:$0xf]
      %v236 = vld [vmem:[%s206 + $0x74] sm:$0xf]
      %v237 = vld [vmem:[%s206 + $0x78] sm:$0xf]
      %v238 = vld [vmem:[%s206 + $0x7c] sm:$0xf]
      %v241 = vunpack.c.l.b16 %v172
      %v242 = vunpack.c.h.b16 %v172
      %v243 = vunpack.c.l.b16 %v205
      %v244 = vunpack.c.h.b16 %v205
      %v245 = vpack.c.b16 %v243, %v241
      %v246 = vpack.c.b16 %v244, %v242
      %v248 = vshrl.u32 %v245, 16
      %v250 = vshll.u32 %v245, 16
      %v252 = vrot.slane %v250, 1
      %v253 = vor.u32 %v248, %v252
      %v255 = vshrl.u32 %v246, 16
      %v257 = vshll.u32 %v246, 16
      %v259 = vrot.slane %v257, 1
      %v260 = vor.u32 %v255, %v259
      %v295 = vunpack.c.l.b16 %v207
      %v296 = vunpack.c.l.b16 %v208
      %v297 = vunpack.c.l.b16 %v209
      %v298 = vunpack.c.l.b16 %v210
      %v299 = vunpack.c.l.b16 %v211
      %v300 = vunpack.c.l.b16 %v212
      %v301 = vunpack.c.l.b16 %v213
      %v302 = vunpack.c.l.b16 %v214
      %v303 = vunpack.c.l.b16 %v215
      %v304 = vunpack.c.l.b16 %v216
      %v305 = vunpack.c.l.b16 %v217
      %v306 = vunpack.c.l.b16 %v218
      %v307 = vunpack.c.l.b16 %v219
      %v308 = vunpack.c.l.b16 %v220
      %v309 = vunpack.c.l.b16 %v221
      %v310 = vunpack.c.l.b16 %v222
      %v311 = vunpack.c.l.b16 %v223
      %v312 = vunpack.c.l.b16 %v224
      %v313 = vunpack.c.l.b16 %v225
      %v314 = vunpack.c.l.b16 %v226
      %v315 = vunpack.c.l.b16 %v227
      %v316 = vunpack.c.l.b16 %v228
      %v317 = vunpack.c.l.b16 %v229
      %v318 = vunpack.c.l.b16 %v230
      %v319 = vunpack.c.l.b16 %v231
      %v320 = vunpack.c.l.b16 %v232
      %v321 = vunpack.c.l.b16 %v233
      %v322 = vunpack.c.l.b16 %v234
      %v323 = vunpack.c.l.b16 %v235
      %v324 = vunpack.c.l.b16 %v236
      %v325 = vunpack.c.l.b16 %v237
      %v326 = vunpack.c.l.b16 %v238
      %v327 = vpack.c.b16 %v296, %v295
      %v328 = vpack.c.b16 %v298, %v297
      %v329 = vpack.c.b16 %v300, %v299
      %v330 = vpack.c.b16 %v302, %v301
      %v331 = vpack.c.b16 %v304, %v303
      %v332 = vpack.c.b16 %v306, %v305
      %v333 = vpack.c.b16 %v308, %v307
      %v334 = vpack.c.b16 %v310, %v309
      %v335 = vpack.c.b16 %v312, %v311
      %v336 = vpack.c.b16 %v314, %v313
      %v337 = vpack.c.b16 %v316, %v315
      %v338 = vpack.c.b16 %v318, %v317
      %v339 = vpack.c.b16 %v320, %v319
      %v340 = vpack.c.b16 %v322, %v321
      %v341 = vpack.c.b16 %v324, %v323
      %v342 = vpack.c.b16 %v326, %v325
      %359 = vmatpush.bf16.msra.mxu0 %v334
      %360 = vmatpush.bf16.msra.mxu0 %v333
      %361 = vmatpush.bf16.msra.mxu0 %v332
      %362 = vmatpush.bf16.msra.mxu0 %v331
      %363 = vmatpush.bf16.msra.mxu0 %v330
      %364 = vmatpush.bf16.msra.mxu0 %v329
      %365 = vmatpush.bf16.msra.mxu0 %v328
      %366 = vmatpush.bf16.msra.mxu0 %v327
      %367 = vmatmul.bf16.gmra.mxu0 %v253
      %v368 = vpop.f32.mrf.mxu0
      %v369 = vadd.f32 0.0, %v368
      %v370 = vpop.f32.mrf.mxu0
      %371 = vdwg.mxu0
      %372 = vmatpush.bf16.msra.mxu0 %v342
      %373 = vmatpush.bf16.msra.mxu0 %v341
      %374 = vmatpush.bf16.msra.mxu0 %v340
      %375 = vmatpush.bf16.msra.mxu0 %v339
      %376 = vmatpush.bf16.msra.mxu0 %v338
      %377 = vmatpush.bf16.msra.mxu0 %v337
      %378 = vmatpush.bf16.msra.mxu0 %v336
      %379 = vmatpush.bf16.msra.mxu0 %v335
      %380 = vmatmul.bf16.gmra.mxu0 %v260
      %v381 = vpop.f32.mrf.mxu0
      %v382 = vadd.f32 %v369, %v381
      %v383 = vpop.f32.mrf.mxu0
      %384 = vdwg.mxu0
      %v385 = vpack.c.b16 %v241, %v241
      %v386 = vpack.c.b16 %v242, %v242
      %v421 = vunpack.c.l.b16 %v173
      %v422 = vunpack.c.l.b16 %v174
      %v423 = vunpack.c.l.b16 %v175
      %v424 = vunpack.c.l.b16 %v176
      %v425 = vunpack.c.l.b16 %v177
      %v426 = vunpack.c.l.b16 %v178
      %v427 = vunpack.c.l.b16 %v179
      %v428 = vunpack.c.l.b16 %v180
      %v429 = vunpack.c.l.b16 %v181
      %v430 = vunpack.c.l.b16 %v182
      %v431 = vunpack.c.l.b16 %v183
      %v432 = vunpack.c.l.b16 %v184
      %v433 = vunpack.c.l.b16 %v185
      %v434 = vunpack.c.l.b16 %v186
      %v435 = vunpack.c.l.b16 %v187
      %v436 = vunpack.c.l.b16 %v188
      %v437 = vunpack.c.l.b16 %v189
      %v438 = vunpack.c.l.b16 %v190
      %v439 = vunpack.c.l.b16 %v191
      %v440 = vunpack.c.l.b16 %v192
      %v441 = vunpack.c.l.b16 %v193
      %v442 = vunpack.c.l.b16 %v194
      %v443 = vunpack.c.l.b16 %v195
      %v444 = vunpack.c.l.b16 %v196
      %v445 = vunpack.c.l.b16 %v197
      %v446 = vunpack.c.l.b16 %v198
      %v447 = vunpack.c.l.b16 %v199
      %v448 = vunpack.c.l.b16 %v200
      %v449 = vunpack.c.l.b16 %v201
      %v450 = vunpack.c.l.b16 %v202
      %v451 = vunpack.c.l.b16 %v203
      %v452 = vunpack.c.l.b16 %v204
      %v453 = vpack.c.b16 %v422, %v421
      %v454 = vpack.c.b16 %v424, %v423
      %v455 = vpack.c.b16 %v426, %v425
      %v456 = vpack.c.b16 %v428, %v427
      %v457 = vpack.c.b16 %v430, %v429
      %v458 = vpack.c.b16 %v432, %v431
      %v459 = vpack.c.b16 %v434, %v433
      %v460 = vpack.c.b16 %v436, %v435
      %v461 = vpack.c.b16 %v438, %v437
      %v462 = vpack.c.b16 %v440, %v439
      %v463 = vpack.c.b16 %v442, %v441
      %v464 = vpack.c.b16 %v444, %v443
      %v465 = vpack.c.b16 %v446, %v445
      %v466 = vpack.c.b16 %v448, %v447
      %v467 = vpack.c.b16 %v450, %v449
      %v468 = vpack.c.b16 %v452, %v451
      %485 = vmatpush.bf16.msra.mxu0 %v460
      %486 = vmatpush.bf16.msra.mxu0 %v459
      %487 = vmatpush.bf16.msra.mxu0 %v458
      %488 = vmatpush.bf16.msra.mxu0 %v457
      %489 = vmatpush.bf16.msra.mxu0 %v456
      %490 = vmatpush.bf16.msra.mxu0 %v455
      %491 = vmatpush.bf16.msra.mxu0 %v454
      %492 = vmatpush.bf16.msra.mxu0 %v453
      %493 = vmatmul.bf16.gmra.mxu0 %v385
      %v494 = vpop.f32.mrf.mxu0
      %v495 = vadd.f32 %v382, %v494
      %v496 = vpop.f32.mrf.mxu0
      %497 = vdwg.mxu0
      %498 = vmatpush.bf16.msra.mxu0 %v468
      %499 = vmatpush.bf16.msra.mxu0 %v467
      %500 = vmatpush.bf16.msra.mxu0 %v466
      %501 = vmatpush.bf16.msra.mxu0 %v465
      %502 = vmatpush.bf16.msra.mxu0 %v464
      %503 = vmatpush.bf16.msra.mxu0 %v463
      %504 = vmatpush.bf16.msra.mxu0 %v462
      %505 = vmatpush.bf16.msra.mxu0 %v461
      %506 = vmatmul.bf16.gmra.mxu0 %v386
      %v507 = vpop.f32.mrf.mxu0
      %v508 = vadd.f32 %v495, %v507
      %v509 = vpop.f32.mrf.mxu0
      %510 = vdwg.mxu0
      %v511 = vld [vmem:[%s165] sm:$0xee]
      %s512 = scalar_lea.vmem %s1, 256
      %v513 = vld [vmem:[%s512] sm:$0xf]
      %v514 = vld [vmem:[%s512 + $0x4] sm:$0xf]
      %v515 = vld [vmem:[%s512 + $0x8] sm:$0xf]
      %v516 = vld [vmem:[%s512 + $0xc] sm:$0xf]
      %v517 = vld [vmem:[%s512 + $0x10] sm:$0xf]
      %v518 = vld [vmem:[%s512 + $0x14] sm:$0xf]
      %v519 = vld [vmem:[%s512 + $0x18] sm:$0xf]
      %v520 = vld [vmem:[%s512 + $0x1c] sm:$0xf]
      %v521 = vld [vmem:[%s512 + $0x20] sm:$0xf]
      %v522 = vld [vmem:[%s512 + $0x24] sm:$0xf]
      %v523 = vld [vmem:[%s512 + $0x28] sm:$0xf]
      %v524 = vld [vmem:[%s512 + $0x2c] sm:$0xf]
      %v525 = vld [vmem:[%s512 + $0x30] sm:$0xf]
      %v526 = vld [vmem:[%s512 + $0x34] sm:$0xf]
      %v527 = vld [vmem:[%s512 + $0x38] sm:$0xf]
      %v528 = vld [vmem:[%s512 + $0x3c] sm:$0xf]
      %v529 = vld [vmem:[%s512 + $0x40] sm:$0xf]
      %v530 = vld [vmem:[%s512 + $0x44] sm:$0xf]
      %v531 = vld [vmem:[%s512 + $0x48] sm:$0xf]
      %v532 = vld [vmem:[%s512 + $0x4c] sm:$0xf]
      %v533 = vld [vmem:[%s512 + $0x50] sm:$0xf]
      %v534 = vld [vmem:[%s512 + $0x54] sm:$0xf]
      %v535 = vld [vmem:[%s512 + $0x58] sm:$0xf]
      %v536 = vld [vmem:[%s512 + $0x5c] sm:$0xf]
      %v537 = vld [vmem:[%s512 + $0x60] sm:$0xf]
      %v538 = vld [vmem:[%s512 + $0x64] sm:$0xf]
      %v539 = vld [vmem:[%s512 + $0x68] sm:$0xf]
      %v540 = vld [vmem:[%s512 + $0x6c] sm:$0xf]
      %v541 = vld [vmem:[%s512 + $0x70] sm:$0xf]
      %v542 = vld [vmem:[%s512 + $0x74] sm:$0xf]
      %v543 = vld [vmem:[%s512 + $0x78] sm:$0xf]
      %v544 = vld [vmem:[%s512 + $0x7c] sm:$0xf]
      %v546 = vunpack.c.l.b16 %v511
      %v547 = vunpack.c.h.b16 %v511
      %v548 = vpack.c.b16 %v243, %v546
      %v549 = vpack.c.b16 %v244, %v547
      %v550 = vrot.slane %v548, 1
      %v551 = vrot.slane %v549, 1
      %v586 = vunpack.c.l.b16 %v513
      %v587 = vunpack.c.l.b16 %v514
      %v588 = vunpack.c.l.b16 %v515
      %v589 = vunpack.c.l.b16 %v516
      %v590 = vunpack.c.l.b16 %v517
      %v591 = vunpack.c.l.b16 %v518
      %v592 = vunpack.c.l.b16 %v519
      %v593 = vunpack.c.l.b16 %v520
      %v594 = vunpack.c.l.b16 %v521
      %v595 = vunpack.c.l.b16 %v522
      %v596 = vunpack.c.l.b16 %v523
      %v597 = vunpack.c.l.b16 %v524
      %v598 = vunpack.c.l.b16 %v525
      %v599 = vunpack.c.l.b16 %v526
      %v600 = vunpack.c.l.b16 %v527
      %v601 = vunpack.c.l.b16 %v528
      %v602 = vunpack.c.l.b16 %v529
      %v603 = vunpack.c.l.b16 %v530
      %v604 = vunpack.c.l.b16 %v531
      %v605 = vunpack.c.l.b16 %v532
      %v606 = vunpack.c.l.b16 %v533
      %v607 = vunpack.c.l.b16 %v534
      %v608 = vunpack.c.l.b16 %v535
      %v609 = vunpack.c.l.b16 %v536
      %v610 = vunpack.c.l.b16 %v537
      %v611 = vunpack.c.l.b16 %v538
      %v612 = vunpack.c.l.b16 %v539
      %v613 = vunpack.c.l.b16 %v540
      %v614 = vunpack.c.l.b16 %v541
      %v615 = vunpack.c.l.b16 %v542
      %v616 = vunpack.c.l.b16 %v543
      %v617 = vunpack.c.l.b16 %v544
      %v618 = vpack.c.b16 %v587, %v586
      %v619 = vpack.c.b16 %v589, %v588
      %v620 = vpack.c.b16 %v591, %v590
      %v621 = vpack.c.b16 %v593, %v592
      %v622 = vpack.c.b16 %v595, %v594
      %v623 = vpack.c.b16 %v597, %v596
      %v624 = vpack.c.b16 %v599, %v598
      %v625 = vpack.c.b16 %v601, %v600
      %v626 = vpack.c.b16 %v603, %v602
      %v627 = vpack.c.b16 %v605, %v604
      %v628 = vpack.c.b16 %v607, %v606
      %v629 = vpack.c.b16 %v609, %v608
      %v630 = vpack.c.b16 %v611, %v610
      %v631 = vpack.c.b16 %v613, %v612
      %v632 = vpack.c.b16 %v615, %v614
      %v633 = vpack.c.b16 %v617, %v616
      %650 = vmatpush.bf16.msra.mxu0 %v625
      %651 = vmatpush.bf16.msra.mxu0 %v624
      %652 = vmatpush.bf16.msra.mxu0 %v623
      %653 = vmatpush.bf16.msra.mxu0 %v622
      %654 = vmatpush.bf16.msra.mxu0 %v621
      %655 = vmatpush.bf16.msra.mxu0 %v620
      %656 = vmatpush.bf16.msra.mxu0 %v619
      %657 = vmatpush.bf16.msra.mxu0 %v618
      %658 = vmatmul.bf16.gmra.mxu0 %v550
      %v659 = vpop.f32.mrf.mxu0
      %v660 = vadd.f32 0.0, %v659
      %v661 = vpop.f32.mrf.mxu0
      %662 = vdwg.mxu0
      %663 = vmatpush.bf16.msra.mxu0 %v633
      %664 = vmatpush.bf16.msra.mxu0 %v632
      %665 = vmatpush.bf16.msra.mxu0 %v631
      %666 = vmatpush.bf16.msra.mxu0 %v630
      %667 = vmatpush.bf16.msra.mxu0 %v629
      %668 = vmatpush.bf16.msra.mxu0 %v628
      %669 = vmatpush.bf16.msra.mxu0 %v627
      %670 = vmatpush.bf16.msra.mxu0 %v626
      %671 = vmatmul.bf16.gmra.mxu0 %v551
      %v672 = vpop.f32.mrf.mxu0
      %v673 = vadd.f32 %v660, %v672
      %v674 = vpop.f32.mrf.mxu0
      %675 = vdwg.mxu0
      %v676 = vadd.f32 %v508, %v673
      %v677 = vld [vmem:[%s2] sm:$0x1]
      %v679 = vperm.slane %v677, 0
      %v681 = vadd.f32 %v676, %v679
      %v682 = vmax.f32 %v681, 0.0
      %683 = vst [vmem:[%s170] sm:$0xf] 0
      %684 = vst [vmem:[%s170 + $0x4] sm:$0x1] 0
      %v685 = vpack.c.bf16 %v682, %v682
      %v687 = vshrl.u32 %v685, 16
      %v689 = vrot.slane %v687, 7
      %v690 = vshll.u32 %v685, 16
      %v692 = vor.u32 %v689, %v690
      %v693 = vrot.slane %v689, 4
      %vm696 = vcmask 1043456
      %vm697 = vsmask.f32 7938
      %vm698 = vmand %vm696, %vm697
      %v699 = vld [vmem:[%s170] sm:$0xf]
      %v700 = vsel %vm698, %v692, %v699
      %701 = vst [vmem:[%s170] sm:$0xf] %v700
      %vm702 = vcmask 1040384
      %vm703 = vsmask.f32 256
      %vm704 = vmand %vm702, %vm703
      %v705 = vld [vmem:[%s170 + $0x4] sm:$0x1]
      %v706 = vsel %vm704, %v693, %v705
      %707 = vst [vmem:[%s170 + $0x4] sm:$0x1] %v706
      %p708 = scmp.lt.s32.totalorder %s14, 1
      %s709 = scalar_select %p708, %s14, 1
      %s710 = smul.addr %s709, 2
      %s711 = smul.addr %s710, 4
      %s712 = scalar_lea.vmem %s3, %s711
      // Predicated region
      $region33: #{simplified_gap_cnn_forward.7} parent=31 // pred_check
        %p713 = pneg %p100
      $region34: #{simplified_gap_cnn_forward.7} parent=31 // pred_check_branch
        %715 = sbr.rel (%p713) target = $region36
      $region35: #{simplified_gap_cnn_forward.7} parent=31 // pred_region
        _
      $region36: #{simplified_gap_cnn_forward.7} parent=31 // pred_fallthru
        _
    $region32: #{simplified_gap_cnn_forward.7} parent=5 // pred_fallthru
      _
    %p716 = scmp.le.s32.totalorder 2, %s9
    // Predicated region
    $region37: #{simplified_gap_cnn_forward.7} parent=5 // pred_check
      %p717 = pneg %p716
    $region38: #{simplified_gap_cnn_forward.7} parent=5 // pred_check_branch
      %719 = sbr.rel (%p717) target = $region40
    $region39: #{simplified_gap_cnn_forward.7} parent=5 // pred_region
      %s720 = ssub.s32 %s9, 2
      // Predicated region
      $region41: #{simplified_gap_cnn_forward.7} parent=39 // pred_check
        %p721 = pneg %p106
      $region42: #{simplified_gap_cnn_forward.7} parent=39 // pred_check_branch
        %723 = sbr.rel (%p721) target = $region44
      $region43: #{simplified_gap_cnn_forward.7} parent=39 // pred_region
        %p724 = scmp.lt.s32.totalorder %s15, 1
        %s725 = scalar_select %p724, %s15, 1
        %s726 = smul.addr %s725, 2
        %s727 = smul.addr %s726, 4
        %s728 = scalar_lea.vmem %s3, %s727
      $region44: #{simplified_gap_cnn_forward.7} parent=39 // pred_fallthru
        _
    $region40: #{simplified_gap_cnn_forward.7} parent=5 // pred_fallthru
      _
  $region6: #{simplified_gap_cnn_forward.7} parent=0 // loop_footer
    %s13 = sadd.s32 1, %s9
  $region7: #{simplified_gap_cnn_forward.7} parent=0 // loop_footer_branch
    %8 = sbr.rel target = $region3
  $region8: #{simplified_gap_cnn_forward.7} parent=0 // loop_exit
    _

// kernel: simplified_gap_cnn_forward.5
$region0: #{simplified_gap_cnn_forward.5}
  #allocation0 [shape = 'u32[]', space=smem, size = 0x4, offset = 0x4, fixed_abs, tag = 'smem constant byte address 0x4 - core index']
  #allocation1 [shape = 'u32[72,128]{1,0:T(1,128)}', space=vmem, size = 0x9000, scoped, tag = 'internal scratch']
  %s0 = inlined_call_operand.vmem [shape: f32[2,37,2], index: 0, kind: input, shape index: {}]
  %s1 = inlined_call_operand.vmem [shape: f32[6,2,128], index: 1, kind: input, shape index: {}]
  %s2 = inlined_call_operand.vmem [shape: f32[1,128], index: 2, kind: input, shape index: {}]
  %s3 = inlined_call_operand.vmem [shape: bf16[2,38,128], index: 3, kind: output, shape index: {}]
  %s4 = sld [smem:[#allocation0]]
  $region45: #{simplified_gap_cnn_forward.5} parent=0
    _
  %s6 = ssub.s32 1, %s4
  %s7 = scalar_select 0, %s6, %s4
  loop: start=0, step=1, limit=4
  $region2: #{simplified_gap_cnn_forward.5} parent=0 // loop_pre_header
    _
  $region3: #{simplified_gap_cnn_forward.5} parent=0 // loop_header
    %s9 = sphi 0, %s13
    %p10 = scmp.ge.s32.totalorder %s9, 4
    %s19 = sphi 0, %s21
    %s22 = sphi 0, %s19
    %s23 = sphi 0, %s22
    %s39 = sphi 0, %s23
    %s43 = sphi 0, %s43
    %s45 = sphi 0, %s43
    %s46 = sphi 0, %s45
    %s60 = sphi 0, %s46
    %s64 = sphi 0, %s64
    %s66 = sphi 0, %s64
    %s67 = sphi 0, %s66
    %s81 = sphi 0, %s67
    %s87 = sphi 0, %s89
    %s90 = sphi 0, %s87
    %s91 = sphi 0, %s90
    %s107 = sphi 0, %s91
  $region4: #{simplified_gap_cnn_forward.5} parent=0 // loop_header_branch
    %12 = sbr.rel (%p10) target = $region8
  $region5: #{simplified_gap_cnn_forward.5} parent=0 // loop_body
    %s14 = ssub.s32 %s9, 1
    %s15 = ssub.s32 %s9, 2
    %s16 = sadd.s32 %s9, 1
    %s17 = ssub.s32 %s9, %s16
    %p18 = scmp.eq.s32.totalorder %s17, 0
    %s20 = sadd.s32 %s19, 1
    %s21 = scalar_select %p18, %s19, %s20
    %p24 = pneg %p18
    %p25 = scmp.eq.s32.totalorder %s9, 1
    %p26 = por %p24, %p25
    %p27 = scmp.ne.s32.totalorder %s19, %s22
    %p28 = scmp.eq.s32.totalorder %s9, 0
    %p29 = por %p27, %p28
    %p30 = scmp.ne.s32.totalorder %s19, %s22
    %p31 = scmp.eq.s32.totalorder %s14, 1
    %p32 = por %p30, %p31
    %p33 = scmp.ne.s32.totalorder %s22, %s23
    %p34 = scmp.eq.s32.totalorder %s14, 0
    %p35 = por %p33, %p34
    %p36 = scmp.ne.s32.totalorder %s22, %s23
    %p37 = scmp.eq.s32.totalorder %s15, 1
    %p38 = por %p36, %p37
    %p40 = scmp.ne.s32.totalorder %s23, %s39
    %p41 = scmp.eq.s32.totalorder %s15, 0
    %p42 = por %p40, %p41
    %s44 = sadd.s32 %s43, 1
    %p47 = scmp.eq.s32.totalorder %s9, 1
    %p48 = scmp.ne.s32.totalorder %s43, %s45
    %p49 = scmp.eq.s32.totalorder %s9, 0
    %p50 = por %p48, %p49
    %p51 = scmp.ne.s32.totalorder %s43, %s45
    %p52 = scmp.eq.s32.totalorder %s14, 1
    %p53 = por %p51, %p52
    %p54 = scmp.ne.s32.totalorder %s45, %s46
    %p55 = scmp.eq.s32.totalorder %s14, 0
    %p56 = por %p54, %p55
    %p57 = scmp.ne.s32.totalorder %s45, %s46
    %p58 = scmp.eq.s32.totalorder %s15, 1
    %p59 = por %p57, %p58
    %p61 = scmp.ne.s32.totalorder %s46, %s60
    %p62 = scmp.eq.s32.totalorder %s15, 0
    %p63 = por %p61, %p62
    %s65 = sadd.s32 %s64, 1
    %p68 = scmp.eq.s32.totalorder %s9, 1
    %p69 = scmp.ne.s32.totalorder %s64, %s66
    %p70 = scmp.eq.s32.totalorder %s9, 0
    %p71 = por %p69, %p70
    %p72 = scmp.ne.s32.totalorder %s64, %s66
    %p73 = scmp.eq.s32.totalorder %s14, 1
    %p74 = por %p72, %p73
    %p75 = scmp.ne.s32.totalorder %s66, %s67
    %p76 = scmp.eq.s32.totalorder %s14, 0
    %p77 = por %p75, %p76
    %p78 = scmp.ne.s32.totalorder %s66, %s67
    %p79 = scmp.eq.s32.totalorder %s15, 1
    %p80 = por %p78, %p79
    %p82 = scmp.ne.s32.totalorder %s67, %s81
    %p83 = scmp.eq.s32.totalorder %s15, 0
    %p84 = por %p82, %p83
    %s85 = ssub.s32 %s9, %s16
    %p86 = scmp.eq.s32.totalorder %s85, 0
    %s88 = sadd.s32 %s87, 1
    %s89 = scalar_select %p86, %s87, %s88
    %p92 = pneg %p86
    %p93 = scmp.eq.s32.totalorder %s9, 1
    %p94 = por %p92, %p93
    %p95 = scmp.ne.s32.totalorder %s87, %s90
    %p96 = scmp.eq.s32.totalorder %s9, 0
    %p97 = por %p95, %p96
    %p98 = scmp.ne.s32.totalorder %s87, %s90
    %p99 = scmp.eq.s32.totalorder %s14, 1
    %p100 = por %p98, %p99
    %p101 = scmp.ne.s32.totalorder %s90, %s91
    %p102 = scmp.eq.s32.totalorder %s14, 0
    %p103 = por %p101, %p102
    %p104 = scmp.ne.s32.totalorder %s90, %s91
    %p105 = scmp.eq.s32.totalorder %s15, 1
    %p106 = por %p104, %p105
    %p108 = scmp.ne.s32.totalorder %s91, %s107
    %p109 = scmp.eq.s32.totalorder %s15, 0
    %p110 = por %p108, %p109
    %p111 = scmp.le.s32.totalorder 1, %s9
    %p112 = scmp.lt.s32.totalorder %s9, 3
    %p113 = pnand %p111, %p112
    %p114 = pneg %p113
    // Predicated region
    $region9: #{simplified_gap_cnn_forward.5} parent=5 // pred_check
      _
    $region10: #{simplified_gap_cnn_forward.5} parent=5 // pred_check_branch
      %116 = sbr.rel (%p113) target = $region12
    $region11: #{simplified_gap_cnn_forward.5} parent=5 // pred_region
      %s117 = ssub.s32 %s9, 1
      // Predicated region
      $region13: #{simplified_gap_cnn_forward.5} parent=11 // pred_check
        %p118 = pneg %p56
      $region14: #{simplified_gap_cnn_forward.5} parent=11 // pred_check_branch
        %120 = sbr.rel (%p118) target = $region16
      $region15: #{simplified_gap_cnn_forward.5} parent=11 // pred_region
        _
      $region16: #{simplified_gap_cnn_forward.5} parent=11 // pred_fallthru
        _
      // Predicated region
      $region17: #{simplified_gap_cnn_forward.5} parent=11 // pred_check
        %p121 = pneg %p77
      $region18: #{simplified_gap_cnn_forward.5} parent=11 // pred_check_branch
        %123 = sbr.rel (%p121) target = $region20
      $region19: #{simplified_gap_cnn_forward.5} parent=11 // pred_region
        _
      $region20: #{simplified_gap_cnn_forward.5} parent=11 // pred_fallthru
        _
    $region12: #{simplified_gap_cnn_forward.5} parent=5 // pred_fallthru
      _
    %p124 = scmp.lt.s32.totalorder %s9, 2
    // Predicated region
    $region21: #{simplified_gap_cnn_forward.5} parent=5 // pred_check
      %p125 = pneg %p124
    $region22: #{simplified_gap_cnn_forward.5} parent=5 // pred_check_branch
      %127 = sbr.rel (%p125) target = $region24
    $region23: #{simplified_gap_cnn_forward.5} parent=5 // pred_region
      // Predicated region
      $region25: #{simplified_gap_cnn_forward.5} parent=23 // pred_check
        %p128 = pneg %p29
      $region26: #{simplified_gap_cnn_forward.5} parent=23 // pred_check_branch
        %130 = sbr.rel (%p128) target = $region28
      $region27: #{simplified_gap_cnn_forward.5} parent=23 // pred_region
        %p131 = scmp.lt.s32.totalorder %s9, 1
        %s132 = scalar_select %p131, %s9, 1
        %s133 = smul.addr %s132, 5
        %s134 = smul.addr %s133, 8
        %s135 = scalar_lea.vmem %s0, %s134
      $region28: #{simplified_gap_cnn_forward.5} parent=23 // pred_fallthru
        _
    $region24: #{simplified_gap_cnn_forward.5} parent=5 // pred_fallthru
      _
    %p136 = scmp.le.s32.totalorder 1, %s9
    %p137 = scmp.lt.s32.totalorder %s9, 3
    %p138 = pnand %p136, %p137
    %p139 = pneg %p138
    // Predicated region
    $region29: #{simplified_gap_cnn_forward.5} parent=5 // pred_check
      _
    $region30: #{simplified_gap_cnn_forward.5} parent=5 // pred_check_branch
      %141 = sbr.rel (%p138) target = $region32
    $region31: #{simplified_gap_cnn_forward.5} parent=5 // pred_region
      %s142 = ssub.s32 %s9, 1
      %p143 = scmp.lt.s32.totalorder %s14, 1
      %s144 = scalar_select %p143, %s14, 1
      %s145 = smul.addr %s144, 5
      %s146 = smul.addr %s145, 8
      %s147 = scalar_lea.vmem %s0, %s146
      %p148 = pneg %p35
      %p149 = pneg %p32
      %p150 = pneg %p56
      %p151 = pneg %p53
      %p152 = pneg %p77
      %p153 = pneg %p74
      %p154 = pneg %p103
      %p155 = pneg %p100
      %p156 = scmp.lt.s32.totalorder %s14, 1
      %s157 = scalar_select %p156, %s14, 1
      %s158 = smul.addr %s157, 5
      %s159 = smul.addr %s158, 4
      %s160 = scalar_lea.vmem %s3, %s159
      %p161 = scmp.lt.s32.totalorder %s14, 1
      %s162 = scalar_select %p161, %s14, 1
      %s163 = smul.addr %s162, 5
      %s164 = smul.addr %s163, 8
      %s165 = scalar_lea.vmem %s0, %s164
      %p166 = scmp.lt.s32.totalorder %s14, 1
      %s167 = scalar_select %p166, %s14, 1
      %s168 = smul.addr %s167, 5
      %s169 = smul.addr %s168, 4
      %s170 = scalar_lea.vmem %s3, %s169
      %v172 = vld [vmem:[%s165] sm:$0xff]
      %v173 = vld [vmem:[%s165 + $0x8] sm:$0xff]
      %v174 = vld [vmem:[%s165 + $0x10] sm:$0xff]
      %v175 = vld [vmem:[%s165 + $0x18] sm:$0xff]
      %v176 = vld [vmem:[%s1] sm:$0x3]
      %v177 = vld [vmem:[%s165 + $0x1] sm:$0xff]
      %v178 = vld [vmem:[%s165 + $0x9] sm:$0xff]
      %v179 = vld [vmem:[%s165 + $0x11] sm:$0xff]
      %v180 = vld [vmem:[%s165 + $0x19] sm:$0xff]
      %s181 = scalar_lea.vmem %s1, 2
      %v182 = vld [vmem:[%s181] sm:$0x3]
      %vm183 = vcmask 15360
      %v185 = vsel %vm183, %v177, 0
      %v188 = vsel %vm183, %v178, 0
      %v191 = vsel %vm183, %v179, 0
      %v194 = vsel %vm183, %v180, 0
      %vm196 = vcmask 1041408
      %v198 = vsel %vm196, %v182, 0
      %200 = vmatpush.msra.mxu0 0.0
      %201 = vmatpush.msra.mxu0 0.0
      %202 = vmatpush.msra.mxu0 0.0
      %203 = vmatpush.msra.mxu0 0.0
      %204 = vmatpush.msra.mxu0 0.0
      %205 = vmatpush.msra.mxu0 0.0
      %206 = vmatpush.msra.mxu0 0.0
      %207 = vmatpush.msra.mxu0 0.0
      %208 = vmatpush.msra.mxu0 0.0
      %209 = vmatpush.msra.mxu0 0.0
      %210 = vmatpush.msra.mxu0 0.0
      %211 = vmatpush.msra.mxu0 0.0
      %212 = vmatpush.msra.mxu0 0.0
      %213 = vmatpush.msra.mxu0 0.0
      %214 = vmatpush.msra.mxu0 0.0
      %215 = vmatpush.msra.mxu0 %v198
      %216 = vmatmul.f32.gmra.mxu0 %v185
      %v217 = vpop.f32.mrf.mxu0
      %v218 = vadd.f32 0.0, %v217
      %219 = vmatmul.f32.gmra.mxu0 %v188
      %v220 = vpop.f32.mrf.mxu0
      %v221 = vadd.f32 0.0, %v220
      %222 = vmatmul.f32.gmra.mxu0 %v191
      %v223 = vpop.f32.mrf.mxu0
      %v224 = vadd.f32 0.0, %v223
      %225 = vmatmul.f32.gmra.mxu0 %v194
      %v226 = vpop.f32.mrf.mxu0
      %v227 = vadd.f32 0.0, %v226
      %228 = vdwg.mxu0
      %v230 = vsel %vm183, %v172, 0
      %v233 = vsel %vm183, %v173, 0
      %v236 = vsel %vm183, %v174, 0
      %v239 = vsel %vm183, %v175, 0
      %v242 = vsel %vm196, %v176, 0
      %244 = vmatpush.msra.mxu0 0.0
      %245 = vmatpush.msra.mxu0 0.0
      %246 = vmatpush.msra.mxu0 0.0
      %247 = vmatpush.msra.mxu0 0.0
      %248 = vmatpush.msra.mxu0 0.0
      %249 = vmatpush.msra.mxu0 0.0
      %250 = vmatpush.msra.mxu0 0.0
      %251 = vmatpush.msra.mxu0 0.0
      %252 = vmatpush.msra.mxu0 0.0
      %253 = vmatpush.msra.mxu0 0.0
      %254 = vmatpush.msra.mxu0 0.0
      %255 = vmatpush.msra.mxu0 0.0
      %256 = vmatpush.msra.mxu0 0.0
      %257 = vmatpush.msra.mxu0 0.0
      %258 = vmatpush.msra.mxu0 0.0
      %259 = vmatpush.msra.mxu0 %v242
      %260 = vmatmul.f32.gmra.mxu0 %v230
      %v261 = vpop.f32.mrf.mxu0
      %v262 = vadd.f32 %v218, %v261
      %263 = vmatmul.f32.gmra.mxu0 %v233
      %v264 = vpop.f32.mrf.mxu0
      %v265 = vadd.f32 %v221, %v264
      %266 = vmatmul.f32.gmra.mxu0 %v236
      %v267 = vpop.f32.mrf.mxu0
      %v268 = vadd.f32 %v224, %v267
      %269 = vmatmul.f32.gmra.mxu0 %v239
      %v270 = vpop.f32.mrf.mxu0
      %v271 = vadd.f32 %v227, %v270
      %272 = vdwg.mxu0
      %v273 = vld [vmem:[%s165 + $0x2] sm:$0xff]
      %v274 = vld [vmem:[%s165 + $0xa] sm:$0xff]
      %v275 = vld [vmem:[%s165 + $0x12] sm:$0xff]
      %v276 = vld [vmem:[%s165 + $0x1a] sm:$0xff]
      %s277 = scalar_lea.vmem %s1, 4
      %v278 = vld [vmem:[%s277] sm:$0x3]
      %v280 = vsel %vm183, %v273, 0
      %v283 = vsel %vm183, %v274, 0
      %v286 = vsel %vm183, %v275, 0
      %v289 = vsel %vm183, %v276, 0
      %v292 = vsel %vm196, %v278, 0
      %294 = vmatpush.msra.mxu0 0.0
      %295 = vmatpush.msra.mxu0 0.0
      %296 = vmatpush.msra.mxu0 0.0
      %297 = vmatpush.msra.mxu0 0.0
      %298 = vmatpush.msra.mxu0 0.0
      %299 = vmatpush.msra.mxu0 0.0
      %300 = vmatpush.msra.mxu0 0.0
      %301 = vmatpush.msra.mxu0 0.0
      %302 = vmatpush.msra.mxu0 0.0
      %303 = vmatpush.msra.mxu0 0.0
      %304 = vmatpush.msra.mxu0 0.0
      %305 = vmatpush.msra.mxu0 0.0
      %306 = vmatpush.msra.mxu0 0.0
      %307 = vmatpush.msra.mxu0 0.0
      %308 = vmatpush.msra.mxu0 0.0
      %309 = vmatpush.msra.mxu0 %v292
      %310 = vmatmul.f32.gmra.mxu0 %v280
      %v311 = vpop.f32.mrf.mxu0
      %v312 = vadd.f32 0.0, %v311
      %313 = vmatmul.f32.gmra.mxu0 %v283
      %v314 = vpop.f32.mrf.mxu0
      %v315 = vadd.f32 0.0, %v314
      %316 = vmatmul.f32.gmra.mxu0 %v286
      %v317 = vpop.f32.mrf.mxu0
      %v318 = vadd.f32 0.0, %v317
      %319 = vmatmul.f32.gmra.mxu0 %v289
      %v320 = vpop.f32.mrf.mxu0
      %v321 = vadd.f32 0.0, %v320
      %322 = vdwg.mxu0
      %v323 = vadd.f32 %v262, %v312
      %v324 = vadd.f32 %v265, %v315
      %v325 = vadd.f32 %v268, %v318
      %v326 = vadd.f32 %v271, %v321
      %v327 = vld [vmem:[%s165 + $0x3] sm:$0xff]
      %v328 = vld [vmem:[%s165 + $0xb] sm:$0xff]
      %v329 = vld [vmem:[%s165 + $0x13] sm:$0xff]
      %v330 = vld [vmem:[%s165 + $0x1b] sm:$0xff]
      %s331 = scalar_lea.vmem %s1, 6
      %v332 = vld [vmem:[%s331] sm:$0x3]
      %v334 = vsel %vm183, %v327, 0
      %v337 = vsel %vm183, %v328, 0
      %v340 = vsel %vm183, %v329, 0
      %v343 = vsel %vm183, %v330, 0
      %v346 = vsel %vm196, %v332, 0
      %348 = vmatpush.msra.mxu0 0.0
      %349 = vmatpush.msra.mxu0 0.0
      %350 = vmatpush.msra.mxu0 0.0
      %351 = vmatpush.msra.mxu0 0.0
      %352 = vmatpush.msra.mxu0 0.0
      %353 = vmatpush.msra.mxu0 0.0
      %354 = vmatpush.msra.mxu0 0.0
      %355 = vmatpush.msra.mxu0 0.0
      %356 = vmatpush.msra.mxu0 0.0
      %357 = vmatpush.msra.mxu0 0.0
      %358 = vmatpush.msra.mxu0 0.0
      %359 = vmatpush.msra.mxu0 0.0
      %360 = vmatpush.msra.mxu0 0.0
      %361 = vmatpush.msra.mxu0 0.0
      %362 = vmatpush.msra.mxu0 0.0
      %363 = vmatpush.msra.mxu0 %v346
      %364 = vmatmul.f32.gmra.mxu0 %v334
      %v365 = vpop.f32.mrf.mxu0
      %v366 = vadd.f32 0.0, %v365
      %367 = vmatmul.f32.gmra.mxu0 %v337
      %v368 = vpop.f32.mrf.mxu0
      %v369 = vadd.f32 0.0, %v368
      %370 = vmatmul.f32.gmra.mxu0 %v340
      %v371 = vpop.f32.mrf.mxu0
      %v372 = vadd.f32 0.0, %v371
      %373 = vmatmul.f32.gmra.mxu0 %v343
      %v374 = vpop.f32.mrf.mxu0
      %v375 = vadd.f32 0.0, %v374
      %376 = vdwg.mxu0
      %v377 = vadd.f32 %v323, %v366
      %v378 = vadd.f32 %v324, %v369
      %v379 = vadd.f32 %v325, %v372
      %v380 = vadd.f32 %v326, %v375
      %v381 = vld [vmem:[%s165 + $0x4] sm:$0xff]
      %v382 = vld [vmem:[%s165 + $0xc] sm:$0xff]
      %v383 = vld [vmem:[%s165 + $0x14] sm:$0xff]
      %v384 = vld [vmem:[%s165 + $0x1c] sm:$0xff]
      %s385 = scalar_lea.vmem %s1, 8
      %v386 = vld [vmem:[%s385] sm:$0x3]
      %v388 = vsel %vm183, %v381, 0
      %v391 = vsel %vm183, %v382, 0
      %v394 = vsel %vm183, %v383, 0
      %v397 = vsel %vm183, %v384, 0
      %v400 = vsel %vm196, %v386, 0
      %402 = vmatpush.msra.mxu0 0.0
      %403 = vmatpush.msra.mxu0 0.0
      %404 = vmatpush.msra.mxu0 0.0
      %405 = vmatpush.msra.mxu0 0.0
      %406 = vmatpush.msra.mxu0 0.0
      %407 = vmatpush.msra.mxu0 0.0
      %408 = vmatpush.msra.mxu0 0.0
      %409 = vmatpush.msra.mxu0 0.0
      %410 = vmatpush.msra.mxu0 0.0
      %411 = vmatpush.msra.mxu0 0.0
      %412 = vmatpush.msra.mxu0 0.0
      %413 = vmatpush.msra.mxu0 0.0
      %414 = vmatpush.msra.mxu0 0.0
      %415 = vmatpush.msra.mxu0 0.0
      %416 = vmatpush.msra.mxu0 0.0
      %417 = vmatpush.msra.mxu0 %v400
      %418 = vmatmul.f32.gmra.mxu0 %v388
      %v419 = vpop.f32.mrf.mxu0
      %v420 = vadd.f32 0.0, %v419
      %421 = vmatmul.f32.gmra.mxu0 %v391
      %v422 = vpop.f32.mrf.mxu0
      %v423 = vadd.f32 0.0, %v422
      %424 = vmatmul.f32.gmra.mxu0 %v394
      %v425 = vpop.f32.mrf.mxu0
      %v426 = vadd.f32 0.0, %v425
      %427 = vmatmul.f32.gmra.mxu0 %v397
      %v428 = vpop.f32.mrf.mxu0
      %v429 = vadd.f32 0.0, %v428
      %430 = vdwg.mxu0
      %v431 = vadd.f32 %v377, %v420
      %v432 = vadd.f32 %v378, %v423
      %v433 = vadd.f32 %v379, %v426
      %v434 = vadd.f32 %v380, %v429
      %v435 = vld [vmem:[%s165 + $0x5] sm:$0xff]
      %v436 = vld [vmem:[%s165 + $0xd] sm:$0xff]
      %v437 = vld [vmem:[%s165 + $0x15] sm:$0xff]
      %v438 = vld [vmem:[%s165 + $0x1d] sm:$0xff]
      %s439 = scalar_lea.vmem %s1, 10
      %v440 = vld [vmem:[%s439] sm:$0x3]
      %v442 = vsel %vm183, %v435, 0
      %v445 = vsel %vm183, %v436, 0
      %v448 = vsel %vm183, %v437, 0
      %v451 = vsel %vm183, %v438, 0
      %v454 = vsel %vm196, %v440, 0
      %456 = vmatpush.msra.mxu0 0.0
      %457 = vmatpush.msra.mxu0 0.0
      %458 = vmatpush.msra.mxu0 0.0
      %459 = vmatpush.msra.mxu0 0.0
      %460 = vmatpush.msra.mxu0 0.0
      %461 = vmatpush.msra.mxu0 0.0
      %462 = vmatpush.msra.mxu0 0.0
      %463 = vmatpush.msra.mxu0 0.0
      %464 = vmatpush.msra.mxu0 0.0
      %465 = vmatpush.msra.mxu0 0.0
      %466 = vmatpush.msra.mxu0 0.0
      %467 = vmatpush.msra.mxu0 0.0
      %468 = vmatpush.msra.mxu0 0.0
      %469 = vmatpush.msra.mxu0 0.0
      %470 = vmatpush.msra.mxu0 0.0
      %471 = vmatpush.msra.mxu0 %v454
      %472 = vmatmul.f32.gmra.mxu0 %v442
      %v473 = vpop.f32.mrf.mxu0
      %v474 = vadd.f32 0.0, %v473
      %475 = vmatmul.f32.gmra.mxu0 %v445
      %v476 = vpop.f32.mrf.mxu0
      %v477 = vadd.f32 0.0, %v476
      %478 = vmatmul.f32.gmra.mxu0 %v448
      %v479 = vpop.f32.mrf.mxu0
      %v480 = vadd.f32 0.0, %v479
      %481 = vmatmul.f32.gmra.mxu0 %v451
      %v482 = vpop.f32.mrf.mxu0
      %v483 = vadd.f32 0.0, %v482
      %484 = vdwg.mxu0
      %v485 = vadd.f32 %v431, %v474
      %v486 = vadd.f32 %v432, %v477
      %v487 = vadd.f32 %v433, %v480
      %v488 = vadd.f32 %v434, %v483
      %v489 = vld [vmem:[%s2] sm:$0x1]
      %v491 = vperm.slane %v489, 0
      %v493 = vadd.f32 %v485, %v491
      %v494 = vadd.f32 %v486, %v491
      %v495 = vadd.f32 %v487, %v491
      %v496 = vadd.f32 %v488, %v491
      %v497 = vmax.f32 %v493, 0.0
      %v498 = vmax.f32 %v494, 0.0
      %v499 = vmax.f32 %v495, 0.0
      %v500 = vmax.f32 %v496, 0.0
      %501 = vst [vmem:[%s170] sm:$0xf] 0
      %502 = vst [vmem:[%s170 + $0x4] sm:$0xf] 0
      %503 = vst [vmem:[%s170 + $0x8] sm:$0xf] 0
      %504 = vst [vmem:[%s170 + $0xc] sm:$0xf] 0
      %505 = vst [vmem:[%s170 + $0x10] sm:$0x7] 0
      %v506 = vpack.c.bf16 %v497, %v497
      %v507 = vpack.c.bf16 %v498, %v498
      %v508 = vpack.c.bf16 %v499, %v499
      %v509 = vpack.c.bf16 %v500, %v500
      %vm510 = vsmask.f32 1280
      %vm511 = vsmask.f32 5392
      %vm512 = vmor %vm510, %vm511
      %v514 = vshrl.u32 %v506, 16
      %v516 = vrot.slane %v514, 6
      %v517 = vshll.u32 %v506, 16
      %v519 = vrot.slane %v517, 7
      %v520 = vor.u32 %v516, %v519
      %v521 = vrot.slane %v520, 4
      %v523 = vshrl.u32 %v507, 16
      %v525 = vrot.slane %v523, 6
      %v526 = vshll.u32 %v507, 16
      %v528 = vrot.slane %v526, 7
      %v529 = vor.u32 %v525, %v528
      %v530 = vsel %vm512, %v521, %v529
      %v531 = vrot.slane %v529, 4
      %v533 = vshrl.u32 %v508, 16
      %v535 = vrot.slane %v533, 6
      %v536 = vshll.u32 %v508, 16
      %v538 = vrot.slane %v536, 7
      %v539 = vor.u32 %v535, %v538
      %v540 = vsel %vm512, %v531, %v539
      %v541 = vrot.slane %v539, 4
      %v543 = vshrl.u32 %v509, 16
      %v545 = vrot.slane %v543, 6
      %v546 = vshll.u32 %v509, 16
      %v548 = vrot.slane %v546, 7
      %v549 = vor.u32 %v545, %v548
      %v550 = vsel %vm512, %v541, %v549
      %v551 = vrot.slane %v549, 4
      %vm557 = vcmask 1043457
      %vm558 = vsmask.f32 7942
      %vm559 = vmand %vm557, %vm558
      %v560 = vld [vmem:[%s170] sm:$0xe]
      %v561 = vsel %vm559, %v520, %v560
      %562 = vst [vmem:[%s170] sm:$0xe] %v561
      %563 = vst [vmem:[%s170 + $0x4] sm:$0xf] %v530
      %564 = vst [vmem:[%s170 + $0x8] sm:$0xf] %v540
      %565 = vst [vmem:[%s170 + $0xc] sm:$0xf] %v550
      %vm566 = vcmask 1041408
      %vm567 = vmand %vm566, %vm510
      %v568 = vld [vmem:[%s170 + $0x10] sm:$0x3]
      %v569 = vsel %vm567, %v551, %v568
      %570 = vst [vmem:[%s170 + $0x10] sm:$0x3] %v569
      %p571 = scmp.lt.s32.totalorder %s14, 1
      %s572 = scalar_select %p571, %s14, 1
      %s573 = smul.addr %s572, 5
      %s574 = smul.addr %s573, 4
      %s575 = scalar_lea.vmem %s3, %s574
      // Predicated region
      $region33: #{simplified_gap_cnn_forward.5} parent=31 // pred_check
        %p576 = pneg %p100
      $region34: #{simplified_gap_cnn_forward.5} parent=31 // pred_check_branch
        %578 = sbr.rel (%p576) target = $region36
      $region35: #{simplified_gap_cnn_forward.5} parent=31 // pred_region
        _
      $region36: #{simplified_gap_cnn_forward.5} parent=31 // pred_fallthru
        _
    $region32: #{simplified_gap_cnn_forward.5} parent=5 // pred_fallthru
      _
    %p579 = scmp.le.s32.totalorder 2, %s9
    // Predicated region
    $region37: #{simplified_gap_cnn_forward.5} parent=5 // pred_check
      %p580 = pneg %p579
    $region38: #{simplified_gap_cnn_forward.5} parent=5 // pred_check_branch
      %582 = sbr.rel (%p580) target = $region40
    $region39: #{simplified_gap_cnn_forward.5} parent=5 // pred_region
      %s583 = ssub.s32 %s9, 2
      // Predicated region
      $region41: #{simplified_gap_cnn_forward.5} parent=39 // pred_check
        %p584 = pneg %p106
      $region42: #{simplified_gap_cnn_forward.5} parent=39 // pred_check_branch
        %586 = sbr.rel (%p584) target = $region44
      $region43: #{simplified_gap_cnn_forward.5} parent=39 // pred_region
        %p587 = scmp.lt.s32.totalorder %s15, 1
        %s588 = scalar_select %p587, %s15, 1
        %s589 = smul.addr %s588, 5
        %s590 = smul.addr %s589, 4
        %s591 = scalar_lea.vmem %s3, %s590
      $region44: #{simplified_gap_cnn_forward.5} parent=39 // pred_fallthru
        _
    $region40: #{simplified_gap_cnn_forward.5} parent=5 // pred_fallthru
      _
  $region6: #{simplified_gap_cnn_forward.5} parent=0 // loop_footer
    %s13 = sadd.s32 1, %s9
  $region7: #{simplified_gap_cnn_forward.5} parent=0 // loop_footer_branch
    %8 = sbr.rel target = $region3
  $region8: #{simplified_gap_cnn_forward.5} parent=0 // loop_exit
    _

// kernel: simplified_gap_cnn_forward.6
$region0: #{simplified_gap_cnn_forward.6}
  #allocation0 [shape = 'u32[]', space=smem, size = 0x4, offset = 0x4, fixed_abs, tag = 'smem constant byte address 0x4 - core index']
  #allocation1 [shape = 'u32[72,128]{1,0:T(1,128)}', space=vmem, size = 0x9000, scoped, tag = 'internal scratch']
  %s0 = inlined_call_operand.vmem [shape: bf16[2,19,256], index: 0, kind: input, shape index: {}]
  %s1 = inlined_call_operand.vmem [shape: bf16[4,256,128], index: 1, kind: input, shape index: {}]
  %s2 = inlined_call_operand.vmem [shape: f32[1,128], index: 2, kind: input, shape index: {}]
  %s3 = inlined_call_operand.vmem [shape: bf16[2,20,128], index: 3, kind: output, shape index: {}]
  %s4 = sld [smem:[#allocation0]]
  $region45: #{simplified_gap_cnn_forward.6} parent=0
    _
  %s6 = ssub.s32 1, %s4
  %s7 = scalar_select 0, %s6, %s4
  loop: start=0, step=1, limit=4
  $region2: #{simplified_gap_cnn_forward.6} parent=0 // loop_pre_header
    _
  $region3: #{simplified_gap_cnn_forward.6} parent=0 // loop_header
    %s9 = sphi 0, %s13
    %p10 = scmp.ge.s32.totalorder %s9, 4
    %s19 = sphi 0, %s21
    %s22 = sphi 0, %s19
    %s23 = sphi 0, %s22
    %s39 = sphi 0, %s23
    %s43 = sphi 0, %s43
    %s45 = sphi 0, %s43
    %s46 = sphi 0, %s45
    %s60 = sphi 0, %s46
    %s64 = sphi 0, %s64
    %s66 = sphi 0, %s64
    %s67 = sphi 0, %s66
    %s81 = sphi 0, %s67
    %s87 = sphi 0, %s89
    %s90 = sphi 0, %s87
    %s91 = sphi 0, %s90
    %s107 = sphi 0, %s91
  $region4: #{simplified_gap_cnn_forward.6} parent=0 // loop_header_branch
    %12 = sbr.rel (%p10) target = $region8
  $region5: #{simplified_gap_cnn_forward.6} parent=0 // loop_body
    %s14 = ssub.s32 %s9, 1
    %s15 = ssub.s32 %s9, 2
    %s16 = sadd.s32 %s9, 1
    %s17 = ssub.s32 %s9, %s16
    %p18 = scmp.eq.s32.totalorder %s17, 0
    %s20 = sadd.s32 %s19, 1
    %s21 = scalar_select %p18, %s19, %s20
    %p24 = pneg %p18
    %p25 = scmp.eq.s32.totalorder %s9, 1
    %p26 = por %p24, %p25
    %p27 = scmp.ne.s32.totalorder %s19, %s22
    %p28 = scmp.eq.s32.totalorder %s9, 0
    %p29 = por %p27, %p28
    %p30 = scmp.ne.s32.totalorder %s19, %s22
    %p31 = scmp.eq.s32.totalorder %s14, 1
    %p32 = por %p30, %p31
    %p33 = scmp.ne.s32.totalorder %s22, %s23
    %p34 = scmp.eq.s32.totalorder %s14, 0
    %p35 = por %p33, %p34
    %p36 = scmp.ne.s32.totalorder %s22, %s23
    %p37 = scmp.eq.s32.totalorder %s15, 1
    %p38 = por %p36, %p37
    %p40 = scmp.ne.s32.totalorder %s23, %s39
    %p41 = scmp.eq.s32.totalorder %s15, 0
    %p42 = por %p40, %p41
    %s44 = sadd.s32 %s43, 1
    %p47 = scmp.eq.s32.totalorder %s9, 1
    %p48 = scmp.ne.s32.totalorder %s43, %s45
    %p49 = scmp.eq.s32.totalorder %s9, 0
    %p50 = por %p48, %p49
    %p51 = scmp.ne.s32.totalorder %s43, %s45
    %p52 = scmp.eq.s32.totalorder %s14, 1
    %p53 = por %p51, %p52
    %p54 = scmp.ne.s32.totalorder %s45, %s46
    %p55 = scmp.eq.s32.totalorder %s14, 0
    %p56 = por %p54, %p55
    %p57 = scmp.ne.s32.totalorder %s45, %s46
    %p58 = scmp.eq.s32.totalorder %s15, 1
    %p59 = por %p57, %p58
    %p61 = scmp.ne.s32.totalorder %s46, %s60
    %p62 = scmp.eq.s32.totalorder %s15, 0
    %p63 = por %p61, %p62
    %s65 = sadd.s32 %s64, 1
    %p68 = scmp.eq.s32.totalorder %s9, 1
    %p69 = scmp.ne.s32.totalorder %s64, %s66
    %p70 = scmp.eq.s32.totalorder %s9, 0
    %p71 = por %p69, %p70
    %p72 = scmp.ne.s32.totalorder %s64, %s66
    %p73 = scmp.eq.s32.totalorder %s14, 1
    %p74 = por %p72, %p73
    %p75 = scmp.ne.s32.totalorder %s66, %s67
    %p76 = scmp.eq.s32.totalorder %s14, 0
    %p77 = por %p75, %p76
    %p78 = scmp.ne.s32.totalorder %s66, %s67
    %p79 = scmp.eq.s32.totalorder %s15, 1
    %p80 = por %p78, %p79
    %p82 = scmp.ne.s32.totalorder %s67, %s81
    %p83 = scmp.eq.s32.totalorder %s15, 0
    %p84 = por %p82, %p83
    %s85 = ssub.s32 %s9, %s16
    %p86 = scmp.eq.s32.totalorder %s85, 0
    %s88 = sadd.s32 %s87, 1
    %s89 = scalar_select %p86, %s87, %s88
    %p92 = pneg %p86
    %p93 = scmp.eq.s32.totalorder %s9, 1
    %p94 = por %p92, %p93
    %p95 = scmp.ne.s32.totalorder %s87, %s90
    %p96 = scmp.eq.s32.totalorder %s9, 0
    %p97 = por %p95, %p96
    %p98 = scmp.ne.s32.totalorder %s87, %s90
    %p99 = scmp.eq.s32.totalorder %s14, 1
    %p100 = por %p98, %p99
    %p101 = scmp.ne.s32.totalorder %s90, %s91
    %p102 = scmp.eq.s32.totalorder %s14, 0
    %p103 = por %p101, %p102
    %p104 = scmp.ne.s32.totalorder %s90, %s91
    %p105 = scmp.eq.s32.totalorder %s15, 1
    %p106 = por %p104, %p105
    %p108 = scmp.ne.s32.totalorder %s91, %s107
    %p109 = scmp.eq.s32.totalorder %s15, 0
    %p110 = por %p108, %p109
    %p111 = scmp.le.s32.totalorder 1, %s9
    %p112 = scmp.lt.s32.totalorder %s9, 3
    %p113 = pnand %p111, %p112
    %p114 = pneg %p113
    // Predicated region
    $region9: #{simplified_gap_cnn_forward.6} parent=5 // pred_check
      _
    $region10: #{simplified_gap_cnn_forward.6} parent=5 // pred_check_branch
      %116 = sbr.rel (%p113) target = $region12
    $region11: #{simplified_gap_cnn_forward.6} parent=5 // pred_region
      %s117 = ssub.s32 %s9, 1
      // Predicated region
      $region13: #{simplified_gap_cnn_forward.6} parent=11 // pred_check
        %p118 = pneg %p56
      $region14: #{simplified_gap_cnn_forward.6} parent=11 // pred_check_branch
        %120 = sbr.rel (%p118) target = $region16
      $region15: #{simplified_gap_cnn_forward.6} parent=11 // pred_region
        _
      $region16: #{simplified_gap_cnn_forward.6} parent=11 // pred_fallthru
        _
      // Predicated region
      $region17: #{simplified_gap_cnn_forward.6} parent=11 // pred_check
        %p121 = pneg %p77
      $region18: #{simplified_gap_cnn_forward.6} parent=11 // pred_check_branch
        %123 = sbr.rel (%p121) target = $region20
      $region19: #{simplified_gap_cnn_forward.6} parent=11 // pred_region
        _
      $region20: #{simplified_gap_cnn_forward.6} parent=11 // pred_fallthru
        _
    $region12: #{simplified_gap_cnn_forward.6} parent=5 // pred_fallthru
      _
    %p124 = scmp.lt.s32.totalorder %s9, 2
    // Predicated region
    $region21: #{simplified_gap_cnn_forward.6} parent=5 // pred_check
      %p125 = pneg %p124
    $region22: #{simplified_gap_cnn_forward.6} parent=5 // pred_check_branch
      %127 = sbr.rel (%p125) target = $region24
    $region23: #{simplified_gap_cnn_forward.6} parent=5 // pred_region
      // Predicated region
      $region25: #{simplified_gap_cnn_forward.6} parent=23 // pred_check
        %p128 = pneg %p29
      $region26: #{simplified_gap_cnn_forward.6} parent=23 // pred_check_branch
        %130 = sbr.rel (%p128) target = $region28
      $region27: #{simplified_gap_cnn_forward.6} parent=23 // pred_region
        %p131 = scmp.lt.s32.totalorder %s9, 1
        %s132 = scalar_select %p131, %s9, 1
        %s133 = smul.addr %s132, 6
        %s134 = smul.addr %s133, 4
        %s135 = scalar_lea.vmem %s0, %s134
      $region28: #{simplified_gap_cnn_forward.6} parent=23 // pred_fallthru
        _
    $region24: #{simplified_gap_cnn_forward.6} parent=5 // pred_fallthru
      _
    %p136 = scmp.le.s32.totalorder 1, %s9
    %p137 = scmp.lt.s32.totalorder %s9, 3
    %p138 = pnand %p136, %p137
    %p139 = pneg %p138
    // Predicated region
    $region29: #{simplified_gap_cnn_forward.6} parent=5 // pred_check
      _
    $region30: #{simplified_gap_cnn_forward.6} parent=5 // pred_check_branch
      %141 = sbr.rel (%p138) target = $region32
    $region31: #{simplified_gap_cnn_forward.6} parent=5 // pred_region
      %s142 = ssub.s32 %s9, 1
      %p143 = scmp.lt.s32.totalorder %s14, 1
      %s144 = scalar_select %p143, %s14, 1
      %s145 = smul.addr %s144, 6
      %s146 = smul.addr %s145, 4
      %s147 = scalar_lea.vmem %s0, %s146
      %p148 = pneg %p35
      %p149 = pneg %p32
      %p150 = pneg %p56
      %p151 = pneg %p53
      %p152 = pneg %p77
      %p153 = pneg %p74
      %p154 = pneg %p103
      %p155 = pneg %p100
      %p156 = scmp.lt.s32.totalorder %s14, 1
      %s157 = scalar_select %p156, %s14, 1
      %s158 = smul.addr %s157, 3
      %s159 = smul.addr %s158, 4
      %s160 = scalar_lea.vmem %s3, %s159
      %p161 = scmp.lt.s32.totalorder %s14, 1
      %s162 = scalar_select %p161, %s14, 1
      %s163 = smul.addr %s162, 6
      %s164 = smul.addr %s163, 4
      %s165 = scalar_lea.vmem %s0, %s164
      %p166 = scmp.lt.s32.totalorder %s14, 1
      %s167 = scalar_select %p166, %s14, 1
      %s168 = smul.addr %s167, 3
      %s169 = smul.addr %s168, 4
      %s170 = scalar_lea.vmem %s3, %s169
      %v172 = vld [vmem:[%s165] sm:$0xff]
      %v173 = vld [vmem:[%s165 + $0x8] sm:$0xff]
      %v174 = vld [vmem:[%s1] sm:$0xf]
      %v175 = vld [vmem:[%s1 + $0x4] sm:$0xf]
      %v176 = vld [vmem:[%s1 + $0x8] sm:$0xf]
      %v177 = vld [vmem:[%s1 + $0xc] sm:$0xf]
      %v178 = vld [vmem:[%s1 + $0x10] sm:$0xf]
      %v179 = vld [vmem:[%s1 + $0x14] sm:$0xf]
      %v180 = vld [vmem:[%s1 + $0x18] sm:$0xf]
      %v181 = vld [vmem:[%s1 + $0x1c] sm:$0xf]
      %v182 = vld [vmem:[%s1 + $0x20] sm:$0xf]
      %v183 = vld [vmem:[%s1 + $0x24] sm:$0xf]
      %v184 = vld [vmem:[%s1 + $0x28] sm:$0xf]
      %v185 = vld [vmem:[%s1 + $0x2c] sm:$0xf]
      %v186 = vld [vmem:[%s1 + $0x30] sm:$0xf]
      %v187 = vld [vmem:[%s1 + $0x34] sm:$0xf]
      %v188 = vld [vmem:[%s1 + $0x38] sm:$0xf]
      %v189 = vld [vmem:[%s1 + $0x3c] sm:$0xf]
      %v190 = vld [vmem:[%s1 + $0x40] sm:$0xf]
      %v191 = vld [vmem:[%s1 + $0x44] sm:$0xf]
      %v192 = vld [vmem:[%s1 + $0x48] sm:$0xf]
      %v193 = vld [vmem:[%s1 + $0x4c] sm:$0xf]
      %v194 = vld [vmem:[%s1 + $0x50] sm:$0xf]
      %v195 = vld [vmem:[%s1 + $0x54] sm:$0xf]
      %v196 = vld [vmem:[%s1 + $0x58] sm:$0xf]
      %v197 = vld [vmem:[%s1 + $0x5c] sm:$0xf]
      %v198 = vld [vmem:[%s1 + $0x60] sm:$0xf]
      %v199 = vld [vmem:[%s1 + $0x64] sm:$0xf]
      %v200 = vld [vmem:[%s1 + $0x68] sm:$0xf]
      %v201 = vld [vmem:[%s1 + $0x6c] sm:$0xf]
      %v202 = vld [vmem:[%s1 + $0x70] sm:$0xf]
      %v203 = vld [vmem:[%s1 + $0x74] sm:$0xf]
      %v204 = vld [vmem:[%s1 + $0x78] sm:$0xf]
      %v205 = vld [vmem:[%s1 + $0x7c] sm:$0xf]
      %v206 = vld [vmem:[%s165 + $0x10] sm:$0x11]
      %s207 = scalar_lea.vmem %s1, 128
      %v208 = vld [vmem:[%s207] sm:$0xf]
      %v209 = vld [vmem:[%s207 + $0x4] sm:$0xf]
      %v210 = vld [vmem:[%s207 + $0x8] sm:$0xf]
      %v211 = vld [vmem:[%s207 + $0xc] sm:$0xf]
      %v212 = vld [vmem:[%s207 + $0x10] sm:$0xf]
      %v213 = vld [vmem:[%s207 + $0x14] sm:$0xf]
      %v214 = vld [vmem:[%s207 + $0x18] sm:$0xf]
      %v215 = vld [vmem:[%s207 + $0x1c] sm:$0xf]
      %v216 = vld [vmem:[%s207 + $0x20] sm:$0xf]
      %v217 = vld [vmem:[%s207 + $0x24] sm:$0xf]
      %v218 = vld [vmem:[%s207 + $0x28] sm:$0xf]
      %v219 = vld [vmem:[%s207 + $0x2c] sm:$0xf]
      %v220 = vld [vmem:[%s207 + $0x30] sm:$0xf]
      %v221 = vld [vmem:[%s207 + $0x34] sm:$0xf]
      %v222 = vld [vmem:[%s207 + $0x38] sm:$0xf]
      %v223 = vld [vmem:[%s207 + $0x3c] sm:$0xf]
      %v224 = vld [vmem:[%s207 + $0x40] sm:$0xf]
      %v225 = vld [vmem:[%s207 + $0x44] sm:$0xf]
      %v226 = vld [vmem:[%s207 + $0x48] sm:$0xf]
      %v227 = vld [vmem:[%s207 + $0x4c] sm:$0xf]
      %v228 = vld [vmem:[%s207 + $0x50] sm:$0xf]
      %v229 = vld [vmem:[%s207 + $0x54] sm:$0xf]
      %v230 = vld [vmem:[%s207 + $0x58] sm:$0xf]
      %v231 = vld [vmem:[%s207 + $0x5c] sm:$0xf]
      %v232 = vld [vmem:[%s207 + $0x60] sm:$0xf]
      %v233 = vld [vmem:[%s207 + $0x64] sm:$0xf]
      %v234 = vld [vmem:[%s207 + $0x68] sm:$0xf]
      %v235 = vld [vmem:[%s207 + $0x6c] sm:$0xf]
      %v236 = vld [vmem:[%s207 + $0x70] sm:$0xf]
      %v237 = vld [vmem:[%s207 + $0x74] sm:$0xf]
      %v238 = vld [vmem:[%s207 + $0x78] sm:$0xf]
      %v239 = vld [vmem:[%s207 + $0x7c] sm:$0xf]
      %v243 = vunpack.c.l.b16 %v172
      %v244 = vunpack.c.h.b16 %v172
      %v245 = vunpack.c.l.b16 %v173
      %v246 = vunpack.c.h.b16 %v173
      %v247 = vunpack.c.l.b16 %v206
      %v248 = vunpack.c.h.b16 %v206
      %v249 = vpack.c.b16 %v245, %v243
      %v250 = vpack.c.b16 %v246, %v244
      %v251 = vpack.c.b16 %v247, %v247
      %v252 = vpack.c.b16 %v248, %v248
      %vm253 = vsmask.f32 7424
      %v255 = vshrl.u32 %v249, 16
      %v257 = vshll.u32 %v249, 16
      %v259 = vrot.slane %v257, 1
      %v260 = vor.u32 %v255, %v259
      %v262 = vshll.u32 %v251, 16
      %v264 = vrot.slane %v262, 1
      %v265 = vsel %vm253, %v260, %v264
      %v267 = vshrl.u32 %v250, 16
      %v269 = vshll.u32 %v250, 16
      %v271 = vrot.slane %v269, 1
      %v272 = vor.u32 %v267, %v271
      %v274 = vshll.u32 %v252, 16
      %v276 = vrot.slane %v274, 1
      %v277 = vsel %vm253, %v272, %v276
      %v312 = vunpack.c.l.b16 %v208
      %v313 = vunpack.c.l.b16 %v209
      %v314 = vunpack.c.l.b16 %v210
      %v315 = vunpack.c.l.b16 %v211
      %v316 = vunpack.c.l.b16 %v212
      %v317 = vunpack.c.l.b16 %v213
      %v318 = vunpack.c.l.b16 %v214
      %v319 = vunpack.c.l.b16 %v215
      %v320 = vunpack.c.l.b16 %v216
      %v321 = vunpack.c.l.b16 %v217
      %v322 = vunpack.c.l.b16 %v218
      %v323 = vunpack.c.l.b16 %v219
      %v324 = vunpack.c.l.b16 %v220
      %v325 = vunpack.c.l.b16 %v221
      %v326 = vunpack.c.l.b16 %v222
      %v327 = vunpack.c.l.b16 %v223
      %v328 = vunpack.c.l.b16 %v224
      %v329 = vunpack.c.l.b16 %v225
      %v330 = vunpack.c.l.b16 %v226
      %v331 = vunpack.c.l.b16 %v227
      %v332 = vunpack.c.l.b16 %v228
      %v333 = vunpack.c.l.b16 %v229
      %v334 = vunpack.c.l.b16 %v230
      %v335 = vunpack.c.l.b16 %v231
      %v336 = vunpack.c.l.b16 %v232
      %v337 = vunpack.c.l.b16 %v233
      %v338 = vunpack.c.l.b16 %v234
      %v339 = vunpack.c.l.b16 %v235
      %v340 = vunpack.c.l.b16 %v236
      %v341 = vunpack.c.l.b16 %v237
      %v342 = vunpack.c.l.b16 %v238
      %v343 = vunpack.c.l.b16 %v239
      %v344 = vpack.c.b16 %v313, %v312
      %v345 = vpack.c.b16 %v315, %v314
      %v346 = vpack.c.b16 %v317, %v316
      %v347 = vpack.c.b16 %v319, %v318
      %v348 = vpack.c.b16 %v321, %v320
      %v349 = vpack.c.b16 %v323, %v322
      %v350 = vpack.c.b16 %v325, %v324
      %v351 = vpack.c.b16 %v327, %v326
      %v352 = vpack.c.b16 %v329, %v328
      %v353 = vpack.c.b16 %v331, %v330
      %v354 = vpack.c.b16 %v333, %v332
      %v355 = vpack.c.b16 %v335, %v334
      %v356 = vpack.c.b16 %v337, %v336
      %v357 = vpack.c.b16 %v339, %v338
      %v358 = vpack.c.b16 %v341, %v340
      %v359 = vpack.c.b16 %v343, %v342
      %376 = vmatpush.bf16.msra.mxu0 %v351
      %377 = vmatpush.bf16.msra.mxu0 %v350
      %378 = vmatpush.bf16.msra.mxu0 %v349
      %379 = vmatpush.bf16.msra.mxu0 %v348
      %380 = vmatpush.bf16.msra.mxu0 %v347
      %381 = vmatpush.bf16.msra.mxu0 %v346
      %382 = vmatpush.bf16.msra.mxu0 %v345
      %383 = vmatpush.bf16.msra.mxu0 %v344
      %384 = vmatmul.bf16.gmra.mxu0 %v265
      %v385 = vpop.f32.mrf.mxu0
      %v386 = vadd.f32 0.0, %v385
      %v387 = vpop.f32.mrf.mxu0
      %v388 = vadd.f32 0.0, %v387
      %389 = vdwg.mxu0
      %390 = vmatpush.bf16.msra.mxu0 %v359
      %391 = vmatpush.bf16.msra.mxu0 %v358
      %392 = vmatpush.bf16.msra.mxu0 %v357
      %393 = vmatpush.bf16.msra.mxu0 %v356
      %394 = vmatpush.bf16.msra.mxu0 %v355
      %395 = vmatpush.bf16.msra.mxu0 %v354
      %396 = vmatpush.bf16.msra.mxu0 %v353
      %397 = vmatpush.bf16.msra.mxu0 %v352
      %398 = vmatmul.bf16.gmra.mxu0 %v277
      %v399 = vpop.f32.mrf.mxu0
      %v400 = vadd.f32 %v386, %v399
      %v401 = vpop.f32.mrf.mxu0
      %v402 = vadd.f32 %v388, %v401
      %403 = vdwg.mxu0
      %v438 = vunpack.c.l.b16 %v174
      %v439 = vunpack.c.l.b16 %v175
      %v440 = vunpack.c.l.b16 %v176
      %v441 = vunpack.c.l.b16 %v177
      %v442 = vunpack.c.l.b16 %v178
      %v443 = vunpack.c.l.b16 %v179
      %v444 = vunpack.c.l.b16 %v180
      %v445 = vunpack.c.l.b16 %v181
      %v446 = vunpack.c.l.b16 %v182
      %v447 = vunpack.c.l.b16 %v183
      %v448 = vunpack.c.l.b16 %v184
      %v449 = vunpack.c.l.b16 %v185
      %v450 = vunpack.c.l.b16 %v186
      %v451 = vunpack.c.l.b16 %v187
      %v452 = vunpack.c.l.b16 %v188
      %v453 = vunpack.c.l.b16 %v189
      %v454 = vunpack.c.l.b16 %v190
      %v455 = vunpack.c.l.b16 %v191
      %v456 = vunpack.c.l.b16 %v192
      %v457 = vunpack.c.l.b16 %v193
      %v458 = vunpack.c.l.b16 %v194
      %v459 = vunpack.c.l.b16 %v195
      %v460 = vunpack.c.l.b16 %v196
      %v461 = vunpack.c.l.b16 %v197
      %v462 = vunpack.c.l.b16 %v198
      %v463 = vunpack.c.l.b16 %v199
      %v464 = vunpack.c.l.b16 %v200
      %v465 = vunpack.c.l.b16 %v201
      %v466 = vunpack.c.l.b16 %v202
      %v467 = vunpack.c.l.b16 %v203
      %v468 = vunpack.c.l.b16 %v204
      %v469 = vunpack.c.l.b16 %v205
      %v470 = vpack.c.b16 %v439, %v438
      %v471 = vpack.c.b16 %v441, %v440
      %v472 = vpack.c.b16 %v443, %v442
      %v473 = vpack.c.b16 %v445, %v444
      %v474 = vpack.c.b16 %v447, %v446
      %v475 = vpack.c.b16 %v449, %v448
      %v476 = vpack.c.b16 %v451, %v450
      %v477 = vpack.c.b16 %v453, %v452
      %v478 = vpack.c.b16 %v455, %v454
      %v479 = vpack.c.b16 %v457, %v456
      %v480 = vpack.c.b16 %v459, %v458
      %v481 = vpack.c.b16 %v461, %v460
      %v482 = vpack.c.b16 %v463, %v462
      %v483 = vpack.c.b16 %v465, %v464
      %v484 = vpack.c.b16 %v467, %v466
      %v485 = vpack.c.b16 %v469, %v468
      %502 = vmatpush.bf16.msra.mxu0 %v477
      %503 = vmatpush.bf16.msra.mxu0 %v476
      %504 = vmatpush.bf16.msra.mxu0 %v475
      %505 = vmatpush.bf16.msra.mxu0 %v474
      %506 = vmatpush.bf16.msra.mxu0 %v473
      %507 = vmatpush.bf16.msra.mxu0 %v472
      %508 = vmatpush.bf16.msra.mxu0 %v471
      %509 = vmatpush.bf16.msra.mxu0 %v470
      %510 = vmatmul.bf16.gmra.mxu0 %v249
      %v511 = vpop.f32.mrf.mxu0
      %v512 = vadd.f32 %v400, %v511
      %v513 = vpop.f32.mrf.mxu0
      %v514 = vadd.f32 %v402, %v513
      %515 = vdwg.mxu0
      %516 = vmatpush.bf16.msra.mxu0 %v485
      %517 = vmatpush.bf16.msra.mxu0 %v484
      %518 = vmatpush.bf16.msra.mxu0 %v483
      %519 = vmatpush.bf16.msra.mxu0 %v482
      %520 = vmatpush.bf16.msra.mxu0 %v481
      %521 = vmatpush.bf16.msra.mxu0 %v480
      %522 = vmatpush.bf16.msra.mxu0 %v479
      %523 = vmatpush.bf16.msra.mxu0 %v478
      %524 = vmatmul.bf16.gmra.mxu0 %v250
      %v525 = vpop.f32.mrf.mxu0
      %v526 = vadd.f32 %v512, %v525
      %v527 = vpop.f32.mrf.mxu0
      %v528 = vadd.f32 %v514, %v527
      %529 = vdwg.mxu0
      %v530 = vld [vmem:[%s165] sm:$0xee]
      %s531 = scalar_lea.vmem %s1, 256
      %v532 = vld [vmem:[%s531] sm:$0xf]
      %v533 = vld [vmem:[%s531 + $0x4] sm:$0xf]
      %v534 = vld [vmem:[%s531 + $0x8] sm:$0xf]
      %v535 = vld [vmem:[%s531 + $0xc] sm:$0xf]
      %v536 = vld [vmem:[%s531 + $0x10] sm:$0xf]
      %v537 = vld [vmem:[%s531 + $0x14] sm:$0xf]
      %v538 = vld [vmem:[%s531 + $0x18] sm:$0xf]
      %v539 = vld [vmem:[%s531 + $0x1c] sm:$0xf]
      %v540 = vld [vmem:[%s531 + $0x20] sm:$0xf]
      %v541 = vld [vmem:[%s531 + $0x24] sm:$0xf]
      %v542 = vld [vmem:[%s531 + $0x28] sm:$0xf]
      %v543 = vld [vmem:[%s531 + $0x2c] sm:$0xf]
      %v544 = vld [vmem:[%s531 + $0x30] sm:$0xf]
      %v545 = vld [vmem:[%s531 + $0x34] sm:$0xf]
      %v546 = vld [vmem:[%s531 + $0x38] sm:$0xf]
      %v547 = vld [vmem:[%s531 + $0x3c] sm:$0xf]
      %v548 = vld [vmem:[%s531 + $0x40] sm:$0xf]
      %v549 = vld [vmem:[%s531 + $0x44] sm:$0xf]
      %v550 = vld [vmem:[%s531 + $0x48] sm:$0xf]
      %v551 = vld [vmem:[%s531 + $0x4c] sm:$0xf]
      %v552 = vld [vmem:[%s531 + $0x50] sm:$0xf]
      %v553 = vld [vmem:[%s531 + $0x54] sm:$0xf]
      %v554 = vld [vmem:[%s531 + $0x58] sm:$0xf]
      %v555 = vld [vmem:[%s531 + $0x5c] sm:$0xf]
      %v556 = vld [vmem:[%s531 + $0x60] sm:$0xf]
      %v557 = vld [vmem:[%s531 + $0x64] sm:$0xf]
      %v558 = vld [vmem:[%s531 + $0x68] sm:$0xf]
      %v559 = vld [vmem:[%s531 + $0x6c] sm:$0xf]
      %v560 = vld [vmem:[%s531 + $0x70] sm:$0xf]
      %v561 = vld [vmem:[%s531 + $0x74] sm:$0xf]
      %v562 = vld [vmem:[%s531 + $0x78] sm:$0xf]
      %v563 = vld [vmem:[%s531 + $0x7c] sm:$0xf]
      %v565 = vunpack.c.l.b16 %v530
      %v566 = vunpack.c.h.b16 %v530
      %v567 = vpack.c.b16 %v245, %v565
      %v568 = vpack.c.b16 %v246, %v566
      %vm569 = vcmask 1046528
      %v570 = vrot.slane %v567, 1
      %v571 = vrot.slane %v251, 1
      %v572 = vsel %vm569, %v570, %v571
      %v573 = vrot.slane %v568, 1
      %v574 = vrot.slane %v252, 1
      %v575 = vsel %vm569, %v573, %v574
      %v610 = vunpack.c.l.b16 %v532
      %v611 = vunpack.c.l.b16 %v533
      %v612 = vunpack.c.l.b16 %v534
      %v613 = vunpack.c.l.b16 %v535
      %v614 = vunpack.c.l.b16 %v536
      %v615 = vunpack.c.l.b16 %v537
      %v616 = vunpack.c.l.b16 %v538
      %v617 = vunpack.c.l.b16 %v539
      %v618 = vunpack.c.l.b16 %v540
      %v619 = vunpack.c.l.b16 %v541
      %v620 = vunpack.c.l.b16 %v542
      %v621 = vunpack.c.l.b16 %v543
      %v622 = vunpack.c.l.b16 %v544
      %v623 = vunpack.c.l.b16 %v545
      %v624 = vunpack.c.l.b16 %v546
      %v625 = vunpack.c.l.b16 %v547
      %v626 = vunpack.c.l.b16 %v548
      %v627 = vunpack.c.l.b16 %v549
      %v628 = vunpack.c.l.b16 %v550
      %v629 = vunpack.c.l.b16 %v551
      %v630 = vunpack.c.l.b16 %v552
      %v631 = vunpack.c.l.b16 %v553
      %v632 = vunpack.c.l.b16 %v554
      %v633 = vunpack.c.l.b16 %v555
      %v634 = vunpack.c.l.b16 %v556
      %v635 = vunpack.c.l.b16 %v557
      %v636 = vunpack.c.l.b16 %v558
      %v637 = vunpack.c.l.b16 %v559
      %v638 = vunpack.c.l.b16 %v560
      %v639 = vunpack.c.l.b16 %v561
      %v640 = vunpack.c.l.b16 %v562
      %v641 = vunpack.c.l.b16 %v563
      %v642 = vpack.c.b16 %v611, %v610
      %v643 = vpack.c.b16 %v613, %v612
      %v644 = vpack.c.b16 %v615, %v614
      %v645 = vpack.c.b16 %v617, %v616
      %v646 = vpack.c.b16 %v619, %v618
      %v647 = vpack.c.b16 %v621, %v620
      %v648 = vpack.c.b16 %v623, %v622
      %v649 = vpack.c.b16 %v625, %v624
      %v650 = vpack.c.b16 %v627, %v626
      %v651 = vpack.c.b16 %v629, %v628
      %v652 = vpack.c.b16 %v631, %v630
      %v653 = vpack.c.b16 %v633, %v632
      %v654 = vpack.c.b16 %v635, %v634
      %v655 = vpack.c.b16 %v637, %v636
      %v656 = vpack.c.b16 %v639, %v638
      %v657 = vpack.c.b16 %v641, %v640
      %674 = vmatpush.bf16.msra.mxu0 %v649
      %675 = vmatpush.bf16.msra.mxu0 %v648
      %676 = vmatpush.bf16.msra.mxu0 %v647
      %677 = vmatpush.bf16.msra.mxu0 %v646
      %678 = vmatpush.bf16.msra.mxu0 %v645
      %679 = vmatpush.bf16.msra.mxu0 %v644
      %680 = vmatpush.bf16.msra.mxu0 %v643
      %681 = vmatpush.bf16.msra.mxu0 %v642
      %682 = vmatmul.bf16.gmra.mxu0 %v572
      %v683 = vpop.f32.mrf.mxu0
      %v684 = vadd.f32 0.0, %v683
      %v685 = vpop.f32.mrf.mxu0
      %v686 = vadd.f32 0.0, %v685
      %687 = vdwg.mxu0
      %688 = vmatpush.bf16.msra.mxu0 %v657
      %689 = vmatpush.bf16.msra.mxu0 %v656
      %690 = vmatpush.bf16.msra.mxu0 %v655
      %691 = vmatpush.bf16.msra.mxu0 %v654
      %692 = vmatpush.bf16.msra.mxu0 %v653
      %693 = vmatpush.bf16.msra.mxu0 %v652
      %694 = vmatpush.bf16.msra.mxu0 %v651
      %695 = vmatpush.bf16.msra.mxu0 %v650
      %696 = vmatmul.bf16.gmra.mxu0 %v575
      %v697 = vpop.f32.mrf.mxu0
      %v698 = vadd.f32 %v684, %v697
      %v699 = vpop.f32.mrf.mxu0
      %v700 = vadd.f32 %v686, %v699
      %701 = vdwg.mxu0
      %v702 = vadd.f32 %v526, %v698
      %v703 = vadd.f32 %v528, %v700
      %v704 = vld [vmem:[%s165 + $0x10] sm:$0x33]
      %s705 = scalar_lea.vmem %s1, 384
      %v706 = vld [vmem:[%s705] sm:$0xf]
      %v707 = vld [vmem:[%s705 + $0x4] sm:$0xf]
      %v708 = vld [vmem:[%s705 + $0x8] sm:$0xf]
      %v709 = vld [vmem:[%s705 + $0xc] sm:$0xf]
      %v710 = vld [vmem:[%s705 + $0x10] sm:$0xf]
      %v711 = vld [vmem:[%s705 + $0x14] sm:$0xf]
      %v712 = vld [vmem:[%s705 + $0x18] sm:$0xf]
      %v713 = vld [vmem:[%s705 + $0x1c] sm:$0xf]
      %v714 = vld [vmem:[%s705 + $0x20] sm:$0xf]
      %v715 = vld [vmem:[%s705 + $0x24] sm:$0xf]
      %v716 = vld [vmem:[%s705 + $0x28] sm:$0xf]
      %v717 = vld [vmem:[%s705 + $0x2c] sm:$0xf]
      %v718 = vld [vmem:[%s705 + $0x30] sm:$0xf]
      %v719 = vld [vmem:[%s705 + $0x34] sm:$0xf]
      %v720 = vld [vmem:[%s705 + $0x38] sm:$0xf]
      %v721 = vld [vmem:[%s705 + $0x3c] sm:$0xf]
      %v722 = vld [vmem:[%s705 + $0x40] sm:$0xf]
      %v723 = vld [vmem:[%s705 + $0x44] sm:$0xf]
      %v724 = vld [vmem:[%s705 + $0x48] sm:$0xf]
      %v725 = vld [vmem:[%s705 + $0x4c] sm:$0xf]
      %v726 = vld [vmem:[%s705 + $0x50] sm:$0xf]
      %v727 = vld [vmem:[%s705 + $0x54] sm:$0xf]
      %v728 = vld [vmem:[%s705 + $0x58] sm:$0xf]
      %v729 = vld [vmem:[%s705 + $0x5c] sm:$0xf]
      %v730 = vld [vmem:[%s705 + $0x60] sm:$0xf]
      %v731 = vld [vmem:[%s705 + $0x64] sm:$0xf]
      %v732 = vld [vmem:[%s705 + $0x68] sm:$0xf]
      %v733 = vld [vmem:[%s705 + $0x6c] sm:$0xf]
      %v734 = vld [vmem:[%s705 + $0x70] sm:$0xf]
      %v735 = vld [vmem:[%s705 + $0x74] sm:$0xf]
      %v736 = vld [vmem:[%s705 + $0x78] sm:$0xf]
      %v737 = vld [vmem:[%s705 + $0x7c] sm:$0xf]
      %v739 = vunpack.c.l.b16 %v704
      %v740 = vunpack.c.h.b16 %v704
      %v741 = vpack.c.b16 %v739, %v739
      %v742 = vpack.c.b16 %v740, %v740
      %vm743 = vsmask.f32 6400
      %v745 = vshrl.u32 %v567, 16
      %v747 = vrot.slane %v745, 1
      %v748 = vshll.u32 %v567, 16
      %v750 = vrot.slane %v748, 2
      %v751 = vor.u32 %v747, %v750
      %v753 = vshrl.u32 %v741, 16
      %v755 = vrot.slane %v753, 1
      %v756 = vshll.u32 %v741, 16
      %v758 = vrot.slane %v756, 2
      %v759 = vor.u32 %v755, %v758
      %v760 = vsel %vm743, %v751, %v759
      %v762 = vshrl.u32 %v568, 16
      %v764 = vrot.slane %v762, 1
      %v765 = vshll.u32 %v568, 16
      %v767 = vrot.slane %v765, 2
      %v768 = vor.u32 %v764, %v767
      %v770 = vshrl.u32 %v742, 16
      %v772 = vrot.slane %v770, 1
      %v773 = vshll.u32 %v742, 16
      %v775 = vrot.slane %v773, 2
      %v776 = vor.u32 %v772, %v775
      %v777 = vsel %vm743, %v768, %v776
      %v812 = vunpack.c.l.b16 %v706
      %v813 = vunpack.c.l.b16 %v707
      %v814 = vunpack.c.l.b16 %v708
      %v815 = vunpack.c.l.b16 %v709
      %v816 = vunpack.c.l.b16 %v710
      %v817 = vunpack.c.l.b16 %v711
      %v818 = vunpack.c.l.b16 %v712
      %v819 = vunpack.c.l.b16 %v713
      %v820 = vunpack.c.l.b16 %v714
      %v821 = vunpack.c.l.b16 %v715
      %v822 = vunpack.c.l.b16 %v716
      %v823 = vunpack.c.l.b16 %v717
      %v824 = vunpack.c.l.b16 %v718
      %v825 = vunpack.c.l.b16 %v719
      %v826 = vunpack.c.l.b16 %v720
      %v827 = vunpack.c.l.b16 %v721
      %v828 = vunpack.c.l.b16 %v722
      %v829 = vunpack.c.l.b16 %v723
      %v830 = vunpack.c.l.b16 %v724
      %v831 = vunpack.c.l.b16 %v725
      %v832 = vunpack.c.l.b16 %v726
      %v833 = vunpack.c.l.b16 %v727
      %v834 = vunpack.c.l.b16 %v728
      %v835 = vunpack.c.l.b16 %v729
      %v836 = vunpack.c.l.b16 %v730
      %v837 = vunpack.c.l.b16 %v731
      %v838 = vunpack.c.l.b16 %v732
      %v839 = vunpack.c.l.b16 %v733
      %v840 = vunpack.c.l.b16 %v734
      %v841 = vunpack.c.l.b16 %v735
      %v842 = vunpack.c.l.b16 %v736
      %v843 = vunpack.c.l.b16 %v737
      %v844 = vpack.c.b16 %v813, %v812
      %v845 = vpack.c.b16 %v815, %v814
      %v846 = vpack.c.b16 %v817, %v816
      %v847 = vpack.c.b16 %v819, %v818
      %v848 = vpack.c.b16 %v821, %v820
      %v849 = vpack.c.b16 %v823, %v822
      %v850 = vpack.c.b16 %v825, %v824
      %v851 = vpack.c.b16 %v827, %v826
      %v852 = vpack.c.b16 %v829, %v828
      %v853 = vpack.c.b16 %v831, %v830
      %v854 = vpack.c.b16 %v833, %v832
      %v855 = vpack.c.b16 %v835, %v834
      %v856 = vpack.c.b16 %v837, %v836
      %v857 = vpack.c.b16 %v839, %v838
      %v858 = vpack.c.b16 %v841, %v840
      %v859 = vpack.c.b16 %v843, %v842
      %876 = vmatpush.bf16.msra.mxu0 %v851
      %877 = vmatpush.bf16.msra.mxu0 %v850
      %878 = vmatpush.bf16.msra.mxu0 %v849
      %879 = vmatpush.bf16.msra.mxu0 %v848
      %880 = vmatpush.bf16.msra.mxu0 %v847
      %881 = vmatpush.bf16.msra.mxu0 %v846
      %882 = vmatpush.bf16.msra.mxu0 %v845
      %883 = vmatpush.bf16.msra.mxu0 %v844
      %884 = vmatmul.bf16.gmra.mxu0 %v760
      %v885 = vpop.f32.mrf.mxu0
      %v886 = vadd.f32 0.0, %v885
      %v887 = vpop.f32.mrf.mxu0
      %v888 = vadd.f32 0.0, %v887
      %889 = vdwg.mxu0
      %890 = vmatpush.bf16.msra.mxu0 %v859
      %891 = vmatpush.bf16.msra.mxu0 %v858
      %892 = vmatpush.bf16.msra.mxu0 %v857
      %893 = vmatpush.bf16.msra.mxu0 %v856
      %894 = vmatpush.bf16.msra.mxu0 %v855
      %895 = vmatpush.bf16.msra.mxu0 %v854
      %896 = vmatpush.bf16.msra.mxu0 %v853
      %897 = vmatpush.bf16.msra.mxu0 %v852
      %898 = vmatmul.bf16.gmra.mxu0 %v777
      %v899 = vpop.f32.mrf.mxu0
      %v900 = vadd.f32 %v886, %v899
      %v901 = vpop.f32.mrf.mxu0
      %v902 = vadd.f32 %v888, %v901
      %903 = vdwg.mxu0
      %v904 = vadd.f32 %v702, %v900
      %v905 = vadd.f32 %v703, %v902
      %v906 = vld [vmem:[%s2] sm:$0x1]
      %v908 = vperm.slane %v906, 0
      %v910 = vadd.f32 %v904, %v908
      %v911 = vadd.f32 %v905, %v908
      %v912 = vmax.f32 %v910, 0.0
      %v913 = vmax.f32 %v911, 0.0
      %914 = vst [vmem:[%s170] sm:$0xf] 0
      %915 = vst [vmem:[%s170 + $0x4] sm:$0xf] 0
      %916 = vst [vmem:[%s170 + $0x8] sm:$0x3] 0
      %v917 = vpack.c.bf16 %v912, %v912
      %v918 = vpack.c.bf16 %v913, %v913
      %vm921 = vcmask 1040384
      %vm922 = vcmask 1044484
      %vm923 = vmor %vm921, %vm922
      %v924 = vrot.slane %v917, 7
      %v925 = vrot.slane %v924, 4
      %v926 = vrot.slane %v918, 7
      %v927 = vsel %vm923, %v925, %v926
      %v928 = vrot.slane %v926, 4
      %932 = vst [vmem:[%s170] sm:$0xe] %v924
      %933 = vst [vmem:[%s170 + $0x4] sm:$0xf] %v927
      %934 = vst [vmem:[%s170 + $0x8] sm:$0x1] %v928
      %p935 = scmp.lt.s32.totalorder %s14, 1
      %s936 = scalar_select %p935, %s14, 1
      %s937 = smul.addr %s936, 3
      %s938 = smul.addr %s937, 4
      %s939 = scalar_lea.vmem %s3, %s938
      // Predicated region
      $region33: #{simplified_gap_cnn_forward.6} parent=31 // pred_check
        %p940 = pneg %p100
      $region34: #{simplified_gap_cnn_forward.6} parent=31 // pred_check_branch
        %942 = sbr.rel (%p940) target = $region36
      $region35: #{simplified_gap_cnn_forward.6} parent=31 // pred_region
        _
      $region36: #{simplified_gap_cnn_forward.6} parent=31 // pred_fallthru
        _
    $region32: #{simplified_gap_cnn_forward.6} parent=5 // pred_fallthru
      _
    %p943 = scmp.le.s32.totalorder 2, %s9
    // Predicated region
    $region37: #{simplified_gap_cnn_forward.6} parent=5 // pred_check
      %p944 = pneg %p943
    $region38: #{simplified_gap_cnn_forward.6} parent=5 // pred_check_branch
      %946 = sbr.rel (%p944) target = $region40
    $region39: #{simplified_gap_cnn_forward.6} parent=5 // pred_region
      %s947 = ssub.s32 %s9, 2
      // Predicated region
      $region41: #{simplified_gap_cnn_forward.6} parent=39 // pred_check
        %p948 = pneg %p106
      $region42: #{simplified_gap_cnn_forward.6} parent=39 // pred_check_branch
        %950 = sbr.rel (%p948) target = $region44
      $region43: #{simplified_gap_cnn_forward.6} parent=39 // pred_region
        %p951 = scmp.lt.s32.totalorder %s15, 1
        %s952 = scalar_select %p951, %s15, 1
        %s953 = smul.addr %s952, 3
        %s954 = smul.addr %s953, 4
        %s955 = scalar_lea.vmem %s3, %s954
      $region44: #{simplified_gap_cnn_forward.6} parent=39 // pred_fallthru
        _
    $region40: #{simplified_gap_cnn_forward.6} parent=5 // pred_fallthru
      _
  $region6: #{simplified_gap_cnn_forward.6} parent=0 // loop_footer
    %s13 = sadd.s32 1, %s9
  $region7: #{simplified_gap_cnn_forward.6} parent=0 // loop_footer_branch
    %8 = sbr.rel target = $region3
  $region8: #{simplified_gap_cnn_forward.6} parent=0 // loop_exit
    _

// kernel: simplified_gap_cnn_forward.9
$region0: #{simplified_gap_cnn_forward.9}
  #allocation0 [shape = 'u32[]', space=smem, size = 0x4, offset = 0x4, fixed_abs, tag = 'smem constant byte address 0x4 - core index']
  #allocation1 [shape = 'u32[72,128]{1,0:T(1,128)}', space=vmem, size = 0x9000, scoped, tag = 'internal scratch']
  #allocation2 [shape = 'f32[1,1]{1,0:T(1,128)S(1)}', space=vmem, size = 0x200, scoped, tag = 'scoped memory for simplified_gap_cnn_forward.9']
  %s0 = inlined_call_operand.vmem [shape: f32[2,256], index: 0, kind: input, shape index: {}]
  %s1 = inlined_call_operand.vmem [shape: f32[256,128], index: 1, kind: input, shape index: {}]
  %s2 = inlined_call_operand.vmem [shape: f32[1,128], index: 2, kind: input, shape index: {}]
  %s3 = inlined_call_operand.vmem [shape: f32[128,64], index: 3, kind: input, shape index: {}]
  %s4 = inlined_call_operand.vmem [shape: f32[1,64], index: 4, kind: input, shape index: {}]
  %s5 = inlined_call_operand.vmem [shape: f32[64,32], index: 5, kind: input, shape index: {}]
  %s6 = inlined_call_operand.vmem [shape: f32[1,32], index: 6, kind: input, shape index: {}]
  %s7 = inlined_call_operand.vmem [shape: f32[32,1], index: 7, kind: input, shape index: {}]
  %s8 = inlined_call_operand.<no memory space> [shape: f32[1,1], index: 8, kind: input, shape index: {}]
  %s9 = inlined_call_operand.vmem [shape: f32[2,1], index: 9, kind: output, shape index: {}]
  %s10 = sld [smem:[#allocation0]]
  $region46: #{simplified_gap_cnn_forward.9} parent=0
    _
  %s12 = ssub.s32 1, %s10
  %s13 = scalar_select 0, %s12, %s10
  %v14 = vstv %s8
  %15 = vst [vmem:[#allocation2] sm:$0x1] %v14
  // Predicated region
  $region2: #{simplified_gap_cnn_forward.9} parent=0 // pred_check
    _
  $region3: #{simplified_gap_cnn_forward.9} parent=0 // pred_check_branch
    %17 = sbr.rel (0) target = $region5
  $region4: #{simplified_gap_cnn_forward.9} parent=0 // pred_region
    _
  $region5: #{simplified_gap_cnn_forward.9} parent=0 // pred_fallthru
    _
  // Predicated region
  $region6: #{simplified_gap_cnn_forward.9} parent=0 // pred_check
    _
  $region7: #{simplified_gap_cnn_forward.9} parent=0 // pred_check_branch
    %19 = sbr.rel (0) target = $region9
  $region8: #{simplified_gap_cnn_forward.9} parent=0 // pred_region
    _
  $region9: #{simplified_gap_cnn_forward.9} parent=0 // pred_fallthru
    _
  // Predicated region
  $region10: #{simplified_gap_cnn_forward.9} parent=0 // pred_check
    _
  $region11: #{simplified_gap_cnn_forward.9} parent=0 // pred_check_branch
    %21 = sbr.rel (0) target = $region13
  $region12: #{simplified_gap_cnn_forward.9} parent=0 // pred_region
    _
  $region13: #{simplified_gap_cnn_forward.9} parent=0 // pred_fallthru
    _
  // Predicated region
  $region14: #{simplified_gap_cnn_forward.9} parent=0 // pred_check
    _
  $region15: #{simplified_gap_cnn_forward.9} parent=0 // pred_check_branch
    %23 = sbr.rel (0) target = $region17
  $region16: #{simplified_gap_cnn_forward.9} parent=0 // pred_region
    _
  $region17: #{simplified_gap_cnn_forward.9} parent=0 // pred_fallthru
    _
  // Predicated region
  $region18: #{simplified_gap_cnn_forward.9} parent=0 // pred_check
    _
  $region19: #{simplified_gap_cnn_forward.9} parent=0 // pred_check_branch
    %25 = sbr.rel (0) target = $region21
  $region20: #{simplified_gap_cnn_forward.9} parent=0 // pred_region
    _
  $region21: #{simplified_gap_cnn_forward.9} parent=0 // pred_fallthru
    _
  // Predicated region
  $region22: #{simplified_gap_cnn_forward.9} parent=0 // pred_check
    _
  $region23: #{simplified_gap_cnn_forward.9} parent=0 // pred_check_branch
    %27 = sbr.rel (0) target = $region25
  $region24: #{simplified_gap_cnn_forward.9} parent=0 // pred_region
    _
  $region25: #{simplified_gap_cnn_forward.9} parent=0 // pred_fallthru
    _
  // Predicated region
  $region26: #{simplified_gap_cnn_forward.9} parent=0 // pred_check
    _
  $region27: #{simplified_gap_cnn_forward.9} parent=0 // pred_check_branch
    %29 = sbr.rel (0) target = $region29
  $region28: #{simplified_gap_cnn_forward.9} parent=0 // pred_region
    _
  $region29: #{simplified_gap_cnn_forward.9} parent=0 // pred_fallthru
    _
  // Predicated region
  $region30: #{simplified_gap_cnn_forward.9} parent=0 // pred_check
    _
  $region31: #{simplified_gap_cnn_forward.9} parent=0 // pred_check_branch
    %31 = sbr.rel (0) target = $region33
  $region32: #{simplified_gap_cnn_forward.9} parent=0 // pred_region
    _
  $region33: #{simplified_gap_cnn_forward.9} parent=0 // pred_fallthru
    _
  // Predicated region
  $region34: #{simplified_gap_cnn_forward.9} parent=0 // pred_check
    _
  $region35: #{simplified_gap_cnn_forward.9} parent=0 // pred_check_branch
    %33 = sbr.rel (0) target = $region37
  $region36: #{simplified_gap_cnn_forward.9} parent=0 // pred_region
    _
  $region37: #{simplified_gap_cnn_forward.9} parent=0 // pred_fallthru
    _
  %v34 = vld [vmem:[%s0] sm:$0xf]
  %v35 = vld [vmem:[%s1] sm:$0xff]
  %v36 = vld [vmem:[%s1 + $0x8] sm:$0xff]
  %v37 = vld [vmem:[%s1 + $0x10] sm:$0xff]
  %v38 = vld [vmem:[%s1 + $0x18] sm:$0xff]
  %v39 = vld [vmem:[%s1 + $0x20] sm:$0xff]
  %v40 = vld [vmem:[%s1 + $0x28] sm:$0xff]
  %v41 = vld [vmem:[%s1 + $0x30] sm:$0xff]
  %v42 = vld [vmem:[%s1 + $0x38] sm:$0xff]
  %v43 = vld [vmem:[%s1 + $0x40] sm:$0xff]
  %v44 = vld [vmem:[%s1 + $0x48] sm:$0xff]
  %v45 = vld [vmem:[%s1 + $0x50] sm:$0xff]
  %v46 = vld [vmem:[%s1 + $0x58] sm:$0xff]
  %v47 = vld [vmem:[%s1 + $0x60] sm:$0xff]
  %v48 = vld [vmem:[%s1 + $0x68] sm:$0xff]
  %v49 = vld [vmem:[%s1 + $0x70] sm:$0xff]
  %v50 = vld [vmem:[%s1 + $0x78] sm:$0xff]
  %v51 = vld [vmem:[%s1 + $0x80] sm:$0xff]
  %v52 = vld [vmem:[%s1 + $0x88] sm:$0xff]
  %v53 = vld [vmem:[%s1 + $0x90] sm:$0xff]
  %v54 = vld [vmem:[%s1 + $0x98] sm:$0xff]
  %v55 = vld [vmem:[%s1 + $0xa0] sm:$0xff]
  %v56 = vld [vmem:[%s1 + $0xa8] sm:$0xff]
  %v57 = vld [vmem:[%s1 + $0xb0] sm:$0xff]
  %v58 = vld [vmem:[%s1 + $0xb8] sm:$0xff]
  %v59 = vld [vmem:[%s1 + $0xc0] sm:$0xff]
  %v60 = vld [vmem:[%s1 + $0xc8] sm:$0xff]
  %v61 = vld [vmem:[%s1 + $0xd0] sm:$0xff]
  %v62 = vld [vmem:[%s1 + $0xd8] sm:$0xff]
  %v63 = vld [vmem:[%s1 + $0xe0] sm:$0xff]
  %v64 = vld [vmem:[%s1 + $0xe8] sm:$0xff]
  %v65 = vld [vmem:[%s1 + $0xf0] sm:$0xff]
  %v66 = vld [vmem:[%s1 + $0xf8] sm:$0xff]
  %v67 = vld [vmem:[%s2] sm:$0x1]
  %v69 = vperm.slane %v67, 0
  %72 = vst [vmem:[#allocation1] ss:$4 sm:$0xff] %v34
  %v73 = vld.sshfl [vmem:[#allocation1] sm:$0xff pattern:$0x73625140]
  %v74 = vld.sshfl [vmem:[#allocation1 + $0x8] sm:$0xff pattern:$0x73625140]
  %77 = vmatpush.msra.mxu0 %v50
  %78 = vmatpush.msra.mxu0 %v49
  %79 = vmatpush.msra.mxu0 %v48
  %80 = vmatpush.msra.mxu0 %v47
  %81 = vmatpush.msra.mxu0 %v46
  %82 = vmatpush.msra.mxu0 %v45
  %83 = vmatpush.msra.mxu0 %v44
  %84 = vmatpush.msra.mxu0 %v43
  %85 = vmatpush.msra.mxu0 %v42
  %86 = vmatpush.msra.mxu0 %v41
  %87 = vmatpush.msra.mxu0 %v40
  %88 = vmatpush.msra.mxu0 %v39
  %89 = vmatpush.msra.mxu0 %v38
  %90 = vmatpush.msra.mxu0 %v37
  %91 = vmatpush.msra.mxu0 %v36
  %92 = vmatpush.msra.mxu0 %v35
  %93 = vmatmul.f32.gmra.mxu0 %v73
  %v94 = vpop.f32.mrf.mxu0
  %v95 = vadd.f32 %v69, %v94
  %96 = vdwg.mxu0
  %97 = vmatpush.msra.mxu0 %v66
  %98 = vmatpush.msra.mxu0 %v65
  %99 = vmatpush.msra.mxu0 %v64
  %100 = vmatpush.msra.mxu0 %v63
  %101 = vmatpush.msra.mxu0 %v62
  %102 = vmatpush.msra.mxu0 %v61
  %103 = vmatpush.msra.mxu0 %v60
  %104 = vmatpush.msra.mxu0 %v59
  %105 = vmatpush.msra.mxu0 %v58
  %106 = vmatpush.msra.mxu0 %v57
  %107 = vmatpush.msra.mxu0 %v56
  %108 = vmatpush.msra.mxu0 %v55
  %109 = vmatpush.msra.mxu0 %v54
  %110 = vmatpush.msra.mxu0 %v53
  %111 = vmatpush.msra.mxu0 %v52
  %112 = vmatpush.msra.mxu0 %v51
  %113 = vmatmul.f32.gmra.mxu0 %v74
  %v114 = vpop.f32.mrf.mxu0
  %v115 = vadd.f32 %v95, %v114
  %116 = vdwg.mxu0
  %v117 = vmax.f32 %v115, 0.0
  %v118 = vld [vmem:[%s3] sm:$0xff]
  %v119 = vld [vmem:[%s3 + $0x8] sm:$0xff]
  %v120 = vld [vmem:[%s3 + $0x10] sm:$0xff]
  %v121 = vld [vmem:[%s3 + $0x18] sm:$0xff]
  %v122 = vld [vmem:[%s3 + $0x20] sm:$0xff]
  %v123 = vld [vmem:[%s3 + $0x28] sm:$0xff]
  %v124 = vld [vmem:[%s3 + $0x30] sm:$0xff]
  %v125 = vld [vmem:[%s3 + $0x38] sm:$0xff]
  %v126 = vld [vmem:[%s3 + $0x40] sm:$0xff]
  %v127 = vld [vmem:[%s3 + $0x48] sm:$0xff]
  %v128 = vld [vmem:[%s3 + $0x50] sm:$0xff]
  %v129 = vld [vmem:[%s3 + $0x58] sm:$0xff]
  %v130 = vld [vmem:[%s3 + $0x60] sm:$0xff]
  %v131 = vld [vmem:[%s3 + $0x68] sm:$0xff]
  %v132 = vld [vmem:[%s3 + $0x70] sm:$0xff]
  %v133 = vld [vmem:[%s3 + $0x78] sm:$0xff]
  %v134 = vld [vmem:[%s4] sm:$0x1]
  %v136 = vperm.slane %v134, 0
  %138 = vmatpush.msra.mxu0 %v133
  %139 = vmatpush.msra.mxu0 %v132
  %140 = vmatpush.msra.mxu0 %v131
  %141 = vmatpush.msra.mxu0 %v130
  %142 = vmatpush.msra.mxu0 %v129
  %143 = vmatpush.msra.mxu0 %v128
  %144 = vmatpush.msra.mxu0 %v127
  %145 = vmatpush.msra.mxu0 %v126
  %146 = vmatpush.msra.mxu0 %v125
  %147 = vmatpush.msra.mxu0 %v124
  %148 = vmatpush.msra.mxu0 %v123
  %149 = vmatpush.msra.mxu0 %v122
  %150 = vmatpush.msra.mxu0 %v121
  %151 = vmatpush.msra.mxu0 %v120
  %152 = vmatpush.msra.mxu0 %v119
  %153 = vmatpush.msra.mxu0 %v118
  %154 = vmatmul.f32.gmra.mxu0 %v117
  %v155 = vpop.f32.mrf.mxu0
  %v156 = vadd.f32 %v136, %v155
  %157 = vdwg.mxu0
  %v158 = vmax.f32 %v156, 0.0
  %v159 = vld [vmem:[%s5] sm:$0xff]
  %v160 = vld [vmem:[%s5 + $0x8] sm:$0xff]
  %v161 = vld [vmem:[%s5 + $0x10] sm:$0xff]
  %v162 = vld [vmem:[%s5 + $0x18] sm:$0xff]
  %v163 = vld [vmem:[%s5 + $0x20] sm:$0xff]
  %v164 = vld [vmem:[%s5 + $0x28] sm:$0xff]
  %v165 = vld [vmem:[%s5 + $0x30] sm:$0xff]
  %v166 = vld [vmem:[%s5 + $0x38] sm:$0xff]
  %v167 = vld [vmem:[%s6] sm:$0x1]
  %v169 = vperm.slane %v167, 0
  %vm171 = vcmask 523264
  %v173 = vsel %vm171, %v158, 0
  %175 = vmatpush.msra.mxu0 0.0
  %176 = vmatpush.msra.mxu0 0.0
  %177 = vmatpush.msra.mxu0 0.0
  %178 = vmatpush.msra.mxu0 0.0
  %179 = vmatpush.msra.mxu0 0.0
  %180 = vmatpush.msra.mxu0 0.0
  %181 = vmatpush.msra.mxu0 0.0
  %182 = vmatpush.msra.mxu0 0.0
  %183 = vmatpush.msra.mxu0 %v166
  %184 = vmatpush.msra.mxu0 %v165
  %185 = vmatpush.msra.mxu0 %v164
  %186 = vmatpush.msra.mxu0 %v163
  %187 = vmatpush.msra.mxu0 %v162
  %188 = vmatpush.msra.mxu0 %v161
  %189 = vmatpush.msra.mxu0 %v160
  %190 = vmatpush.msra.mxu0 %v159
  %191 = vmatmul.f32.gmra.mxu0 %v173
  %v192 = vpop.f32.mrf.mxu0
  %v193 = vadd.f32 %v169, %v192
  %194 = vdwg.mxu0
  %v195 = vmax.f32 %v193, 0.0
  %v196 = vld [vmem:[%s7] sm:$0xff]
  %v197 = vld [vmem:[%s7 + $0x8] sm:$0xff]
  %v198 = vld [vmem:[%s7 + $0x10] sm:$0xff]
  %v199 = vld [vmem:[%s7 + $0x18] sm:$0xff]
  %v200 = vld [vmem:[#allocation2] sm:$0x1]
  %v202 = vperm.slane %v200, 0
  %vm204 = vcmask 261120
  %v206 = vsel %vm204, %v195, 0
  %208 = vmatpush.msra.mxu0 0.0
  %209 = vmatpush.msra.mxu0 0.0
  %210 = vmatpush.msra.mxu0 0.0
  %211 = vmatpush.msra.mxu0 0.0
  %212 = vmatpush.msra.mxu0 0.0
  %213 = vmatpush.msra.mxu0 0.0
  %214 = vmatpush.msra.mxu0 0.0
  %215 = vmatpush.msra.mxu0 0.0
  %216 = vmatpush.msra.mxu0 0.0
  %217 = vmatpush.msra.mxu0 0.0
  %218 = vmatpush.msra.mxu0 0.0
  %219 = vmatpush.msra.mxu0 0.0
  %220 = vmatpush.msra.mxu0 %v199
  %221 = vmatpush.msra.mxu0 %v198
  %222 = vmatpush.msra.mxu0 %v197
  %223 = vmatpush.msra.mxu0 %v196
  %224 = vmatmul.f32.gmra.mxu0 %v206
  %v225 = vpop.f32.mrf.mxu0
  %v226 = vadd.f32 %v202, %v225
  %227 = vdwg.mxu0
  %vm228 = vcmask 1024
  %229 = vst.msk [vmem:[%s9] sm:$0x3] %vm228, %v226
  // Predicated region
  $region38: #{simplified_gap_cnn_forward.9} parent=0 // pred_check
    _
  $region39: #{simplified_gap_cnn_forward.9} parent=0 // pred_check_branch
    %231 = sbr.rel (0) target = $region41
  $region40: #{simplified_gap_cnn_forward.9} parent=0 // pred_region
    _
  $region41: #{simplified_gap_cnn_forward.9} parent=0 // pred_fallthru
    _
  // Predicated region
  $region42: #{simplified_gap_cnn_forward.9} parent=0 // pred_check
    _
  $region43: #{simplified_gap_cnn_forward.9} parent=0 // pred_check_branch
    %233 = sbr.rel (0) target = $region45
  $region44: #{simplified_gap_cnn_forward.9} parent=0 // pred_region
    _
  $region45: #{simplified_gap_cnn_forward.9} parent=0 // pred_fallthru
    _

// kernel: simplified_gap_cnn_forward.8
$region0: #{simplified_gap_cnn_forward.8}
  #allocation0 [shape = 'u32[]', space=smem, size = 0x4, offset = 0x4, fixed_abs, tag = 'smem constant byte address 0x4 - core index']
  #allocation1 [shape = 'u32[72,128]{1,0:T(1,128)}', space=vmem, size = 0x9000, scoped, tag = 'internal scratch']
  %s0 = inlined_call_operand.vmem [shape: bf16[2,5,256], index: 0, kind: input, shape index: {}]
  %s1 = inlined_call_operand.vmem [shape: bf16[2,256,256], index: 1, kind: input, shape index: {}]
  %s2 = inlined_call_operand.vmem [shape: f32[1,256], index: 2, kind: input, shape index: {}]
  %s3 = inlined_call_operand.vmem [shape: f32[2,1,256], index: 3, kind: output, shape index: {}]
  %s4 = sld [smem:[#allocation0]]
  $region45: #{simplified_gap_cnn_forward.8} parent=0
    _
  %s6 = ssub.s32 1, %s4
  %s7 = scalar_select 0, %s6, %s4
  loop: start=0, step=1, limit=4
  $region2: #{simplified_gap_cnn_forward.8} parent=0 // loop_pre_header
    _
  $region3: #{simplified_gap_cnn_forward.8} parent=0 // loop_header
    %s9 = sphi 0, %s13
    %p10 = scmp.ge.s32.totalorder %s9, 4
    %s19 = sphi 0, %s21
    %s22 = sphi 0, %s19
    %s23 = sphi 0, %s22
    %s39 = sphi 0, %s23
    %s43 = sphi 0, %s43
    %s45 = sphi 0, %s43
    %s46 = sphi 0, %s45
    %s60 = sphi 0, %s46
    %s64 = sphi 0, %s64
    %s66 = sphi 0, %s64
    %s67 = sphi 0, %s66
    %s81 = sphi 0, %s67
    %s87 = sphi 0, %s89
    %s90 = sphi 0, %s87
    %s91 = sphi 0, %s90
    %s107 = sphi 0, %s91
  $region4: #{simplified_gap_cnn_forward.8} parent=0 // loop_header_branch
    %12 = sbr.rel (%p10) target = $region8
  $region5: #{simplified_gap_cnn_forward.8} parent=0 // loop_body
    %s14 = ssub.s32 %s9, 1
    %s15 = ssub.s32 %s9, 2
    %s16 = sadd.s32 %s9, 1
    %s17 = ssub.s32 %s9, %s16
    %p18 = scmp.eq.s32.totalorder %s17, 0
    %s20 = sadd.s32 %s19, 1
    %s21 = scalar_select %p18, %s19, %s20
    %p24 = pneg %p18
    %p25 = scmp.eq.s32.totalorder %s9, 1
    %p26 = por %p24, %p25
    %p27 = scmp.ne.s32.totalorder %s19, %s22
    %p28 = scmp.eq.s32.totalorder %s9, 0
    %p29 = por %p27, %p28
    %p30 = scmp.ne.s32.totalorder %s19, %s22
    %p31 = scmp.eq.s32.totalorder %s14, 1
    %p32 = por %p30, %p31
    %p33 = scmp.ne.s32.totalorder %s22, %s23
    %p34 = scmp.eq.s32.totalorder %s14, 0
    %p35 = por %p33, %p34
    %p36 = scmp.ne.s32.totalorder %s22, %s23
    %p37 = scmp.eq.s32.totalorder %s15, 1
    %p38 = por %p36, %p37
    %p40 = scmp.ne.s32.totalorder %s23, %s39
    %p41 = scmp.eq.s32.totalorder %s15, 0
    %p42 = por %p40, %p41
    %s44 = sadd.s32 %s43, 1
    %p47 = scmp.eq.s32.totalorder %s9, 1
    %p48 = scmp.ne.s32.totalorder %s43, %s45
    %p49 = scmp.eq.s32.totalorder %s9, 0
    %p50 = por %p48, %p49
    %p51 = scmp.ne.s32.totalorder %s43, %s45
    %p52 = scmp.eq.s32.totalorder %s14, 1
    %p53 = por %p51, %p52
    %p54 = scmp.ne.s32.totalorder %s45, %s46
    %p55 = scmp.eq.s32.totalorder %s14, 0
    %p56 = por %p54, %p55
    %p57 = scmp.ne.s32.totalorder %s45, %s46
    %p58 = scmp.eq.s32.totalorder %s15, 1
    %p59 = por %p57, %p58
    %p61 = scmp.ne.s32.totalorder %s46, %s60
    %p62 = scmp.eq.s32.totalorder %s15, 0
    %p63 = por %p61, %p62
    %s65 = sadd.s32 %s64, 1
    %p68 = scmp.eq.s32.totalorder %s9, 1
    %p69 = scmp.ne.s32.totalorder %s64, %s66
    %p70 = scmp.eq.s32.totalorder %s9, 0
    %p71 = por %p69, %p70
    %p72 = scmp.ne.s32.totalorder %s64, %s66
    %p73 = scmp.eq.s32.totalorder %s14, 1
    %p74 = por %p72, %p73
    %p75 = scmp.ne.s32.totalorder %s66, %s67
    %p76 = scmp.eq.s32.totalorder %s14, 0
    %p77 = por %p75, %p76
    %p78 = scmp.ne.s32.totalorder %s66, %s67
    %p79 = scmp.eq.s32.totalorder %s15, 1
    %p80 = por %p78, %p79
    %p82 = scmp.ne.s32.totalorder %s67, %s81
    %p83 = scmp.eq.s32.totalorder %s15, 0
    %p84 = por %p82, %p83
    %s85 = ssub.s32 %s9, %s16
    %p86 = scmp.eq.s32.totalorder %s85, 0
    %s88 = sadd.s32 %s87, 1
    %s89 = scalar_select %p86, %s87, %s88
    %p92 = pneg %p86
    %p93 = scmp.eq.s32.totalorder %s9, 1
    %p94 = por %p92, %p93
    %p95 = scmp.ne.s32.totalorder %s87, %s90
    %p96 = scmp.eq.s32.totalorder %s9, 0
    %p97 = por %p95, %p96
    %p98 = scmp.ne.s32.totalorder %s87, %s90
    %p99 = scmp.eq.s32.totalorder %s14, 1
    %p100 = por %p98, %p99
    %p101 = scmp.ne.s32.totalorder %s90, %s91
    %p102 = scmp.eq.s32.totalorder %s14, 0
    %p103 = por %p101, %p102
    %p104 = scmp.ne.s32.totalorder %s90, %s91
    %p105 = scmp.eq.s32.totalorder %s15, 1
    %p106 = por %p104, %p105
    %p108 = scmp.ne.s32.totalorder %s91, %s107
    %p109 = scmp.eq.s32.totalorder %s15, 0
    %p110 = por %p108, %p109
    %p111 = scmp.le.s32.totalorder 1, %s9
    %p112 = scmp.lt.s32.totalorder %s9, 3
    %p113 = pnand %p111, %p112
    %p114 = pneg %p113
    // Predicated region
    $region9: #{simplified_gap_cnn_forward.8} parent=5 // pred_check
      _
    $region10: #{simplified_gap_cnn_forward.8} parent=5 // pred_check_branch
      %116 = sbr.rel (%p113) target = $region12
    $region11: #{simplified_gap_cnn_forward.8} parent=5 // pred_region
      %s117 = ssub.s32 %s9, 1
      // Predicated region
      $region13: #{simplified_gap_cnn_forward.8} parent=11 // pred_check
        %p118 = pneg %p56
      $region14: #{simplified_gap_cnn_forward.8} parent=11 // pred_check_branch
        %120 = sbr.rel (%p118) target = $region16
      $region15: #{simplified_gap_cnn_forward.8} parent=11 // pred_region
        _
      $region16: #{simplified_gap_cnn_forward.8} parent=11 // pred_fallthru
        _
      // Predicated region
      $region17: #{simplified_gap_cnn_forward.8} parent=11 // pred_check
        %p121 = pneg %p77
      $region18: #{simplified_gap_cnn_forward.8} parent=11 // pred_check_branch
        %123 = sbr.rel (%p121) target = $region20
      $region19: #{simplified_gap_cnn_forward.8} parent=11 // pred_region
        _
      $region20: #{simplified_gap_cnn_forward.8} parent=11 // pred_fallthru
        _
    $region12: #{simplified_gap_cnn_forward.8} parent=5 // pred_fallthru
      _
    %p124 = scmp.lt.s32.totalorder %s9, 2
    // Predicated region
    $region21: #{simplified_gap_cnn_forward.8} parent=5 // pred_check
      %p125 = pneg %p124
    $region22: #{simplified_gap_cnn_forward.8} parent=5 // pred_check_branch
      %127 = sbr.rel (%p125) target = $region24
    $region23: #{simplified_gap_cnn_forward.8} parent=5 // pred_region
      // Predicated region
      $region25: #{simplified_gap_cnn_forward.8} parent=23 // pred_check
        %p128 = pneg %p29
      $region26: #{simplified_gap_cnn_forward.8} parent=23 // pred_check_branch
        %130 = sbr.rel (%p128) target = $region28
      $region27: #{simplified_gap_cnn_forward.8} parent=23 // pred_region
        %p131 = scmp.lt.s32.totalorder %s9, 1
        %s132 = scalar_select %p131, %s9, 1
        %s133 = smul.addr %s132, 2
        %s134 = smul.addr %s133, 4
        %s135 = scalar_lea.vmem %s0, %s134
      $region28: #{simplified_gap_cnn_forward.8} parent=23 // pred_fallthru
        _
    $region24: #{simplified_gap_cnn_forward.8} parent=5 // pred_fallthru
      _
    %p136 = scmp.le.s32.totalorder 1, %s9
    %p137 = scmp.lt.s32.totalorder %s9, 3
    %p138 = pnand %p136, %p137
    %p139 = pneg %p138
    // Predicated region
    $region29: #{simplified_gap_cnn_forward.8} parent=5 // pred_check
      _
    $region30: #{simplified_gap_cnn_forward.8} parent=5 // pred_check_branch
      %141 = sbr.rel (%p138) target = $region32
    $region31: #{simplified_gap_cnn_forward.8} parent=5 // pred_region
      %s142 = ssub.s32 %s9, 1
      %p143 = scmp.lt.s32.totalorder %s14, 1
      %s144 = scalar_select %p143, %s14, 1
      %s145 = smul.addr %s144, 2
      %s146 = smul.addr %s145, 4
      %s147 = scalar_lea.vmem %s0, %s146
      %p148 = pneg %p35
      %p149 = pneg %p32
      %p150 = pneg %p56
      %p151 = pneg %p53
      %p152 = pneg %p77
      %p153 = pneg %p74
      %p154 = pneg %p103
      %p155 = pneg %p100
      %p156 = scmp.lt.s32.totalorder %s14, 1
      %s157 = scalar_select %p156, %s14, 1
      %s158 = smul.addr %s157, 2
      %s159 = scalar_lea.vmem %s3, %s158
      %p160 = scmp.lt.s32.totalorder %s14, 1
      %s161 = scalar_select %p160, %s14, 1
      %s162 = smul.addr %s161, 2
      %s163 = smul.addr %s162, 4
      %s164 = scalar_lea.vmem %s0, %s163
      %p165 = scmp.lt.s32.totalorder %s14, 1
      %s166 = scalar_select %p165, %s14, 1
      %s167 = smul.addr %s166, 2
      %s168 = scalar_lea.vmem %s3, %s167
      %v169 = vld [vmem:[%s164] sm:$0x33]
      %v170 = vld [vmem:[%s1] sm:$0xff]
      %v171 = vld [vmem:[%s1 + $0x8] sm:$0xff]
      %v172 = vld [vmem:[%s1 + $0x10] sm:$0xff]
      %v173 = vld [vmem:[%s1 + $0x18] sm:$0xff]
      %v174 = vld [vmem:[%s1 + $0x20] sm:$0xff]
      %v175 = vld [vmem:[%s1 + $0x28] sm:$0xff]
      %v176 = vld [vmem:[%s1 + $0x30] sm:$0xff]
      %v177 = vld [vmem:[%s1 + $0x38] sm:$0xff]
      %v178 = vld [vmem:[%s1 + $0x40] sm:$0xff]
      %v179 = vld [vmem:[%s1 + $0x48] sm:$0xff]
      %v180 = vld [vmem:[%s1 + $0x50] sm:$0xff]
      %v181 = vld [vmem:[%s1 + $0x58] sm:$0xff]
      %v182 = vld [vmem:[%s1 + $0x60] sm:$0xff]
      %v183 = vld [vmem:[%s1 + $0x68] sm:$0xff]
      %v184 = vld [vmem:[%s1 + $0x70] sm:$0xff]
      %v185 = vld [vmem:[%s1 + $0x78] sm:$0xff]
      %v186 = vld [vmem:[%s1 + $0x80] sm:$0xff]
      %v187 = vld [vmem:[%s1 + $0x88] sm:$0xff]
      %v188 = vld [vmem:[%s1 + $0x90] sm:$0xff]
      %v189 = vld [vmem:[%s1 + $0x98] sm:$0xff]
      %v190 = vld [vmem:[%s1 + $0xa0] sm:$0xff]
      %v191 = vld [vmem:[%s1 + $0xa8] sm:$0xff]
      %v192 = vld [vmem:[%s1 + $0xb0] sm:$0xff]
      %v193 = vld [vmem:[%s1 + $0xb8] sm:$0xff]
      %v194 = vld [vmem:[%s1 + $0xc0] sm:$0xff]
      %v195 = vld [vmem:[%s1 + $0xc8] sm:$0xff]
      %v196 = vld [vmem:[%s1 + $0xd0] sm:$0xff]
      %v197 = vld [vmem:[%s1 + $0xd8] sm:$0xff]
      %v198 = vld [vmem:[%s1 + $0xe0] sm:$0xff]
      %v199 = vld [vmem:[%s1 + $0xe8] sm:$0xff]
      %v200 = vld [vmem:[%s1 + $0xf0] sm:$0xff]
      %v201 = vld [vmem:[%s1 + $0xf8] sm:$0xff]
      %v202 = vld [vmem:[%s164] sm:$0x77]
      %s203 = scalar_lea.vmem %s1, 256
      %v204 = vld [vmem:[%s203] sm:$0xff]
      %v205 = vld [vmem:[%s203 + $0x8] sm:$0xff]
      %v206 = vld [vmem:[%s203 + $0x10] sm:$0xff]
      %v207 = vld [vmem:[%s203 + $0x18] sm:$0xff]
      %v208 = vld [vmem:[%s203 + $0x20] sm:$0xff]
      %v209 = vld [vmem:[%s203 + $0x28] sm:$0xff]
      %v210 = vld [vmem:[%s203 + $0x30] sm:$0xff]
      %v211 = vld [vmem:[%s203 + $0x38] sm:$0xff]
      %v212 = vld [vmem:[%s203 + $0x40] sm:$0xff]
      %v213 = vld [vmem:[%s203 + $0x48] sm:$0xff]
      %v214 = vld [vmem:[%s203 + $0x50] sm:$0xff]
      %v215 = vld [vmem:[%s203 + $0x58] sm:$0xff]
      %v216 = vld [vmem:[%s203 + $0x60] sm:$0xff]
      %v217 = vld [vmem:[%s203 + $0x68] sm:$0xff]
      %v218 = vld [vmem:[%s203 + $0x70] sm:$0xff]
      %v219 = vld [vmem:[%s203 + $0x78] sm:$0xff]
      %v220 = vld [vmem:[%s203 + $0x80] sm:$0xff]
      %v221 = vld [vmem:[%s203 + $0x88] sm:$0xff]
      %v222 = vld [vmem:[%s203 + $0x90] sm:$0xff]
      %v223 = vld [vmem:[%s203 + $0x98] sm:$0xff]
      %v224 = vld [vmem:[%s203 + $0xa0] sm:$0xff]
      %v225 = vld [vmem:[%s203 + $0xa8] sm:$0xff]
      %v226 = vld [vmem:[%s203 + $0xb0] sm:$0xff]
      %v227 = vld [vmem:[%s203 + $0xb8] sm:$0xff]
      %v228 = vld [vmem:[%s203 + $0xc0] sm:$0xff]
      %v229 = vld [vmem:[%s203 + $0xc8] sm:$0xff]
      %v230 = vld [vmem:[%s203 + $0xd0] sm:$0xff]
      %v231 = vld [vmem:[%s203 + $0xd8] sm:$0xff]
      %v232 = vld [vmem:[%s203 + $0xe0] sm:$0xff]
      %v233 = vld [vmem:[%s203 + $0xe8] sm:$0xff]
      %v234 = vld [vmem:[%s203 + $0xf0] sm:$0xff]
      %v235 = vld [vmem:[%s203 + $0xf8] sm:$0xff]
      %v237 = vunpack.c.l.b16 %v202
      %v238 = vunpack.c.h.b16 %v202
      %v239 = vpack.c.b16 %v237, %v237
      %v240 = vpack.c.b16 %v238, %v238
      %v242 = vshrl.u32 %v239, 16
      %v244 = vshll.u32 %v239, 16
      %v246 = vrot.slane %v244, 1
      %v247 = vor.u32 %v242, %v246
      %v249 = vshrl.u32 %v240, 16
      %v251 = vshll.u32 %v240, 16
      %v253 = vrot.slane %v251, 1
      %v254 = vor.u32 %v249, %v253
      %v289 = vunpack.c.l.b16 %v204
      %v290 = vunpack.c.h.b16 %v204
      %v291 = vunpack.c.l.b16 %v205
      %v292 = vunpack.c.h.b16 %v205
      %v293 = vunpack.c.l.b16 %v206
      %v294 = vunpack.c.h.b16 %v206
      %v295 = vunpack.c.l.b16 %v207
      %v296 = vunpack.c.h.b16 %v207
      %v297 = vunpack.c.l.b16 %v208
      %v298 = vunpack.c.h.b16 %v208
      %v299 = vunpack.c.l.b16 %v209
      %v300 = vunpack.c.h.b16 %v209
      %v301 = vunpack.c.l.b16 %v210
      %v302 = vunpack.c.h.b16 %v210
      %v303 = vunpack.c.l.b16 %v211
      %v304 = vunpack.c.h.b16 %v211
      %v305 = vunpack.c.l.b16 %v212
      %v306 = vunpack.c.h.b16 %v212
      %v307 = vunpack.c.l.b16 %v213
      %v308 = vunpack.c.h.b16 %v213
      %v309 = vunpack.c.l.b16 %v214
      %v310 = vunpack.c.h.b16 %v214
      %v311 = vunpack.c.l.b16 %v215
      %v312 = vunpack.c.h.b16 %v215
      %v313 = vunpack.c.l.b16 %v216
      %v314 = vunpack.c.h.b16 %v216
      %v315 = vunpack.c.l.b16 %v217
      %v316 = vunpack.c.h.b16 %v217
      %v317 = vunpack.c.l.b16 %v218
      %v318 = vunpack.c.h.b16 %v218
      %v319 = vunpack.c.l.b16 %v219
      %v320 = vunpack.c.h.b16 %v219
      %v321 = vunpack.c.l.b16 %v220
      %v322 = vunpack.c.h.b16 %v220
      %v323 = vunpack.c.l.b16 %v221
      %v324 = vunpack.c.h.b16 %v221
      %v325 = vunpack.c.l.b16 %v222
      %v326 = vunpack.c.h.b16 %v222
      %v327 = vunpack.c.l.b16 %v223
      %v328 = vunpack.c.h.b16 %v223
      %v329 = vunpack.c.l.b16 %v224
      %v330 = vunpack.c.h.b16 %v224
      %v331 = vunpack.c.l.b16 %v225
      %v332 = vunpack.c.h.b16 %v225
      %v333 = vunpack.c.l.b16 %v226
      %v334 = vunpack.c.h.b16 %v226
      %v335 = vunpack.c.l.b16 %v227
      %v336 = vunpack.c.h.b16 %v227
      %v337 = vunpack.c.l.b16 %v228
      %v338 = vunpack.c.h.b16 %v228
      %v339 = vunpack.c.l.b16 %v229
      %v340 = vunpack.c.h.b16 %v229
      %v341 = vunpack.c.l.b16 %v230
      %v342 = vunpack.c.h.b16 %v230
      %v343 = vunpack.c.l.b16 %v231
      %v344 = vunpack.c.h.b16 %v231
      %v345 = vunpack.c.l.b16 %v232
      %v346 = vunpack.c.h.b16 %v232
      %v347 = vunpack.c.l.b16 %v233
      %v348 = vunpack.c.h.b16 %v233
      %v349 = vunpack.c.l.b16 %v234
      %v350 = vunpack.c.h.b16 %v234
      %v351 = vunpack.c.l.b16 %v235
      %v352 = vunpack.c.h.b16 %v235
      %v353 = vpack.c.b16 %v291, %v289
      %v354 = vpack.c.b16 %v292, %v290
      %v355 = vpack.c.b16 %v295, %v293
      %v356 = vpack.c.b16 %v296, %v294
      %v357 = vpack.c.b16 %v299, %v297
      %v358 = vpack.c.b16 %v300, %v298
      %v359 = vpack.c.b16 %v303, %v301
      %v360 = vpack.c.b16 %v304, %v302
      %v361 = vpack.c.b16 %v307, %v305
      %v362 = vpack.c.b16 %v308, %v306
      %v363 = vpack.c.b16 %v311, %v309
      %v364 = vpack.c.b16 %v312, %v310
      %v365 = vpack.c.b16 %v315, %v313
      %v366 = vpack.c.b16 %v316, %v314
      %v367 = vpack.c.b16 %v319, %v317
      %v368 = vpack.c.b16 %v320, %v318
      %v369 = vpack.c.b16 %v323, %v321
      %v370 = vpack.c.b16 %v324, %v322
      %v371 = vpack.c.b16 %v327, %v325
      %v372 = vpack.c.b16 %v328, %v326
      %v373 = vpack.c.b16 %v331, %v329
      %v374 = vpack.c.b16 %v332, %v330
      %v375 = vpack.c.b16 %v335, %v333
      %v376 = vpack.c.b16 %v336, %v334
      %v377 = vpack.c.b16 %v339, %v337
      %v378 = vpack.c.b16 %v340, %v338
      %v379 = vpack.c.b16 %v343, %v341
      %v380 = vpack.c.b16 %v344, %v342
      %v381 = vpack.c.b16 %v347, %v345
      %v382 = vpack.c.b16 %v348, %v346
      %v383 = vpack.c.b16 %v351, %v349
      %v384 = vpack.c.b16 %v352, %v350
      %417 = vmatpush.bf16.msra.mxu0 %v367
      %418 = vmatpush.bf16.msra.mxu0 %v365
      %419 = vmatpush.bf16.msra.mxu0 %v363
      %420 = vmatpush.bf16.msra.mxu0 %v361
      %421 = vmatpush.bf16.msra.mxu0 %v359
      %422 = vmatpush.bf16.msra.mxu0 %v357
      %423 = vmatpush.bf16.msra.mxu0 %v355
      %424 = vmatpush.bf16.msra.mxu0 %v353
      %425 = vmatmul.bf16.gmra.mxu0 %v247
      %v426 = vpop.f32.mrf.mxu0
      %v427 = vadd.f32 0.0, %v426
      %v428 = vpop.f32.mrf.mxu0
      %429 = vdwg.mxu0
      %430 = vmatpush.bf16.msra.mxu0 %v383
      %431 = vmatpush.bf16.msra.mxu0 %v381
      %432 = vmatpush.bf16.msra.mxu0 %v379
      %433 = vmatpush.bf16.msra.mxu0 %v377
      %434 = vmatpush.bf16.msra.mxu0 %v375
      %435 = vmatpush.bf16.msra.mxu0 %v373
      %436 = vmatpush.bf16.msra.mxu0 %v371
      %437 = vmatpush.bf16.msra.mxu0 %v369
      %438 = vmatmul.bf16.gmra.mxu0 %v254
      %v439 = vpop.f32.mrf.mxu0
      %v440 = vadd.f32 %v427, %v439
      %v441 = vpop.f32.mrf.mxu0
      %442 = vdwg.mxu0
      %443 = vmatpush.bf16.msra.mxu0 %v368
      %444 = vmatpush.bf16.msra.mxu0 %v366
      %445 = vmatpush.bf16.msra.mxu0 %v364
      %446 = vmatpush.bf16.msra.mxu0 %v362
      %447 = vmatpush.bf16.msra.mxu0 %v360
      %448 = vmatpush.bf16.msra.mxu0 %v358
      %449 = vmatpush.bf16.msra.mxu0 %v356
      %450 = vmatpush.bf16.msra.mxu0 %v354
      %451 = vmatmul.bf16.gmra.mxu0 %v247
      %v452 = vpop.f32.mrf.mxu0
      %v453 = vadd.f32 0.0, %v452
      %v454 = vpop.f32.mrf.mxu0
      %455 = vdwg.mxu0
      %456 = vmatpush.bf16.msra.mxu0 %v384
      %457 = vmatpush.bf16.msra.mxu0 %v382
      %458 = vmatpush.bf16.msra.mxu0 %v380
      %459 = vmatpush.bf16.msra.mxu0 %v378
      %460 = vmatpush.bf16.msra.mxu0 %v376
      %461 = vmatpush.bf16.msra.mxu0 %v374
      %462 = vmatpush.bf16.msra.mxu0 %v372
      %463 = vmatpush.bf16.msra.mxu0 %v370
      %464 = vmatmul.bf16.gmra.mxu0 %v254
      %v465 = vpop.f32.mrf.mxu0
      %v466 = vadd.f32 %v453, %v465
      %v467 = vpop.f32.mrf.mxu0
      %468 = vdwg.mxu0
      %v470 = vunpack.c.l.b16 %v169
      %v471 = vunpack.c.h.b16 %v169
      %v472 = vpack.c.b16 %v470, %v470
      %v473 = vpack.c.b16 %v471, %v471
      %v508 = vunpack.c.l.b16 %v170
      %v509 = vunpack.c.h.b16 %v170
      %v510 = vunpack.c.l.b16 %v171
      %v511 = vunpack.c.h.b16 %v171
      %v512 = vunpack.c.l.b16 %v172
      %v513 = vunpack.c.h.b16 %v172
      %v514 = vunpack.c.l.b16 %v173
      %v515 = vunpack.c.h.b16 %v173
      %v516 = vunpack.c.l.b16 %v174
      %v517 = vunpack.c.h.b16 %v174
      %v518 = vunpack.c.l.b16 %v175
      %v519 = vunpack.c.h.b16 %v175
      %v520 = vunpack.c.l.b16 %v176
      %v521 = vunpack.c.h.b16 %v176
      %v522 = vunpack.c.l.b16 %v177
      %v523 = vunpack.c.h.b16 %v177
      %v524 = vunpack.c.l.b16 %v178
      %v525 = vunpack.c.h.b16 %v178
      %v526 = vunpack.c.l.b16 %v179
      %v527 = vunpack.c.h.b16 %v179
      %v528 = vunpack.c.l.b16 %v180
      %v529 = vunpack.c.h.b16 %v180
      %v530 = vunpack.c.l.b16 %v181
      %v531 = vunpack.c.h.b16 %v181
      %v532 = vunpack.c.l.b16 %v182
      %v533 = vunpack.c.h.b16 %v182
      %v534 = vunpack.c.l.b16 %v183
      %v535 = vunpack.c.h.b16 %v183
      %v536 = vunpack.c.l.b16 %v184
      %v537 = vunpack.c.h.b16 %v184
      %v538 = vunpack.c.l.b16 %v185
      %v539 = vunpack.c.h.b16 %v185
      %v540 = vunpack.c.l.b16 %v186
      %v541 = vunpack.c.h.b16 %v186
      %v542 = vunpack.c.l.b16 %v187
      %v543 = vunpack.c.h.b16 %v187
      %v544 = vunpack.c.l.b16 %v188
      %v545 = vunpack.c.h.b16 %v188
      %v546 = vunpack.c.l.b16 %v189
      %v547 = vunpack.c.h.b16 %v189
      %v548 = vunpack.c.l.b16 %v190
      %v549 = vunpack.c.h.b16 %v190
      %v550 = vunpack.c.l.b16 %v191
      %v551 = vunpack.c.h.b16 %v191
      %v552 = vunpack.c.l.b16 %v192
      %v553 = vunpack.c.h.b16 %v192
      %v554 = vunpack.c.l.b16 %v193
      %v555 = vunpack.c.h.b16 %v193
      %v556 = vunpack.c.l.b16 %v194
      %v557 = vunpack.c.h.b16 %v194
      %v558 = vunpack.c.l.b16 %v195
      %v559 = vunpack.c.h.b16 %v195
      %v560 = vunpack.c.l.b16 %v196
      %v561 = vunpack.c.h.b16 %v196
      %v562 = vunpack.c.l.b16 %v197
      %v563 = vunpack.c.h.b16 %v197
      %v564 = vunpack.c.l.b16 %v198
      %v565 = vunpack.c.h.b16 %v198
      %v566 = vunpack.c.l.b16 %v199
      %v567 = vunpack.c.h.b16 %v199
      %v568 = vunpack.c.l.b16 %v200
      %v569 = vunpack.c.h.b16 %v200
      %v570 = vunpack.c.l.b16 %v201
      %v571 = vunpack.c.h.b16 %v201
      %v572 = vpack.c.b16 %v510, %v508
      %v573 = vpack.c.b16 %v511, %v509
      %v574 = vpack.c.b16 %v514, %v512
      %v575 = vpack.c.b16 %v515, %v513
      %v576 = vpack.c.b16 %v518, %v516
      %v577 = vpack.c.b16 %v519, %v517
      %v578 = vpack.c.b16 %v522, %v520
      %v579 = vpack.c.b16 %v523, %v521
      %v580 = vpack.c.b16 %v526, %v524
      %v581 = vpack.c.b16 %v527, %v525
      %v582 = vpack.c.b16 %v530, %v528
      %v583 = vpack.c.b16 %v531, %v529
      %v584 = vpack.c.b16 %v534, %v532
      %v585 = vpack.c.b16 %v535, %v533
      %v586 = vpack.c.b16 %v538, %v536
      %v587 = vpack.c.b16 %v539, %v537
      %v588 = vpack.c.b16 %v542, %v540
      %v589 = vpack.c.b16 %v543, %v541
      %v590 = vpack.c.b16 %v546, %v544
      %v591 = vpack.c.b16 %v547, %v545
      %v592 = vpack.c.b16 %v550, %v548
      %v593 = vpack.c.b16 %v551, %v549
      %v594 = vpack.c.b16 %v554, %v552
      %v595 = vpack.c.b16 %v555, %v553
      %v596 = vpack.c.b16 %v558, %v556
      %v597 = vpack.c.b16 %v559, %v557
      %v598 = vpack.c.b16 %v562, %v560
      %v599 = vpack.c.b16 %v563, %v561
      %v600 = vpack.c.b16 %v566, %v564
      %v601 = vpack.c.b16 %v567, %v565
      %v602 = vpack.c.b16 %v570, %v568
      %v603 = vpack.c.b16 %v571, %v569
      %636 = vmatpush.bf16.msra.mxu0 %v586
      %637 = vmatpush.bf16.msra.mxu0 %v584
      %638 = vmatpush.bf16.msra.mxu0 %v582
      %639 = vmatpush.bf16.msra.mxu0 %v580
      %640 = vmatpush.bf16.msra.mxu0 %v578
      %641 = vmatpush.bf16.msra.mxu0 %v576
      %642 = vmatpush.bf16.msra.mxu0 %v574
      %643 = vmatpush.bf16.msra.mxu0 %v572
      %644 = vmatmul.bf16.gmra.mxu0 %v472
      %v645 = vpop.f32.mrf.mxu0
      %v646 = vadd.f32 %v440, %v645
      %v647 = vpop.f32.mrf.mxu0
      %648 = vdwg.mxu0
      %649 = vmatpush.bf16.msra.mxu0 %v602
      %650 = vmatpush.bf16.msra.mxu0 %v600
      %651 = vmatpush.bf16.msra.mxu0 %v598
      %652 = vmatpush.bf16.msra.mxu0 %v596
      %653 = vmatpush.bf16.msra.mxu0 %v594
      %654 = vmatpush.bf16.msra.mxu0 %v592
      %655 = vmatpush.bf16.msra.mxu0 %v590
      %656 = vmatpush.bf16.msra.mxu0 %v588
      %657 = vmatmul.bf16.gmra.mxu0 %v473
      %v658 = vpop.f32.mrf.mxu0
      %v659 = vadd.f32 %v646, %v658
      %v660 = vpop.f32.mrf.mxu0
      %661 = vdwg.mxu0
      %662 = vmatpush.bf16.msra.mxu0 %v587
      %663 = vmatpush.bf16.msra.mxu0 %v585
      %664 = vmatpush.bf16.msra.mxu0 %v583
      %665 = vmatpush.bf16.msra.mxu0 %v581
      %666 = vmatpush.bf16.msra.mxu0 %v579
      %667 = vmatpush.bf16.msra.mxu0 %v577
      %668 = vmatpush.bf16.msra.mxu0 %v575
      %669 = vmatpush.bf16.msra.mxu0 %v573
      %670 = vmatmul.bf16.gmra.mxu0 %v472
      %v671 = vpop.f32.mrf.mxu0
      %v672 = vadd.f32 %v466, %v671
      %v673 = vpop.f32.mrf.mxu0
      %674 = vdwg.mxu0
      %675 = vmatpush.bf16.msra.mxu0 %v603
      %676 = vmatpush.bf16.msra.mxu0 %v601
      %677 = vmatpush.bf16.msra.mxu0 %v599
      %678 = vmatpush.bf16.msra.mxu0 %v597
      %679 = vmatpush.bf16.msra.mxu0 %v595
      %680 = vmatpush.bf16.msra.mxu0 %v593
      %681 = vmatpush.bf16.msra.mxu0 %v591
      %682 = vmatpush.bf16.msra.mxu0 %v589
      %683 = vmatmul.bf16.gmra.mxu0 %v473
      %v684 = vpop.f32.mrf.mxu0
      %v685 = vadd.f32 %v672, %v684
      %v686 = vpop.f32.mrf.mxu0
      %687 = vdwg.mxu0
      %v688 = vld [vmem:[%s2] sm:$0x3]
      %v690 = vperm.slane %v688, 0
      %v691 = vperm.slane %v688, 1
      %v694 = vadd.f32 %v659, %v690
      %v695 = vadd.f32 %v685, %v691
      %v696 = vmax.f32 %v694, 0.0
      %v697 = vmax.f32 %v695, 0.0
      %vm698 = vcmask 1043456
      %v699 = vsel %vm698, %v696, 0.0
      %v700 = vrot.slane %v699, 4
      %v701 = vadd.f32 %v699, %v700
      %v702 = vrot.slane %v701, 2
      %v703 = vadd.f32 %v701, %v702
      %v704 = vrot.slane %v703, 1
      %v705 = vadd.f32 %v703, %v704
      %v706 = vsel %vm698, %v697, 0.0
      %v707 = vrot.slane %v706, 4
      %v708 = vadd.f32 %v706, %v707
      %v709 = vrot.slane %v708, 2
      %v710 = vadd.f32 %v708, %v709
      %v711 = vrot.slane %v710, 1
      %v712 = vadd.f32 %v710, %v711
      %v713 = vrcp.pop 4.0
      %v714 = vmul.f32 4.0, %v713
      %v715 = vsub.f32 1.0, %v714
      %v716 = vmul.f32 %v713, %v715
      %v717 = vadd.f32 %v713, %v716
      %vm718 = vweird.f32 %v713
      %v719 = vsel %vm718, %v713, %v717
      %v720 = vmul.f32 %v705, %v719
      %v721 = vmul.f32 %v712, %v719
      %v724 = vrot.slane %v721, 7
      %vm725 = vcmask 1040384
      %v726 = vsel %vm725, %v720, %v724
      %v728 = vlaneseq
      %vm729 = vcmp.ge.s32.totalorder %v728, 0
      %vm730 = vcmp.lt.s32.totalorder %v728, 256
      %vm731 = vmand %vm729, %vm730
      %732 = vst.msk [vmem:[%s168] sm:$0x3] %vm731, %v726
      %p733 = scmp.lt.s32.totalorder %s14, 1
      %s734 = scalar_select %p733, %s14, 1
      %s735 = smul.addr %s734, 2
      %s736 = scalar_lea.vmem %s3, %s735
      // Predicated region
      $region33: #{simplified_gap_cnn_forward.8} parent=31 // pred_check
        %p737 = pneg %p100
      $region34: #{simplified_gap_cnn_forward.8} parent=31 // pred_check_branch
        %739 = sbr.rel (%p737) target = $region36
      $region35: #{simplified_gap_cnn_forward.8} parent=31 // pred_region
        _
      $region36: #{simplified_gap_cnn_forward.8} parent=31 // pred_fallthru
        _
    $region32: #{simplified_gap_cnn_forward.8} parent=5 // pred_fallthru
      _
    %p740 = scmp.le.s32.totalorder 2, %s9
    // Predicated region
    $region37: #{simplified_gap_cnn_forward.8} parent=5 // pred_check
      %p741 = pneg %p740
    $region38: #{simplified_gap_cnn_forward.8} parent=5 // pred_check_branch
      %743 = sbr.rel (%p741) target = $region40
    $region39: #{simplified_gap_cnn_forward.8} parent=5 // pred_region
      %s744 = ssub.s32 %s9, 2
      // Predicated region
      $region41: #{simplified_gap_cnn_forward.8} parent=39 // pred_check
        %p745 = pneg %p106
      $region42: #{simplified_gap_cnn_forward.8} parent=39 // pred_check_branch
        %747 = sbr.rel (%p745) target = $region44
      $region43: #{simplified_gap_cnn_forward.8} parent=39 // pred_region
        %p748 = scmp.lt.s32.totalorder %s15, 1
        %s749 = scalar_select %p748, %s15, 1
        %s750 = smul.addr %s749, 2
        %s751 = scalar_lea.vmem %s3, %s750
      $region44: #{simplified_gap_cnn_forward.8} parent=39 // pred_fallthru
        _
    $region40: #{simplified_gap_cnn_forward.8} parent=5 // pred_fallthru
      _
  $region6: #{simplified_gap_cnn_forward.8} parent=0 // loop_footer
    %s13 = sadd.s32 1, %s9
  $region7: #{simplified_gap_cnn_forward.8} parent=0 // loop_footer_branch
    %8 = sbr.rel target = $region3
  $region8: #{simplified_gap_cnn_forward.8} parent=0 // loop_exit
    _

</llo_original>
